<compile_context>
chip_gen: v6e
topology: v6e:2x2x1
jax: 0.10.0
libtpu: 0.0.40
codegen_flags: <defaults>
</compile_context>

<pallas_src>
import functools

import jax
import jax.numpy as jnp
import numpy as np
from jax import lax
from jax.experimental import pallas as pl
from jax.experimental.pallas import tpu as pltpu

# ---- model geometry ---------------------------------------------------------
H_IN = 60                      # EEG electrodes
H_PAD = 64                     # electrodes padded for lane alignment
W_IN = 160                     # time samples
K1 = 64                        # layer1 conv kernel width
C1 = 8                         # layer1 output channels
C2 = 16                        # layer2/layer3 channels
POOL1 = 4                      # layer2 AvgPool stride (kernel 1)
W_POOL1 = 40                   # width after pool1
K3 = 16                        # layer3 depthwise kernel width
POOL2 = 8                      # layer3 AvgPool stride (kernel 1)
W_POOL2 = 5                    # width after pool2
N_CLASSES = 4

# ---- kernel lane packing / scratch geometry ---------------------------------
B_LANES = 8                    # samples packed along lanes
LANE_IN = B_LANES * H_PAD      # 512 input lanes  (batch x electrode)
LANE_C = B_LANES * C2          # 128 feature lanes (batch x channel) = 1 vreg
PAD_L = 32                     # p_ref row of raw time 0 (31 left-pad cols + 1)
P_ROWS = 224                   # padded stage-1/2 time buffer (mult of 8, >=221)
ZP_ROWS = 56                   # padded stage-3 time buffer  (mult of 8, >=49)


def _elu(x):
    return jnp.where(x > 0, x, jnp.exp(jnp.minimum(x, 0.0)) - 1.0)


def eegnet_kernel(x_ref,        # (G, 160, 512) VMEM bf16: natural-time, lane-packed input
                  w2blk_ref,    # (512, 128) f32  block-diag electrode-contraction weight
                  w1eff_ref,    # (64, 128)  f32  conv1 taps, BN1/BN2 scales folded, lane-tiled
                  shift2_ref,   # (1, 128)   f32  folded conv1/conv2 bias + BN1/BN2 shift
                  w3t_ref,      # (16, 128)  f32  depthwise conv3 taps, lane-tiled
                  b3_ref,       # (1, 128)   f32  conv3 bias, lane-tiled
                  w4blk_ref,    # (128, 128) f32  block-diag 1x1 conv weight, BN3 scale folded
                  shift3_ref,   # (1, 128)   f32  folded conv4 bias + BN3 shift
                  wlblk_ref,    # (5, 128, 128)   block-diag linear weight per pooled position
                  bl_ref,       # (1, 128)   f32  linear bias (classes zero-padded to 16)
                  out_ref,      # (G, 128)   f32  lane-dense packed logits
                  p_ref,        # (224, 128) scratch: time-padded electrode-contracted input
                  zp_ref,       # (56, 128)  scratch: time-padded layer3 input
                  s3_ref,       # (G*8, 128) scratch: pruned depthwise-conv rows, all groups
                  e4_ref,       # (G*8+8, 128) scratch: stage-4 output (+ slack rows)
                  *, g_groups):
    f32 = jnp.float32

    # -- per-step init: zero only the pad rows (the data rows are fully rewritten
    #    every group).  Must run every step, NOT behind pl.when(program_id==0):
    #    with dimension_semantics=("parallel",) a second TensorCore never sees
    #    step 0 and would read stale scratch.
    p_ref[pl.ds(0, PAD_L), :] = jnp.zeros((PAD_L, LANE_C), f32)
    p_ref[pl.ds(PAD_L + W_IN, P_ROWS - PAD_L - W_IN), :] = (
        jnp.zeros((P_ROWS - PAD_L - W_IN, LANE_C), f32))
    zp_ref[pl.ds(0, 8), :] = jnp.zeros((8, LANE_C), f32)
    zp_ref[pl.ds(8 + W_POOL1, ZP_ROWS - 8 - W_POOL1), :] = (
        jnp.zeros((ZP_ROWS - 8 - W_POOL1, LANE_C), f32))
    s3_ref[...] = jnp.zeros((g_groups * 8, LANE_C), f32)

    @pl.loop(0, g_groups)
    def _per_group(gi):
        # ---- Stage 1: electrode contraction (60 -> 16 ch) on the MXU,
        #      block-diagonal over the 8 lane-packed samples.  Result stored at
        #      the 8-aligned offset PAD_L so p_ref row r == padded time (r-1).
        xg = x_ref[gi].astype(f32)                               # (160, 512)
        p_ref[pl.ds(PAD_L, W_IN), :] = jnp.dot(
            xg, w2blk_ref[...], preferred_element_type=f32)

        # ---- Stage 2: 64-tap temporal conv (conv1) fused with BN1/BN2 and the
        #      stride-4 kernel-1 AvgPool: only the 40 pooled positions are
        #      computed; tap k reads the stride-4 sublane slice starting at k+1.
        acc = jnp.zeros((W_POOL1, LANE_C), f32)
        for k in range(K1):                                      # static unroll
            acc = acc + (p_ref[pl.ds(k + 1, W_POOL1, stride=POOL1), :] *
                         w1eff_ref[pl.ds(k, 1), :])
        z = _elu(acc + shift2_ref[...])                          # (40, 128)
        # dropout(0.5): identity (see TODO at top)

        # ---- Stage 3: F.pad(.,(7,8)) via the zeroed scratch, 16-tap depthwise
        #      conv pruned to the 5 rows the stride-8 pool keeps (rows 8p).
        zp_ref[pl.ds(8, W_POOL1), :] = z
        acc3 = jnp.zeros((W_POOL2, LANE_C), f32)
        for k in range(K3):                                      # static unroll
            acc3 = acc3 + (zp_ref[pl.ds(k + 1, W_POOL2, stride=POOL2), :] *
                           w3t_ref[pl.ds(k, 1), :])
        acc3 = acc3 + b3_ref[...]
        row0 = pl.multiple_of(gi * 8, 8)
        s3_ref[pl.ds(row0, W_POOL2), :] = acc3                   # rows 5..7 stay 0

    # ---- Stage 4 (all groups at once): 1x1 channel-mixing conv on the MXU with
    #      the BN3 scale folded in, shift, ELU.
    e4 = _elu(jnp.dot(s3_ref[...], w4blk_ref[...],
                      preferred_element_type=f32) + shift3_ref[...])
    e4_ref[pl.ds(0, g_groups * 8), :] = e4
    # dropout(0.5): identity

    # ---- Stage 5: stride-8 pool + flatten + Linear(80 -> 4), as 5 accumulating
    #      (G,128)@(128,128) matmuls over the pooled positions (class axis
    #      zero-padded to 16 -> lane-dense output store).
    logits = jnp.zeros((g_groups, LANE_C), f32)
    for p in range(W_POOL2):                                     # static unroll
        logits = logits + jnp.dot(e4_ref[pl.ds(p, g_groups, stride=POOL2), :],
                                  wlblk_ref[p], preferred_element_type=f32)
    out_ref[...] = logits + bl_ref[...]


def eegnet_forward(x, params, *, group_block=16):
    """x: (N, 1, 60, 160) float32 in NCHW (as in PyTorch). Returns (N, 4) logits."""
    (w1, b1, g1, be1, m1, v1,
     w2, b2, g2, be2, m2, v2,
     w3, b3, w4, b4, g3, be3, m3, v3,
     wl, bl) = params
    n = x.shape[0]
    assert x.shape[1:] == (1, H_IN, W_IN)
    eps = 0.0  # nn.BatchNorm2d(ch, False): `False` lands on the eps argument
    f32 = lambda a: a.astype(jnp.float32)

    # ---- batch / group geometry
    g = int(max(1, min(int(group_block), (n + B_LANES - 1) // B_LANES)))
    ng = (n + B_LANES * g - 1) // (B_LANES * g)
    n_pad = ng * g * B_LANES

    # ---- input relayout (single fused XLA copy): natural time order, electrodes
    #      zero-padded 60->64, 8 samples packed along lanes, shipped as bf16.
    xt = jnp.transpose(f32(x[:, 0]), (0, 2, 1))                       # (n, 160, 60)
    xt = jnp.pad(xt, ((0, n_pad - n), (0, 0), (0, H_PAD - H_IN)))     # (n_pad, 160, 64)
    xg = xt.reshape(ng, g, B_LANES, W_IN, H_PAD)
    xg = xg.transpose(0, 1, 3, 2, 4).reshape(ng, g, W_IN, LANE_IN)    # lane = b*64 + h
    xg = xg.astype(jnp.bfloat16)

    # ---- BN folding + block-diagonal / lane-tiled weights (glue, tiny).
    s1 = f32(g1) / jnp.sqrt(f32(v1) + eps)
    u1 = f32(b1) * s1 + (f32(be1) - f32(m1) * s1)
    s2 = f32(g2) / jnp.sqrt(f32(v2) + eps)
    s3 = f32(g3) / jnp.sqrt(f32(v3) + eps)
    grp = np.arange(C2) // 2                      # layer2 group of each output channel

    eyeb = jnp.eye(B_LANES, dtype=jnp.float32)
    w2m = f32(w2).reshape(C2, H_IN)                                   # (16, 60)
    w2mp = jnp.pad(w2m, ((0, 0), (0, H_PAD - H_IN)))                  # (16, 64)
    w2blk = jnp.einsum('ab,hc->ahbc', eyeb, w2mp.T).reshape(LANE_IN, LANE_C)

    w1k = f32(w1).reshape(C1, K1)
    w1eff = (w1k[grp] * (s1[grp] * s2)[:, None]).T                    # (64, 16)
    w1eff_t = jnp.tile(w1eff, (1, B_LANES))                           # (64, 128)
    shift2 = s2 * (f32(b2) + u1[grp] * w2m.sum(1) - f32(m2)) + f32(be2)
    shift2_t = jnp.tile(shift2, B_LANES).reshape(1, LANE_C)

    w3m = f32(w3).reshape(C2, K3)                                     # (c, k)
    w3t_t = jnp.tile(w3m.T, (1, B_LANES))                             # (16, 128)
    b3_t = jnp.tile(f32(b3), B_LANES).reshape(1, LANE_C)

    w4eff = (f32(w4).reshape(C2, C2) * s3[:, None]).T                 # (in, out), BN3 folded
    w4blk = jnp.einsum('ab,io->aibo', eyeb, w4eff).reshape(LANE_C, LANE_C)
    shift3 = s3 * (f32(b4) - f32(m3)) + f32(be3)
    shift3_t = jnp.tile(shift3, B_LANES).reshape(1, LANE_C)

    wlp = f32(wl).reshape(N_CLASSES, C2, W_POOL2)                     # (o, c, p)
    wlm = jnp.zeros((W_POOL2, C2, C2), jnp.float32).at[:, :, :N_CLASSES].set(
        wlp.transpose(2, 1, 0))                                       # (p, c, o16)
    wlblk = jnp.einsum('ab,pco->pacbo', eyeb, wlm).reshape(W_POOL2, LANE_C, LANE_C)
    bl_t = jnp.tile(jnp.zeros((C2,), jnp.float32).at[:N_CLASSES].set(f32(bl)),
                    B_LANES).reshape(1, LANE_C)

    vmem = lambda: pl.BlockSpec(memory_space=pltpu.MemorySpace.VMEM)
    kernel = functools.partial(eegnet_kernel, g_groups=g)

    out = pl.pallas_call(
        kernel,
        out_shape=jax.ShapeDtypeStruct((ng, g, LANE_C), jnp.float32),
        grid=(ng,),
        in_specs=[pl.BlockSpec((None, g, W_IN, LANE_IN), lambda i: (i, 0, 0, 0))]
                 + [vmem() for _ in range(9)],
        out_specs=pl.BlockSpec((None, g, LANE_C), lambda i: (i, 0, 0)),
        scratch_shapes=[
            pltpu.VMEM((P_ROWS, LANE_C), jnp.float32),          # padded stage-1 output
            pltpu.VMEM((ZP_ROWS, LANE_C), jnp.float32),         # padded stage-3 input
            pltpu.VMEM((g * 8, LANE_C), jnp.float32),           # pruned stage-3 rows
            pltpu.VMEM((g * 8 + 8, LANE_C), jnp.float32),       # stage-4 output (+slack)
        ],
        compiler_params=pltpu.CompilerParams(
            dimension_semantics=("parallel",),
            vmem_limit_bytes=32 * 1024 * 1024),
    )(xg, w2blk, w1eff_t, shift2_t, w3t_t, b3_t, w4blk, shift3_t, wlblk, bl_t)

    logits = out.reshape(ng * g, B_LANES, C2)[:, :, :N_CLASSES]
    return logits.reshape(n_pad, N_CLASSES)[:n]


def eegnet_reference(x, params):
    """Pure-JAX (non-Pallas) reference with identical eval-mode semantics."""
    (w1, b1, g1, be1, m1, v1,
     w2, b2, g2, be2, m2, v2,
     w3, b3, w4, b4, g3, be3, m3, v3,
     wl, bl) = params
    eps = 0.0
    dn = ('NCHW', 'OIHW', 'NCHW')
    bn = lambda y, g, be, m, v: ((y - m[None, :, None, None]) /
                                 jnp.sqrt(v[None, :, None, None] + eps) *
                                 g[None, :, None, None] + be[None, :, None, None])
    bias = lambda y, b: y + b[None, :, None, None]
    elu = lambda y: jnp.where(y > 0, y, jnp.exp(y) - 1.0)

    y = jnp.pad(x, ((0, 0), (0, 0), (0, 0), (31, 32)))
    y = bn(bias(lax.conv_general_dilated(y, w1, (1, 1), 'VALID',
                                         dimension_numbers=dn), b1), g1, be1, m1, v1)
    y = bn(bias(lax.conv_general_dilated(y, w2, (1, 1), 'VALID', dimension_numbers=dn,
                                         feature_group_count=8), b2), g2, be2, m2, v2)
    y = elu(y[:, :, :, ::4])
    y = jnp.pad(y, ((0, 0), (0, 0), (0, 0), (7, 8)))
    y = bias(lax.conv_general_dilated(y, w3, (1, 1), 'VALID', dimension_numbers=dn,
                                      feature_group_count=16), b3)
    y = bn(bias(lax.conv_general_dilated(y, w4, (1, 1), 'VALID',
                                         dimension_numbers=dn), b4), g3, be3, m3, v3)
    y = elu(y[:, :, :, ::8])
    y = y.reshape(x.shape[0], -1)
    return y @ wl.T + bl[None, :]


def init_params(key):
    ks = jax.random.split(key, 22)
    nrm = lambda k, shape, s=0.1: (s * jax.random.normal(k, shape)).astype(jnp.float32)
    uni = lambda k, shape: (0.5 + jax.random.uniform(k, shape)).astype(jnp.float32)
    w1 = nrm(ks[0], (8, 1, 1, 64));  b1 = nrm(ks[1], (8,))
    g1 = 1.0 + nrm(ks[2], (8,));     be1 = nrm(ks[3], (8,))
    m1 = nrm(ks[4], (8,));           v1 = uni(ks[5], (8,))
    w2 = nrm(ks[6], (16, 1, 60, 1)); b2 = nrm(ks[7], (16,))
    g2 = 1.0 + nrm(ks[8], (16,));    be2 = nrm(ks[9], (16,))
    m2 = nrm(ks[10], (16,));         v2 = uni(ks[11], (16,))
    w3 = nrm(ks[12], (16, 1, 1, 16)); b3 = nrm(ks[13], (16,))
    w4 = nrm(ks[14], (16, 16, 1, 1)); b4 = nrm(ks[15], (16,))
    g3 = 1.0 + nrm(ks[16], (16,));   be3 = nrm(ks[17], (16,))
    m3 = nrm(ks[18], (16,));         v3 = uni(ks[19], (16,))
    wl = nrm(ks[20], (4, 80));       bl = nrm(ks[21], (4,))
    return (w1, b1, g1, be1, m1, v1, w2, b2, g2, be2, m2, v2,
            w3, b3, w4, b4, g3, be3, m3, v3, wl, bl)


if __name__ == "__main__":
    key = jax.random.PRNGKey(0)
    kx, kp = jax.random.split(key)
    # n=20 with group_block=2 exercises batch padding (20 -> 32), a 2-step grid,
    # and the in-kernel 2-group loop while staying small.
    n = 20
    x = jax.random.normal(kx, (n, 1, H_IN, W_IN), dtype=jnp.float32)
    params = init_params(kp)

    fwd = jax.jit(functools.partial(eegnet_forward, group_block=2))
    out = jax.block_until_ready(fwd(x, params))

    ref = eegnet_reference(x, params)
    assert out.shape == (n, N_CLASSES)
    np.testing.assert_allclose(np.asarray(out), np.asarray(ref), rtol=2e-3, atol=2e-3)
    print("KERNEL_OK")
</pallas_src>

<mosaic_0001>
module attributes {stable_mosaic.version = 11 : i64} {
  func.func @eegnet_kernel(%arg0: i32, %arg1: memref<1x2x160x512xbf16, #tpu.memory_space<vmem>>, %arg2: memref<512x128xf32, #tpu.memory_space<vmem>>, %arg3: memref<64x128xf32, #tpu.memory_space<vmem>>, %arg4: memref<1x128xf32, #tpu.memory_space<vmem>>, %arg5: memref<16x128xf32, #tpu.memory_space<vmem>>, %arg6: memref<1x128xf32, #tpu.memory_space<vmem>>, %arg7: memref<128x128xf32, #tpu.memory_space<vmem>>, %arg8: memref<1x128xf32, #tpu.memory_space<vmem>>, %arg9: memref<5x128x128xf32, #tpu.memory_space<vmem>>, %arg10: memref<1x128xf32, #tpu.memory_space<vmem>>, %arg11: memref<1x2x128xf32, #tpu.memory_space<vmem>>, %arg12: memref<224x128xf32, #tpu.memory_space<vmem>>, %arg13: memref<56x128xf32, #tpu.memory_space<vmem>>, %arg14: memref<16x128xf32, #tpu.memory_space<vmem>>, %arg15: memref<24x128xf32, #tpu.memory_space<vmem>>) attributes {dimension_semantics = [#tpu.dimension_semantics<parallel>], iteration_bounds = array<i64: 2>, scalar_prefetch = 0 : i64, scratch_operands = 4 : i64, tpu.core_type = #tpu.core_type<tc>, window_params = [{transform_indices = @transform_0, window_bounds = array<i64: 1, 2, 160, 512>}, {pipeline_mode = #tpu.pipeline_mode<synchronous>, transform_indices = @transform_1, window_bounds = array<i64: 512, 128>}, {pipeline_mode = #tpu.pipeline_mode<synchronous>, transform_indices = @transform_2, window_bounds = array<i64: 64, 128>}, {pipeline_mode = #tpu.pipeline_mode<synchronous>, transform_indices = @transform_3, window_bounds = array<i64: 1, 128>}, {pipeline_mode = #tpu.pipeline_mode<synchronous>, transform_indices = @transform_4, window_bounds = array<i64: 16, 128>}, {pipeline_mode = #tpu.pipeline_mode<synchronous>, transform_indices = @transform_5, window_bounds = array<i64: 1, 128>}, {pipeline_mode = #tpu.pipeline_mode<synchronous>, transform_indices = @transform_6, window_bounds = array<i64: 128, 128>}, {pipeline_mode = #tpu.pipeline_mode<synchronous>, transform_indices = @transform_7, window_bounds = array<i64: 1, 128>}, {pipeline_mode = #tpu.pipeline_mode<synchronous>, transform_indices = @transform_8, window_bounds = array<i64: 5, 128, 128>}, {pipeline_mode = #tpu.pipeline_mode<synchronous>, transform_indices = @transform_9, window_bounds = array<i64: 1, 128>}, {transform_indices = @transform_10, window_bounds = array<i64: 1, 2, 128>}]} {
    %cst = arith.constant 0.000000e+00 : f32
    %0 = vector.broadcast %cst : f32 to vector<32x128xf32>
    %c0 = arith.constant 0 : index
    %c0_0 = arith.constant 0 : index
    %1 = vector.load %arg12[%c0, %c0_0] : memref<224x128xf32, #tpu.memory_space<vmem>>, vector<32x128xf32>
    tpu.vector_store %arg12[%c0, %c0_0], %0 {strides = array<i32>} : memref<224x128xf32, #tpu.memory_space<vmem>>, vector<32x128xf32>,
    %cst_1 = arith.constant 0.000000e+00 : f32
    %2 = vector.broadcast %cst_1 : f32 to vector<32x128xf32>
    %c192 = arith.constant 192 : index
    %c0_2 = arith.constant 0 : index
    %3 = vector.load %arg12[%c192, %c0_2] : memref<224x128xf32, #tpu.memory_space<vmem>>, vector<32x128xf32>
    tpu.vector_store %arg12[%c192, %c0_2], %2 {strides = array<i32>} : memref<224x128xf32, #tpu.memory_space<vmem>>, vector<32x128xf32>,
    %cst_3 = arith.constant 0.000000e+00 : f32
    %4 = vector.broadcast %cst_3 : f32 to vector<8x128xf32>
    %c0_4 = arith.constant 0 : index
    %c0_5 = arith.constant 0 : index
    %5 = vector.load %arg13[%c0_4, %c0_5] : memref<56x128xf32, #tpu.memory_space<vmem>>, vector<8x128xf32>
    tpu.vector_store %arg13[%c0_4, %c0_5], %4 {strides = array<i32>} : memref<56x128xf32, #tpu.memory_space<vmem>>, vector<8x128xf32>,
    %cst_6 = arith.constant 0.000000e+00 : f32
    %6 = vector.broadcast %cst_6 : f32 to vector<8x128xf32>
    %c48 = arith.constant 48 : index
    %c0_7 = arith.constant 0 : index
    %7 = vector.load %arg13[%c48, %c0_7] : memref<56x128xf32, #tpu.memory_space<vmem>>, vector<8x128xf32>
    tpu.vector_store %arg13[%c48, %c0_7], %6 {strides = array<i32>} : memref<56x128xf32, #tpu.memory_space<vmem>>, vector<8x128xf32>,
    %cst_8 = arith.constant 0.000000e+00 : f32
    %8 = vector.broadcast %cst_8 : f32 to vector<16x128xf32>
    %c0_9 = arith.constant 0 : index
    %c0_10 = arith.constant 0 : index
    %9 = vector.load %arg14[%c0_9, %c0_10] : memref<16x128xf32, #tpu.memory_space<vmem>>, vector<16x128xf32>
    tpu.vector_store %arg14[%c0_9, %c0_10], %8 {strides = array<i32>} : memref<16x128xf32, #tpu.memory_space<vmem>>, vector<16x128xf32>,
    %c0_i32 = arith.constant 0 : i32
    %c2_i32 = arith.constant 2 : i32
    %10 = arith.addi %c0_i32, %c2_i32 : i32
    %c1_i32 = arith.constant 1 : i32
    scf.for %arg16 = %c0_i32 to %10 step %c1_i32  : i32 {
      %c1_i32_56 = arith.constant 1 : i32
      %58 = arith.muli %arg16, %c1_i32_56 : i32
      %c0_i32_57 = arith.constant 0 : i32
      %59 = arith.addi %c0_i32_57, %58 : i32
      %c0_58 = arith.constant 0 : index
      %60 = arith.index_cast %59 : i32 to index
      %c0_59 = arith.constant 0 : index
      %c0_60 = arith.constant 0 : index
      %61 = vector.load %arg1[%c0_58, %60, %c0_59, %c0_60] : memref<1x2x160x512xbf16, #tpu.memory_space<vmem>>, vector<1x1x160x512xbf16>
      %62 = vector.shape_cast %61 : vector<1x1x160x512xbf16> to vector<160x512xbf16>
      %63 = arith.extf %62 : vector<160x512xbf16> to vector<160x512xf32>
      %c0_61 = arith.constant 0 : index
      %c0_62 = arith.constant 0 : index
      %64 = vector.load %arg2[%c0_61, %c0_62] : memref<512x128xf32, #tpu.memory_space<vmem>>, vector<512x128xf32>
      %cst_63 = arith.constant dense<0.000000e+00> : vector<160x128xf32>
      %65 = tpu.matmul %63, %64, %cst_63 {dimension_numbers = #tpu.dot_dimension_numbers<[1], [0], [0], [1], [0, 0, 1, 1], [], []>} : vector<160x512xf32>, vector<512x128xf32>, vector<160x128xf32> -> vector<160x128xf32>
      %c32 = arith.constant 32 : index
      %c0_64 = arith.constant 0 : index
      %66 = vector.load %arg12[%c32, %c0_64] : memref<224x128xf32, #tpu.memory_space<vmem>>, vector<160x128xf32>
      tpu.vector_store %arg12[%c32, %c0_64], %65 {strides = array<i32>} : memref<224x128xf32, #tpu.memory_space<vmem>>, vector<160x128xf32>,
      %cst_65 = arith.constant 0.000000e+00 : f32
      %67 = vector.broadcast %cst_65 : f32 to vector<40x128xf32>
      %c1_66 = arith.constant 1 : index
      %c0_67 = arith.constant 0 : index
      %68 = tpu.strided_load %arg12[%c1_66, %c0_67] {strides = array<i32: 4, 1>} : memref<224x128xf32, #tpu.memory_space<vmem>>, vector<40x128xf32>
      %c0_68 = arith.constant 0 : index
      %c0_69 = arith.constant 0 : index
      %69 = vector.load %arg3[%c0_68, %c0_69] : memref<64x128xf32, #tpu.memory_space<vmem>>, vector<1x128xf32>
      %70 = vector.broadcast %69 : vector<1x128xf32> to vector<40x128xf32>
      %71 = arith.mulf %68, %70 : vector<40x128xf32>
      %72 = arith.addf %67, %71 : vector<40x128xf32>
      %c2_70 = arith.constant 2 : index
      %c0_71 = arith.constant 0 : index
      %73 = tpu.strided_load %arg12[%c2_70, %c0_71] {strides = array<i32: 4, 1>} : memref<224x128xf32, #tpu.memory_space<vmem>>, vector<40x128xf32>
      %c1_72 = arith.constant 1 : index
      %c0_73 = arith.constant 0 : index
      %74 = vector.load %arg3[%c1_72, %c0_73] : memref<64x128xf32, #tpu.memory_space<vmem>>, vector<1x128xf32>
      %75 = vector.broadcast %74 : vector<1x128xf32> to vector<40x128xf32>
      %76 = arith.mulf %73, %75 : vector<40x128xf32>
      %77 = arith.addf %72, %76 : vector<40x128xf32>
      %c3_74 = arith.constant 3 : index
      %c0_75 = arith.constant 0 : index
      %78 = tpu.strided_load %arg12[%c3_74, %c0_75] {strides = array<i32: 4, 1>} : memref<224x128xf32, #tpu.memory_space<vmem>>, vector<40x128xf32>
      %c2_76 = arith.constant 2 : index
      %c0_77 = arith.constant 0 : index
      %79 = vector.load %arg3[%c2_76, %c0_77] : memref<64x128xf32, #tpu.memory_space<vmem>>, vector<1x128xf32>
      %80 = vector.broadcast %79 : vector<1x128xf32> to vector<40x128xf32>
      %81 = arith.mulf %78, %80 : vector<40x128xf32>
      %82 = arith.addf %77, %81 : vector<40x128xf32>
      %c4_78 = arith.constant 4 : index
      %c0_79 = arith.constant 0 : index
      %83 = tpu.strided_load %arg12[%c4_78, %c0_79] {strides = array<i32: 4, 1>} : memref<224x128xf32, #tpu.memory_space<vmem>>, vector<40x128xf32>
      %c3_80 = arith.constant 3 : index
      %c0_81 = arith.constant 0 : index
      %84 = vector.load %arg3[%c3_80, %c0_81] : memref<64x128xf32, #tpu.memory_space<vmem>>, vector<1x128xf32>
      %85 = vector.broadcast %84 : vector<1x128xf32> to vector<40x128xf32>
      %86 = arith.mulf %83, %85 : vector<40x128xf32>
      %87 = arith.addf %82, %86 : vector<40x128xf32>
      %c5 = arith.constant 5 : index
      %c0_82 = arith.constant 0 : index
      %88 = tpu.strided_load %arg12[%c5, %c0_82] {strides = array<i32: 4, 1>} : memref<224x128xf32, #tpu.memory_space<vmem>>, vector<40x128xf32>
      %c4_83 = arith.constant 4 : index
      %c0_84 = arith.constant 0 : index
      %89 = vector.load %arg3[%c4_83, %c0_84] : memref<64x128xf32, #tpu.memory_space<vmem>>, vector<1x128xf32>
      %90 = vector.broadcast %89 : vector<1x128xf32> to vector<40x128xf32>
      %91 = arith.mulf %88, %90 : vector<40x128xf32>
      %92 = arith.addf %87, %91 : vector<40x128xf32>
      %c6 = arith.constant 6 : index
      %c0_85 = arith.constant 0 : index
      %93 = tpu.strided_load %arg12[%c6, %c0_85] {strides = array<i32: 4, 1>} : memref<224x128xf32, #tpu.memory_space<vmem>>, vector<40x128xf32>
      %c5_86 = arith.constant 5 : index
      %c0_87 = arith.constant 0 : index
      %94 = vector.load %arg3[%c5_86, %c0_87] : memref<64x128xf32, #tpu.memory_space<vmem>>, vector<1x128xf32>
      %95 = vector.broadcast %94 : vector<1x128xf32> to vector<40x128xf32>
      %96 = arith.mulf %93, %95 : vector<40x128xf32>
      %97 = arith.addf %92, %96 : vector<40x128xf32>
      %c7 = arith.constant 7 : index
      %c0_88 = arith.constant 0 : index
      %98 = tpu.strided_load %arg12[%c7, %c0_88] {strides = array<i32: 4, 1>} : memref<224x128xf32, #tpu.memory_space<vmem>>, vector<40x128xf32>
      %c6_89 = arith.constant 6 : index
      %c0_90 = arith.constant 0 : index
      %99 = vector.load %arg3[%c6_89, %c0_90] : memref<64x128xf32, #tpu.memory_space<vmem>>, vector<1x128xf32>
      %100 = vector.broadcast %99 : vector<1x128xf32> to vector<40x128xf32>
      %101 = arith.mulf %98, %100 : vector<40x128xf32>
      %102 = arith.addf %97, %101 : vector<40x128xf32>
      %c8 = arith.constant 8 : index
      %c0_91 = arith.constant 0 : index
      %103 = tpu.strided_load %arg12[%c8, %c0_91] {strides = array<i32: 4, 1>} : memref<224x128xf32, #tpu.memory_space<vmem>>, vector<40x128xf32>
      %c7_92 = arith.constant 7 : index
      %c0_93 = arith.constant 0 : index
      %104 = vector.load %arg3[%c7_92, %c0_93] : memref<64x128xf32, #tpu.memory_space<vmem>>, vector<1x128xf32>
      %105 = vector.broadcast %104 : vector<1x128xf32> to vector<40x128xf32>
      %106 = arith.mulf %103, %105 : vector<40x128xf32>
      %107 = arith.addf %102, %106 : vector<40x128xf32>
      %c9 = arith.constant 9 : index
      %c0_94 = arith.constant 0 : index
      %108 = tpu.strided_load %arg12[%c9, %c0_94] {strides = array<i32: 4, 1>} : memref<224x128xf32, #tpu.memory_space<vmem>>, vector<40x128xf32>
      %c8_95 = arith.constant 8 : index
      %c0_96 = arith.constant 0 : index
      %109 = vector.load %arg3[%c8_95, %c0_96] : memref<64x128xf32, #tpu.memory_space<vmem>>, vector<1x128xf32>
      %110 = vector.broadcast %109 : vector<1x128xf32> to vector<40x128xf32>
      %111 = arith.mulf %108, %110 : vector<40x128xf32>
      %112 = arith.addf %107, %111 : vector<40x128xf32>
      %c10 = arith.constant 10 : index
      %c0_97 = arith.constant 0 : index
      %113 = tpu.strided_load %arg12[%c10, %c0_97] {strides = array<i32: 4, 1>} : memref<224x128xf32, #tpu.memory_space<vmem>>, vector<40x128xf32>
      %c9_98 = arith.constant 9 : index
      %c0_99 = arith.constant 0 : index
      %114 = vector.load %arg3[%c9_98, %c0_99] : memref<64x128xf32, #tpu.memory_space<vmem>>, vector<1x128xf32>
      %115 = vector.broadcast %114 : vector<1x128xf32> to vector<40x128xf32>
      %116 = arith.mulf %113, %115 : vector<40x128xf32>
      %117 = arith.addf %112, %116 : vector<40x128xf32>
      %c11 = arith.constant 11 : index
      %c0_100 = arith.constant 0 : index
      %118 = tpu.strided_load %arg12[%c11, %c0_100] {strides = array<i32: 4, 1>} : memref<224x128xf32, #tpu.memory_space<vmem>>, vector<40x128xf32>
      %c10_101 = arith.constant 10 : index
      %c0_102 = arith.constant 0 : index
      %119 = vector.load %arg3[%c10_101, %c0_102] : memref<64x128xf32, #tpu.memory_space<vmem>>, vector<1x128xf32>
      %120 = vector.broadcast %119 : vector<1x128xf32> to vector<40x128xf32>
      %121 = arith.mulf %118, %120 : vector<40x128xf32>
      %122 = arith.addf %117, %121 : vector<40x128xf32>
      %c12 = arith.constant 12 : index
      %c0_103 = arith.constant 0 : index
      %123 = tpu.strided_load %arg12[%c12, %c0_103] {strides = array<i32: 4, 1>} : memref<224x128xf32, #tpu.memory_space<vmem>>, vector<40x128xf32>
      %c11_104 = arith.constant 11 : index
      %c0_105 = arith.constant 0 : index
      %124 = vector.load %arg3[%c11_104, %c0_105] : memref<64x128xf32, #tpu.memory_space<vmem>>, vector<1x128xf32>
      %125 = vector.broadcast %124 : vector<1x128xf32> to vector<40x128xf32>
      %126 = arith.mulf %123, %125 : vector<40x128xf32>
      %127 = arith.addf %122, %126 : vector<40x128xf32>
      %c13 = arith.constant 13 : index
      %c0_106 = arith.constant 0 : index
      %128 = tpu.strided_load %arg12[%c13, %c0_106] {strides = array<i32: 4, 1>} : memref<224x128xf32, #tpu.memory_space<vmem>>, vector<40x128xf32>
      %c12_107 = arith.constant 12 : index
      %c0_108 = arith.constant 0 : index
      %129 = vector.load %arg3[%c12_107, %c0_108] : memref<64x128xf32, #tpu.memory_space<vmem>>, vector<1x128xf32>
      %130 = vector.broadcast %129 : vector<1x128xf32> to vector<40x128xf32>
      %131 = arith.mulf %128, %130 : vector<40x128xf32>
      %132 = arith.addf %127, %131 : vector<40x128xf32>
      %c14 = arith.constant 14 : index
      %c0_109 = arith.constant 0 : index
      %133 = tpu.strided_load %arg12[%c14, %c0_109] {strides = array<i32: 4, 1>} : memref<224x128xf32, #tpu.memory_space<vmem>>, vector<40x128xf32>
      %c13_110 = arith.constant 13 : index
      %c0_111 = arith.constant 0 : index
      %134 = vector.load %arg3[%c13_110, %c0_111] : memref<64x128xf32, #tpu.memory_space<vmem>>, vector<1x128xf32>
      %135 = vector.broadcast %134 : vector<1x128xf32> to vector<40x128xf32>
      %136 = arith.mulf %133, %135 : vector<40x128xf32>
      %137 = arith.addf %132, %136 : vector<40x128xf32>
      %c15 = arith.constant 15 : index
      %c0_112 = arith.constant 0 : index
      %138 = tpu.strided_load %arg12[%c15, %c0_112] {strides = array<i32: 4, 1>} : memref<224x128xf32, #tpu.memory_space<vmem>>, vector<40x128xf32>
      %c14_113 = arith.constant 14 : index
      %c0_114 = arith.constant 0 : index
      %139 = vector.load %arg3[%c14_113, %c0_114] : memref<64x128xf32, #tpu.memory_space<vmem>>, vector<1x128xf32>
      %140 = vector.broadcast %139 : vector<1x128xf32> to vector<40x128xf32>
      %141 = arith.mulf %138, %140 : vector<40x128xf32>
      %142 = arith.addf %137, %141 : vector<40x128xf32>
      %c16 = arith.constant 16 : index
      %c0_115 = arith.constant 0 : index
      %143 = tpu.strided_load %arg12[%c16, %c0_115] {strides = array<i32: 4, 1>} : memref<224x128xf32, #tpu.memory_space<vmem>>, vector<40x128xf32>
      %c15_116 = arith.constant 15 : index
      %c0_117 = arith.constant 0 : index
      %144 = vector.load %arg3[%c15_116, %c0_117] : memref<64x128xf32, #tpu.memory_space<vmem>>, vector<1x128xf32>
      %145 = vector.broadcast %144 : vector<1x128xf32> to vector<40x128xf32>
      %146 = arith.mulf %143, %145 : vector<40x128xf32>
      %147 = arith.addf %142, %146 : vector<40x128xf32>
      %c17 = arith.constant 17 : index
      %c0_118 = arith.constant 0 : index
      %148 = tpu.strided_load %arg12[%c17, %c0_118] {strides = array<i32: 4, 1>} : memref<224x128xf32, #tpu.memory_space<vmem>>, vector<40x128xf32>
      %c16_119 = arith.constant 16 : index
      %c0_120 = arith.constant 0 : index
      %149 = vector.load %arg3[%c16_119, %c0_120] : memref<64x128xf32, #tpu.memory_space<vmem>>, vector<1x128xf32>
      %150 = vector.broadcast %149 : vector<1x128xf32> to vector<40x128xf32>
      %151 = arith.mulf %148, %150 : vector<40x128xf32>
      %152 = arith.addf %147, %151 : vector<40x128xf32>
      %c18 = arith.constant 18 : index
      %c0_121 = arith.constant 0 : index
      %153 = tpu.strided_load %arg12[%c18, %c0_121] {strides = array<i32: 4, 1>} : memref<224x128xf32, #tpu.memory_space<vmem>>, vector<40x128xf32>
      %c17_122 = arith.constant 17 : index
      %c0_123 = arith.constant 0 : index
      %154 = vector.load %arg3[%c17_122, %c0_123] : memref<64x128xf32, #tpu.memory_space<vmem>>, vector<1x128xf32>
      %155 = vector.broadcast %154 : vector<1x128xf32> to vector<40x128xf32>
      %156 = arith.mulf %153, %155 : vector<40x128xf32>
      %157 = arith.addf %152, %156 : vector<40x128xf32>
      %c19 = arith.constant 19 : index
      %c0_124 = arith.constant 0 : index
      %158 = tpu.strided_load %arg12[%c19, %c0_124] {strides = array<i32: 4, 1>} : memref<224x128xf32, #tpu.memory_space<vmem>>, vector<40x128xf32>
      %c18_125 = arith.constant 18 : index
      %c0_126 = arith.constant 0 : index
      %159 = vector.load %arg3[%c18_125, %c0_126] : memref<64x128xf32, #tpu.memory_space<vmem>>, vector<1x128xf32>
      %160 = vector.broadcast %159 : vector<1x128xf32> to vector<40x128xf32>
      %161 = arith.mulf %158, %160 : vector<40x128xf32>
      %162 = arith.addf %157, %161 : vector<40x128xf32>
      %c20 = arith.constant 20 : index
      %c0_127 = arith.constant 0 : index
      %163 = tpu.strided_load %arg12[%c20, %c0_127] {strides = array<i32: 4, 1>} : memref<224x128xf32, #tpu.memory_space<vmem>>, vector<40x128xf32>
      %c19_128 = arith.constant 19 : index
      %c0_129 = arith.constant 0 : index
      %164 = vector.load %arg3[%c19_128, %c0_129] : memref<64x128xf32, #tpu.memory_space<vmem>>, vector<1x128xf32>
      %165 = vector.broadcast %164 : vector<1x128xf32> to vector<40x128xf32>
      %166 = arith.mulf %163, %165 : vector<40x128xf32>
      %167 = arith.addf %162, %166 : vector<40x128xf32>
      %c21 = arith.constant 21 : index
      %c0_130 = arith.constant 0 : index
      %168 = tpu.strided_load %arg12[%c21, %c0_130] {strides = array<i32: 4, 1>} : memref<224x128xf32, #tpu.memory_space<vmem>>, vector<40x128xf32>
      %c20_131 = arith.constant 20 : index
      %c0_132 = arith.constant 0 : index
      %169 = vector.load %arg3[%c20_131, %c0_132] : memref<64x128xf32, #tpu.memory_space<vmem>>, vector<1x128xf32>
      %170 = vector.broadcast %169 : vector<1x128xf32> to vector<40x128xf32>
      %171 = arith.mulf %168, %170 : vector<40x128xf32>
      %172 = arith.addf %167, %171 : vector<40x128xf32>
      %c22 = arith.constant 22 : index
      %c0_133 = arith.constant 0 : index
      %173 = tpu.strided_load %arg12[%c22, %c0_133] {strides = array<i32: 4, 1>} : memref<224x128xf32, #tpu.memory_space<vmem>>, vector<40x128xf32>
      %c21_134 = arith.constant 21 : index
      %c0_135 = arith.constant 0 : index
      %174 = vector.load %arg3[%c21_134, %c0_135] : memref<64x128xf32, #tpu.memory_space<vmem>>, vector<1x128xf32>
      %175 = vector.broadcast %174 : vector<1x128xf32> to vector<40x128xf32>
      %176 = arith.mulf %173, %175 : vector<40x128xf32>
      %177 = arith.addf %172, %176 : vector<40x128xf32>
      %c23 = arith.constant 23 : index
      %c0_136 = arith.constant 0 : index
      %178 = tpu.strided_load %arg12[%c23, %c0_136] {strides = array<i32: 4, 1>} : memref<224x128xf32, #tpu.memory_space<vmem>>, vector<40x128xf32>
      %c22_137 = arith.constant 22 : index
      %c0_138 = arith.constant 0 : index
      %179 = vector.load %arg3[%c22_137, %c0_138] : memref<64x128xf32, #tpu.memory_space<vmem>>, vector<1x128xf32>
      %180 = vector.broadcast %179 : vector<1x128xf32> to vector<40x128xf32>
      %181 = arith.mulf %178, %180 : vector<40x128xf32>
      %182 = arith.addf %177, %181 : vector<40x128xf32>
      %c24 = arith.constant 24 : index
      %c0_139 = arith.constant 0 : index
      %183 = tpu.strided_load %arg12[%c24, %c0_139] {strides = array<i32: 4, 1>} : memref<224x128xf32, #tpu.memory_space<vmem>>, vector<40x128xf32>
      %c23_140 = arith.constant 23 : index
      %c0_141 = arith.constant 0 : index
      %184 = vector.load %arg3[%c23_140, %c0_141] : memref<64x128xf32, #tpu.memory_space<vmem>>, vector<1x128xf32>
      %185 = vector.broadcast %184 : vector<1x128xf32> to vector<40x128xf32>
      %186 = arith.mulf %183, %185 : vector<40x128xf32>
      %187 = arith.addf %182, %186 : vector<40x128xf32>
      %c25 = arith.constant 25 : index
      %c0_142 = arith.constant 0 : index
      %188 = tpu.strided_load %arg12[%c25, %c0_142] {strides = array<i32: 4, 1>} : memref<224x128xf32, #tpu.memory_space<vmem>>, vector<40x128xf32>
      %c24_143 = arith.constant 24 : index
      %c0_144 = arith.constant 0 : index
      %189 = vector.load %arg3[%c24_143, %c0_144] : memref<64x128xf32, #tpu.memory_space<vmem>>, vector<1x128xf32>
      %190 = vector.broadcast %189 : vector<1x128xf32> to vector<40x128xf32>
      %191 = arith.mulf %188, %190 : vector<40x128xf32>
      %192 = arith.addf %187, %191 : vector<40x128xf32>
      %c26 = arith.constant 26 : index
      %c0_145 = arith.constant 0 : index
      %193 = tpu.strided_load %arg12[%c26, %c0_145] {strides = array<i32: 4, 1>} : memref<224x128xf32, #tpu.memory_space<vmem>>, vector<40x128xf32>
      %c25_146 = arith.constant 25 : index
      %c0_147 = arith.constant 0 : index
      %194 = vector.load %arg3[%c25_146, %c0_147] : memref<64x128xf32, #tpu.memory_space<vmem>>, vector<1x128xf32>
      %195 = vector.broadcast %194 : vector<1x128xf32> to vector<40x128xf32>
      %196 = arith.mulf %193, %195 : vector<40x128xf32>
      %197 = arith.addf %192, %196 : vector<40x128xf32>
      %c27 = arith.constant 27 : index
      %c0_148 = arith.constant 0 : index
      %198 = tpu.strided_load %arg12[%c27, %c0_148] {strides = array<i32: 4, 1>} : memref<224x128xf32, #tpu.memory_space<vmem>>, vector<40x128xf32>
      %c26_149 = arith.constant 26 : index
      %c0_150 = arith.constant 0 : index
      %199 = vector.load %arg3[%c26_149, %c0_150] : memref<64x128xf32, #tpu.memory_space<vmem>>, vector<1x128xf32>
      %200 = vector.broadcast %199 : vector<1x128xf32> to vector<40x128xf32>
      %201 = arith.mulf %198, %200 : vector<40x128xf32>
      %202 = arith.addf %197, %201 : vector<40x128xf32>
      %c28 = arith.constant 28 : index
      %c0_151 = arith.constant 0 : index
      %203 = tpu.strided_load %arg12[%c28, %c0_151] {strides = array<i32: 4, 1>} : memref<224x128xf32, #tpu.memory_space<vmem>>, vector<40x128xf32>
      %c27_152 = arith.constant 27 : index
      %c0_153 = arith.constant 0 : index
      %204 = vector.load %arg3[%c27_152, %c0_153] : memref<64x128xf32, #tpu.memory_space<vmem>>, vector<1x128xf32>
      %205 = vector.broadcast %204 : vector<1x128xf32> to vector<40x128xf32>
      %206 = arith.mulf %203, %205 : vector<40x128xf32>
      %207 = arith.addf %202, %206 : vector<40x128xf32>
      %c29 = arith.constant 29 : index
      %c0_154 = arith.constant 0 : index
      %208 = tpu.strided_load %arg12[%c29, %c0_154] {strides = array<i32: 4, 1>} : memref<224x128xf32, #tpu.memory_space<vmem>>, vector<40x128xf32>
      %c28_155 = arith.constant 28 : index
      %c0_156 = arith.constant 0 : index
      %209 = vector.load %arg3[%c28_155, %c0_156] : memref<64x128xf32, #tpu.memory_space<vmem>>, vector<1x128xf32>
      %210 = vector.broadcast %209 : vector<1x128xf32> to vector<40x128xf32>
      %211 = arith.mulf %208, %210 : vector<40x128xf32>
      %212 = arith.addf %207, %211 : vector<40x128xf32>
      %c30 = arith.constant 30 : index
      %c0_157 = arith.constant 0 : index
      %213 = tpu.strided_load %arg12[%c30, %c0_157] {strides = array<i32: 4, 1>} : memref<224x128xf32, #tpu.memory_space<vmem>>, vector<40x128xf32>
      %c29_158 = arith.constant 29 : index
      %c0_159 = arith.constant 0 : index
      %214 = vector.load %arg3[%c29_158, %c0_159] : memref<64x128xf32, #tpu.memory_space<vmem>>, vector<1x128xf32>
      %215 = vector.broadcast %214 : vector<1x128xf32> to vector<40x128xf32>
      %216 = arith.mulf %213, %215 : vector<40x128xf32>
      %217 = arith.addf %212, %216 : vector<40x128xf32>
      %c31 = arith.constant 31 : index
      %c0_160 = arith.constant 0 : index
      %218 = tpu.strided_load %arg12[%c31, %c0_160] {strides = array<i32: 4, 1>} : memref<224x128xf32, #tpu.memory_space<vmem>>, vector<40x128xf32>
      %c30_161 = arith.constant 30 : index
      %c0_162 = arith.constant 0 : index
      %219 = vector.load %arg3[%c30_161, %c0_162] : memref<64x128xf32, #tpu.memory_space<vmem>>, vector<1x128xf32>
      %220 = vector.broadcast %219 : vector<1x128xf32> to vector<40x128xf32>
      %221 = arith.mulf %218, %220 : vector<40x128xf32>
      %222 = arith.addf %217, %221 : vector<40x128xf32>
      %c32_163 = arith.constant 32 : index
      %c0_164 = arith.constant 0 : index
      %223 = tpu.strided_load %arg12[%c32_163, %c0_164] {strides = array<i32: 4, 1>} : memref<224x128xf32, #tpu.memory_space<vmem>>, vector<40x128xf32>
      %c31_165 = arith.constant 31 : index
      %c0_166 = arith.constant 0 : index
      %224 = vector.load %arg3[%c31_165, %c0_166] : memref<64x128xf32, #tpu.memory_space<vmem>>, vector<1x128xf32>
      %225 = vector.broadcast %224 : vector<1x128xf32> to vector<40x128xf32>
      %226 = arith.mulf %223, %225 : vector<40x128xf32>
      %227 = arith.addf %222, %226 : vector<40x128xf32>
      %c33 = arith.constant 33 : index
      %c0_167 = arith.constant 0 : index
      %228 = tpu.strided_load %arg12[%c33, %c0_167] {strides = array<i32: 4, 1>} : memref<224x128xf32, #tpu.memory_space<vmem>>, vector<40x128xf32>
      %c32_168 = arith.constant 32 : index
      %c0_169 = arith.constant 0 : index
      %229 = vector.load %arg3[%c32_168, %c0_169] : memref<64x128xf32, #tpu.memory_space<vmem>>, vector<1x128xf32>
      %230 = vector.broadcast %229 : vector<1x128xf32> to vector<40x128xf32>
      %231 = arith.mulf %228, %230 : vector<40x128xf32>
      %232 = arith.addf %227, %231 : vector<40x128xf32>
      %c34 = arith.constant 34 : index
      %c0_170 = arith.constant 0 : index
      %233 = tpu.strided_load %arg12[%c34, %c0_170] {strides = array<i32: 4, 1>} : memref<224x128xf32, #tpu.memory_space<vmem>>, vector<40x128xf32>
      %c33_171 = arith.constant 33 : index
      %c0_172 = arith.constant 0 : index
      %234 = vector.load %arg3[%c33_171, %c0_172] : memref<64x128xf32, #tpu.memory_space<vmem>>, vector<1x128xf32>
      %235 = vector.broadcast %234 : vector<1x128xf32> to vector<40x128xf32>
      %236 = arith.mulf %233, %235 : vector<40x128xf32>
      %237 = arith.addf %232, %236 : vector<40x128xf32>
      %c35 = arith.constant 35 : index
      %c0_173 = arith.constant 0 : index
      %238 = tpu.strided_load %arg12[%c35, %c0_173] {strides = array<i32: 4, 1>} : memref<224x128xf32, #tpu.memory_space<vmem>>, vector<40x128xf32>
      %c34_174 = arith.constant 34 : index
      %c0_175 = arith.constant 0 : index
      %239 = vector.load %arg3[%c34_174, %c0_175] : memref<64x128xf32, #tpu.memory_space<vmem>>, vector<1x128xf32>
      %240 = vector.broadcast %239 : vector<1x128xf32> to vector<40x128xf32>
      %241 = arith.mulf %238, %240 : vector<40x128xf32>
      %242 = arith.addf %237, %241 : vector<40x128xf32>
      %c36 = arith.constant 36 : index
      %c0_176 = arith.constant 0 : index
      %243 = tpu.strided_load %arg12[%c36, %c0_176] {strides = array<i32: 4, 1>} : memref<224x128xf32, #tpu.memory_space<vmem>>, vector<40x128xf32>
      %c35_177 = arith.constant 35 : index
      %c0_178 = arith.constant 0 : index
      %244 = vector.load %arg3[%c35_177, %c0_178] : memref<64x128xf32, #tpu.memory_space<vmem>>, vector<1x128xf32>
      %245 = vector.broadcast %244 : vector<1x128xf32> to vector<40x128xf32>
      %246 = arith.mulf %243, %245 : vector<40x128xf32>
      %247 = arith.addf %242, %246 : vector<40x128xf32>
      %c37 = arith.constant 37 : index
      %c0_179 = arith.constant 0 : index
      %248 = tpu.strided_load %arg12[%c37, %c0_179] {strides = array<i32: 4, 1>} : memref<224x128xf32, #tpu.memory_space<vmem>>, vector<40x128xf32>
      %c36_180 = arith.constant 36 : index
      %c0_181 = arith.constant 0 : index
      %249 = vector.load %arg3[%c36_180, %c0_181] : memref<64x128xf32, #tpu.memory_space<vmem>>, vector<1x128xf32>
      %250 = vector.broadcast %249 : vector<1x128xf32> to vector<40x128xf32>
      %251 = arith.mulf %248, %250 : vector<40x128xf32>
      %252 = arith.addf %247, %251 : vector<40x128xf32>
      %c38 = arith.constant 38 : index
      %c0_182 = arith.constant 0 : index
      %253 = tpu.strided_load %arg12[%c38, %c0_182] {strides = array<i32: 4, 1>} : memref<224x128xf32, #tpu.memory_space<vmem>>, vector<40x128xf32>
      %c37_183 = arith.constant 37 : index
      %c0_184 = arith.constant 0 : index
      %254 = vector.load %arg3[%c37_183, %c0_184] : memref<64x128xf32, #tpu.memory_space<vmem>>, vector<1x128xf32>
      %255 = vector.broadcast %254 : vector<1x128xf32> to vector<40x128xf32>
      %256 = arith.mulf %253, %255 : vector<40x128xf32>
      %257 = arith.addf %252, %256 : vector<40x128xf32>
      %c39 = arith.constant 39 : index
      %c0_185 = arith.constant 0 : index
      %258 = tpu.strided_load %arg12[%c39, %c0_185] {strides = array<i32: 4, 1>} : memref<224x128xf32, #tpu.memory_space<vmem>>, vector<40x128xf32>
      %c38_186 = arith.constant 38 : index
      %c0_187 = arith.constant 0 : index
      %259 = vector.load %arg3[%c38_186, %c0_187] : memref<64x128xf32, #tpu.memory_space<vmem>>, vector<1x128xf32>
      %260 = vector.broadcast %259 : vector<1x128xf32> to vector<40x128xf32>
      %261 = arith.mulf %258, %260 : vector<40x128xf32>
      %262 = arith.addf %257, %261 : vector<40x128xf32>
      %c40 = arith.constant 40 : index
      %c0_188 = arith.constant 0 : index
      %263 = tpu.strided_load %arg12[%c40, %c0_188] {strides = array<i32: 4, 1>} : memref<224x128xf32, #tpu.memory_space<vmem>>, vector<40x128xf32>
      %c39_189 = arith.constant 39 : index
      %c0_190 = arith.constant 0 : index
      %264 = vector.load %arg3[%c39_189, %c0_190] : memref<64x128xf32, #tpu.memory_space<vmem>>, vector<1x128xf32>
      %265 = vector.broadcast %264 : vector<1x128xf32> to vector<40x128xf32>
      %266 = arith.mulf %263, %265 : vector<40x128xf32>
      %267 = arith.addf %262, %266 : vector<40x128xf32>
      %c41 = arith.constant 41 : index
      %c0_191 = arith.constant 0 : index
      %268 = tpu.strided_load %arg12[%c41, %c0_191] {strides = array<i32: 4, 1>} : memref<224x128xf32, #tpu.memory_space<vmem>>, vector<40x128xf32>
      %c40_192 = arith.constant 40 : index
      %c0_193 = arith.constant 0 : index
      %269 = vector.load %arg3[%c40_192, %c0_193] : memref<64x128xf32, #tpu.memory_space<vmem>>, vector<1x128xf32>
      %270 = vector.broadcast %269 : vector<1x128xf32> to vector<40x128xf32>
      %271 = arith.mulf %268, %270 : vector<40x128xf32>
      %272 = arith.addf %267, %271 : vector<40x128xf32>
      %c42 = arith.constant 42 : index
      %c0_194 = arith.constant 0 : index
      %273 = tpu.strided_load %arg12[%c42, %c0_194] {strides = array<i32: 4, 1>} : memref<224x128xf32, #tpu.memory_space<vmem>>, vector<40x128xf32>
      %c41_195 = arith.constant 41 : index
      %c0_196 = arith.constant 0 : index
      %274 = vector.load %arg3[%c41_195, %c0_196] : memref<64x128xf32, #tpu.memory_space<vmem>>, vector<1x128xf32>
      %275 = vector.broadcast %274 : vector<1x128xf32> to vector<40x128xf32>
      %276 = arith.mulf %273, %275 : vector<40x128xf32>
      %277 = arith.addf %272, %276 : vector<40x128xf32>
      %c43 = arith.constant 43 : index
      %c0_197 = arith.constant 0 : index
      %278 = tpu.strided_load %arg12[%c43, %c0_197] {strides = array<i32: 4, 1>} : memref<224x128xf32, #tpu.memory_space<vmem>>, vector<40x128xf32>
      %c42_198 = arith.constant 42 : index
      %c0_199 = arith.constant 0 : index
      %279 = vector.load %arg3[%c42_198, %c0_199] : memref<64x128xf32, #tpu.memory_space<vmem>>, vector<1x128xf32>
      %280 = vector.broadcast %279 : vector<1x128xf32> to vector<40x128xf32>
      %281 = arith.mulf %278, %280 : vector<40x128xf32>
      %282 = arith.addf %277, %281 : vector<40x128xf32>
      %c44 = arith.constant 44 : index
      %c0_200 = arith.constant 0 : index
      %283 = tpu.strided_load %arg12[%c44, %c0_200] {strides = array<i32: 4, 1>} : memref<224x128xf32, #tpu.memory_space<vmem>>, vector<40x128xf32>
      %c43_201 = arith.constant 43 : index
      %c0_202 = arith.constant 0 : index
      %284 = vector.load %arg3[%c43_201, %c0_202] : memref<64x128xf32, #tpu.memory_space<vmem>>, vector<1x128xf32>
      %285 = vector.broadcast %284 : vector<1x128xf32> to vector<40x128xf32>
      %286 = arith.mulf %283, %285 : vector<40x128xf32>
      %287 = arith.addf %282, %286 : vector<40x128xf32>
      %c45 = arith.constant 45 : index
      %c0_203 = arith.constant 0 : index
      %288 = tpu.strided_load %arg12[%c45, %c0_203] {strides = array<i32: 4, 1>} : memref<224x128xf32, #tpu.memory_space<vmem>>, vector<40x128xf32>
      %c44_204 = arith.constant 44 : index
      %c0_205 = arith.constant 0 : index
      %289 = vector.load %arg3[%c44_204, %c0_205] : memref<64x128xf32, #tpu.memory_space<vmem>>, vector<1x128xf32>
      %290 = vector.broadcast %289 : vector<1x128xf32> to vector<40x128xf32>
      %291 = arith.mulf %288, %290 : vector<40x128xf32>
      %292 = arith.addf %287, %291 : vector<40x128xf32>
      %c46 = arith.constant 46 : index
      %c0_206 = arith.constant 0 : index
      %293 = tpu.strided_load %arg12[%c46, %c0_206] {strides = array<i32: 4, 1>} : memref<224x128xf32, #tpu.memory_space<vmem>>, vector<40x128xf32>
      %c45_207 = arith.constant 45 : index
      %c0_208 = arith.constant 0 : index
      %294 = vector.load %arg3[%c45_207, %c0_208] : memref<64x128xf32, #tpu.memory_space<vmem>>, vector<1x128xf32>
      %295 = vector.broadcast %294 : vector<1x128xf32> to vector<40x128xf32>
      %296 = arith.mulf %293, %295 : vector<40x128xf32>
      %297 = arith.addf %292, %296 : vector<40x128xf32>
      %c47 = arith.constant 47 : index
      %c0_209 = arith.constant 0 : index
      %298 = tpu.strided_load %arg12[%c47, %c0_209] {strides = array<i32: 4, 1>} : memref<224x128xf32, #tpu.memory_space<vmem>>, vector<40x128xf32>
      %c46_210 = arith.constant 46 : index
      %c0_211 = arith.constant 0 : index
      %299 = vector.load %arg3[%c46_210, %c0_211] : memref<64x128xf32, #tpu.memory_space<vmem>>, vector<1x128xf32>
      %300 = vector.broadcast %299 : vector<1x128xf32> to vector<40x128xf32>
      %301 = arith.mulf %298, %300 : vector<40x128xf32>
      %302 = arith.addf %297, %301 : vector<40x128xf32>
      %c48_212 = arith.constant 48 : index
      %c0_213 = arith.constant 0 : index
      %303 = tpu.strided_load %arg12[%c48_212, %c0_213] {strides = array<i32: 4, 1>} : memref<224x128xf32, #tpu.memory_space<vmem>>, vector<40x128xf32>
      %c47_214 = arith.constant 47 : index
      %c0_215 = arith.constant 0 : index
      %304 = vector.load %arg3[%c47_214, %c0_215] : memref<64x128xf32, #tpu.memory_space<vmem>>, vector<1x128xf32>
      %305 = vector.broadcast %304 : vector<1x128xf32> to vector<40x128xf32>
      %306 = arith.mulf %303, %305 : vector<40x128xf32>
      %307 = arith.addf %302, %306 : vector<40x128xf32>
      %c49 = arith.constant 49 : index
      %c0_216 = arith.constant 0 : index
      %308 = tpu.strided_load %arg12[%c49, %c0_216] {strides = array<i32: 4, 1>} : memref<224x128xf32, #tpu.memory_space<vmem>>, vector<40x128xf32>
      %c48_217 = arith.constant 48 : index
      %c0_218 = arith.constant 0 : index
      %309 = vector.load %arg3[%c48_217, %c0_218] : memref<64x128xf32, #tpu.memory_space<vmem>>, vector<1x128xf32>
      %310 = vector.broadcast %309 : vector<1x128xf32> to vector<40x128xf32>
      %311 = arith.mulf %308, %310 : vector<40x128xf32>
      %312 = arith.addf %307, %311 : vector<40x128xf32>
      %c50 = arith.constant 50 : index
      %c0_219 = arith.constant 0 : index
      %313 = tpu.strided_load %arg12[%c50, %c0_219] {strides = array<i32: 4, 1>} : memref<224x128xf32, #tpu.memory_space<vmem>>, vector<40x128xf32>
      %c49_220 = arith.constant 49 : index
      %c0_221 = arith.constant 0 : index
      %314 = vector.load %arg3[%c49_220, %c0_221] : memref<64x128xf32, #tpu.memory_space<vmem>>, vector<1x128xf32>
      %315 = vector.broadcast %314 : vector<1x128xf32> to vector<40x128xf32>
      %316 = arith.mulf %313, %315 : vector<40x128xf32>
      %317 = arith.addf %312, %316 : vector<40x128xf32>
      %c51 = arith.constant 51 : index
      %c0_222 = arith.constant 0 : index
      %318 = tpu.strided_load %arg12[%c51, %c0_222] {strides = array<i32: 4, 1>} : memref<224x128xf32, #tpu.memory_space<vmem>>, vector<40x128xf32>
      %c50_223 = arith.constant 50 : index
      %c0_224 = arith.constant 0 : index
      %319 = vector.load %arg3[%c50_223, %c0_224] : memref<64x128xf32, #tpu.memory_space<vmem>>, vector<1x128xf32>
      %320 = vector.broadcast %319 : vector<1x128xf32> to vector<40x128xf32>
      %321 = arith.mulf %318, %320 : vector<40x128xf32>
      %322 = arith.addf %317, %321 : vector<40x128xf32>
      %c52 = arith.constant 52 : index
      %c0_225 = arith.constant 0 : index
      %323 = tpu.strided_load %arg12[%c52, %c0_225] {strides = array<i32: 4, 1>} : memref<224x128xf32, #tpu.memory_space<vmem>>, vector<40x128xf32>
      %c51_226 = arith.constant 51 : index
      %c0_227 = arith.constant 0 : index
      %324 = vector.load %arg3[%c51_226, %c0_227] : memref<64x128xf32, #tpu.memory_space<vmem>>, vector<1x128xf32>
      %325 = vector.broadcast %324 : vector<1x128xf32> to vector<40x128xf32>
      %326 = arith.mulf %323, %325 : vector<40x128xf32>
      %327 = arith.addf %322, %326 : vector<40x128xf32>
      %c53 = arith.constant 53 : index
      %c0_228 = arith.constant 0 : index
      %328 = tpu.strided_load %arg12[%c53, %c0_228] {strides = array<i32: 4, 1>} : memref<224x128xf32, #tpu.memory_space<vmem>>, vector<40x128xf32>
      %c52_229 = arith.constant 52 : index
      %c0_230 = arith.constant 0 : index
      %329 = vector.load %arg3[%c52_229, %c0_230] : memref<64x128xf32, #tpu.memory_space<vmem>>, vector<1x128xf32>
      %330 = vector.broadcast %329 : vector<1x128xf32> to vector<40x128xf32>
      %331 = arith.mulf %328, %330 : vector<40x128xf32>
      %332 = arith.addf %327, %331 : vector<40x128xf32>
      %c54 = arith.constant 54 : index
      %c0_231 = arith.constant 0 : index
      %333 = tpu.strided_load %arg12[%c54, %c0_231] {strides = array<i32: 4, 1>} : memref<224x128xf32, #tpu.memory_space<vmem>>, vector<40x128xf32>
      %c53_232 = arith.constant 53 : index
      %c0_233 = arith.constant 0 : index
      %334 = vector.load %arg3[%c53_232, %c0_233] : memref<64x128xf32, #tpu.memory_space<vmem>>, vector<1x128xf32>
      %335 = vector.broadcast %334 : vector<1x128xf32> to vector<40x128xf32>
      %336 = arith.mulf %333, %335 : vector<40x128xf32>
      %337 = arith.addf %332, %336 : vector<40x128xf32>
      %c55 = arith.constant 55 : index
      %c0_234 = arith.constant 0 : index
      %338 = tpu.strided_load %arg12[%c55, %c0_234] {strides = array<i32: 4, 1>} : memref<224x128xf32, #tpu.memory_space<vmem>>, vector<40x128xf32>
      %c54_235 = arith.constant 54 : index
      %c0_236 = arith.constant 0 : index
      %339 = vector.load %arg3[%c54_235, %c0_236] : memref<64x128xf32, #tpu.memory_space<vmem>>, vector<1x128xf32>
      %340 = vector.broadcast %339 : vector<1x128xf32> to vector<40x128xf32>
      %341 = arith.mulf %338, %340 : vector<40x128xf32>
      %342 = arith.addf %337, %341 : vector<40x128xf32>
      %c56 = arith.constant 56 : index
      %c0_237 = arith.constant 0 : index
      %343 = tpu.strided_load %arg12[%c56, %c0_237] {strides = array<i32: 4, 1>} : memref<224x128xf32, #tpu.memory_space<vmem>>, vector<40x128xf32>
      %c55_238 = arith.constant 55 : index
      %c0_239 = arith.constant 0 : index
      %344 = vector.load %arg3[%c55_238, %c0_239] : memref<64x128xf32, #tpu.memory_space<vmem>>, vector<1x128xf32>
      %345 = vector.broadcast %344 : vector<1x128xf32> to vector<40x128xf32>
      %346 = arith.mulf %343, %345 : vector<40x128xf32>
      %347 = arith.addf %342, %346 : vector<40x128xf32>
      %c57 = arith.constant 57 : index
      %c0_240 = arith.constant 0 : index
      %348 = tpu.strided_load %arg12[%c57, %c0_240] {strides = array<i32: 4, 1>} : memref<224x128xf32, #tpu.memory_space<vmem>>, vector<40x128xf32>
      %c56_241 = arith.constant 56 : index
      %c0_242 = arith.constant 0 : index
      %349 = vector.load %arg3[%c56_241, %c0_242] : memref<64x128xf32, #tpu.memory_space<vmem>>, vector<1x128xf32>
      %350 = vector.broadcast %349 : vector<1x128xf32> to vector<40x128xf32>
      %351 = arith.mulf %348, %350 : vector<40x128xf32>
      %352 = arith.addf %347, %351 : vector<40x128xf32>
      %c58 = arith.constant 58 : index
      %c0_243 = arith.constant 0 : index
      %353 = tpu.strided_load %arg12[%c58, %c0_243] {strides = array<i32: 4, 1>} : memref<224x128xf32, #tpu.memory_space<vmem>>, vector<40x128xf32>
      %c57_244 = arith.constant 57 : index
      %c0_245 = arith.constant 0 : index
      %354 = vector.load %arg3[%c57_244, %c0_245] : memref<64x128xf32, #tpu.memory_space<vmem>>, vector<1x128xf32>
      %355 = vector.broadcast %354 : vector<1x128xf32> to vector<40x128xf32>
      %356 = arith.mulf %353, %355 : vector<40x128xf32>
      %357 = arith.addf %352, %356 : vector<40x128xf32>
      %c59 = arith.constant 59 : index
      %c0_246 = arith.constant 0 : index
      %358 = tpu.strided_load %arg12[%c59, %c0_246] {strides = array<i32: 4, 1>} : memref<224x128xf32, #tpu.memory_space<vmem>>, vector<40x128xf32>
      %c58_247 = arith.constant 58 : index
      %c0_248 = arith.constant 0 : index
      %359 = vector.load %arg3[%c58_247, %c0_248] : memref<64x128xf32, #tpu.memory_space<vmem>>, vector<1x128xf32>
      %360 = vector.broadcast %359 : vector<1x128xf32> to vector<40x128xf32>
      %361 = arith.mulf %358, %360 : vector<40x128xf32>
      %362 = arith.addf %357, %361 : vector<40x128xf32>
      %c60 = arith.constant 60 : index
      %c0_249 = arith.constant 0 : index
      %363 = tpu.strided_load %arg12[%c60, %c0_249] {strides = array<i32: 4, 1>} : memref<224x128xf32, #tpu.memory_space<vmem>>, vector<40x128xf32>
      %c59_250 = arith.constant 59 : index
      %c0_251 = arith.constant 0 : index
      %364 = vector.load %arg3[%c59_250, %c0_251] : memref<64x128xf32, #tpu.memory_space<vmem>>, vector<1x128xf32>
      %365 = vector.broadcast %364 : vector<1x128xf32> to vector<40x128xf32>
      %366 = arith.mulf %363, %365 : vector<40x128xf32>
      %367 = arith.addf %362, %366 : vector<40x128xf32>
      %c61 = arith.constant 61 : index
      %c0_252 = arith.constant 0 : index
      %368 = tpu.strided_load %arg12[%c61, %c0_252] {strides = array<i32: 4, 1>} : memref<224x128xf32, #tpu.memory_space<vmem>>, vector<40x128xf32>
      %c60_253 = arith.constant 60 : index
      %c0_254 = arith.constant 0 : index
      %369 = vector.load %arg3[%c60_253, %c0_254] : memref<64x128xf32, #tpu.memory_space<vmem>>, vector<1x128xf32>
      %370 = vector.broadcast %369 : vector<1x128xf32> to vector<40x128xf32>
      %371 = arith.mulf %368, %370 : vector<40x128xf32>
      %372 = arith.addf %367, %371 : vector<40x128xf32>
      %c62 = arith.constant 62 : index
      %c0_255 = arith.constant 0 : index
      %373 = tpu.strided_load %arg12[%c62, %c0_255] {strides = array<i32: 4, 1>} : memref<224x128xf32, #tpu.memory_space<vmem>>, vector<40x128xf32>
      %c61_256 = arith.constant 61 : index
      %c0_257 = arith.constant 0 : index
      %374 = vector.load %arg3[%c61_256, %c0_257] : memref<64x128xf32, #tpu.memory_space<vmem>>, vector<1x128xf32>
      %375 = vector.broadcast %374 : vector<1x128xf32> to vector<40x128xf32>
      %376 = arith.mulf %373, %375 : vector<40x128xf32>
      %377 = arith.addf %372, %376 : vector<40x128xf32>
      %c63 = arith.constant 63 : index
      %c0_258 = arith.constant 0 : index
      %378 = tpu.strided_load %arg12[%c63, %c0_258] {strides = array<i32: 4, 1>} : memref<224x128xf32, #tpu.memory_space<vmem>>, vector<40x128xf32>
      %c62_259 = arith.constant 62 : index
      %c0_260 = arith.constant 0 : index
      %379 = vector.load %arg3[%c62_259, %c0_260] : memref<64x128xf32, #tpu.memory_space<vmem>>, vector<1x128xf32>
      %380 = vector.broadcast %379 : vector<1x128xf32> to vector<40x128xf32>
      %381 = arith.mulf %378, %380 : vector<40x128xf32>
      %382 = arith.addf %377, %381 : vector<40x128xf32>
      %c64 = arith.constant 64 : index
      %c0_261 = arith.constant 0 : index
      %383 = tpu.strided_load %arg12[%c64, %c0_261] {strides = array<i32: 4, 1>} : memref<224x128xf32, #tpu.memory_space<vmem>>, vector<40x128xf32>
      %c63_262 = arith.constant 63 : index
      %c0_263 = arith.constant 0 : index
      %384 = vector.load %arg3[%c63_262, %c0_263] : memref<64x128xf32, #tpu.memory_space<vmem>>, vector<1x128xf32>
      %385 = vector.broadcast %384 : vector<1x128xf32> to vector<40x128xf32>
      %386 = arith.mulf %383, %385 : vector<40x128xf32>
      %387 = arith.addf %382, %386 : vector<40x128xf32>
      %c0_264 = arith.constant 0 : index
      %c0_265 = arith.constant 0 : index
      %388 = vector.load %arg4[%c0_264, %c0_265] : memref<1x128xf32, #tpu.memory_space<vmem>>, vector<1x128xf32>
      %389 = vector.broadcast %388 : vector<1x128xf32> to vector<40x128xf32>
      %390 = arith.addf %387, %389 : vector<40x128xf32>
      %cst_266 = arith.constant 0.000000e+00 : f32
      %391 = vector.broadcast %cst_266 : f32 to vector<40x128xf32>
      %392 = arith.cmpf ogt, %390, %391 : vector<40x128xf32>
      %cst_267 = arith.constant 0.000000e+00 : f32
      %393 = vector.broadcast %cst_267 : f32 to vector<40x128xf32>
      %394 = arith.minimumf %390, %393 : vector<40x128xf32>
      %395 = math.exp %394 : vector<40x128xf32>
      %cst_268 = arith.constant 1.000000e+00 : f32
      %396 = vector.broadcast %cst_268 : f32 to vector<40x128xf32>
      %397 = arith.subf %395, %396 : vector<40x128xf32>
      %398 = arith.select %392, %390, %397 : vector<40x128xi1>, vector<40x128xf32>
      %c8_269 = arith.constant 8 : index
      %c0_270 = arith.constant 0 : index
      %399 = vector.load %arg13[%c8_269, %c0_270] : memref<56x128xf32, #tpu.memory_space<vmem>>, vector<40x128xf32>
      tpu.vector_store %arg13[%c8_269, %c0_270], %398 {strides = array<i32>} : memref<56x128xf32, #tpu.memory_space<vmem>>, vector<40x128xf32>,
      %cst_271 = arith.constant 0.000000e+00 : f32
      %400 = vector.broadcast %cst_271 : f32 to vector<5x128xf32>
      %c1_272 = arith.constant 1 : index
      %c0_273 = arith.constant 0 : index
      %401 = tpu.strided_load %arg13[%c1_272, %c0_273] {strides = array<i32: 8, 1>} : memref<56x128xf32, #tpu.memory_space<vmem>>, vector<5x128xf32>
      %c0_274 = arith.constant 0 : index
      %c0_275 = arith.constant 0 : index
      %402 = vector.load %arg5[%c0_274, %c0_275] : memref<16x128xf32, #tpu.memory_space<vmem>>, vector<1x128xf32>
      %403 = vector.broadcast %402 : vector<1x128xf32> to vector<5x128xf32>
      %404 = arith.mulf %401, %403 : vector<5x128xf32>
      %405 = arith.addf %400, %404 : vector<5x128xf32>
      %c2_276 = arith.constant 2 : index
      %c0_277 = arith.constant 0 : index
      %406 = tpu.strided_load %arg13[%c2_276, %c0_277] {strides = array<i32: 8, 1>} : memref<56x128xf32, #tpu.memory_space<vmem>>, vector<5x128xf32>
      %c1_278 = arith.constant 1 : index
      %c0_279 = arith.constant 0 : index
      %407 = vector.load %arg5[%c1_278, %c0_279] : memref<16x128xf32, #tpu.memory_space<vmem>>, vector<1x128xf32>
      %408 = vector.broadcast %407 : vector<1x128xf32> to vector<5x128xf32>
      %409 = arith.mulf %406, %408 : vector<5x128xf32>
      %410 = arith.addf %405, %409 : vector<5x128xf32>
      %c3_280 = arith.constant 3 : index
      %c0_281 = arith.constant 0 : index
      %411 = tpu.strided_load %arg13[%c3_280, %c0_281] {strides = array<i32: 8, 1>} : memref<56x128xf32, #tpu.memory_space<vmem>>, vector<5x128xf32>
      %c2_282 = arith.constant 2 : index
      %c0_283 = arith.constant 0 : index
      %412 = vector.load %arg5[%c2_282, %c0_283] : memref<16x128xf32, #tpu.memory_space<vmem>>, vector<1x128xf32>
      %413 = vector.broadcast %412 : vector<1x128xf32> to vector<5x128xf32>
      %414 = arith.mulf %411, %413 : vector<5x128xf32>
      %415 = arith.addf %410, %414 : vector<5x128xf32>
      %c4_284 = arith.constant 4 : index
      %c0_285 = arith.constant 0 : index
      %416 = tpu.strided_load %arg13[%c4_284, %c0_285] {strides = array<i32: 8, 1>} : memref<56x128xf32, #tpu.memory_space<vmem>>, vector<5x128xf32>
      %c3_286 = arith.constant 3 : index
      %c0_287 = arith.constant 0 : index
      %417 = vector.load %arg5[%c3_286, %c0_287] : memref<16x128xf32, #tpu.memory_space<vmem>>, vector<1x128xf32>
      %418 = vector.broadcast %417 : vector<1x128xf32> to vector<5x128xf32>
      %419 = arith.mulf %416, %418 : vector<5x128xf32>
      %420 = arith.addf %415, %419 : vector<5x128xf32>
      %c5_288 = arith.constant 5 : index
      %c0_289 = arith.constant 0 : index
      %421 = tpu.strided_load %arg13[%c5_288, %c0_289] {strides = array<i32: 8, 1>} : memref<56x128xf32, #tpu.memory_space<vmem>>, vector<5x128xf32>
      %c4_290 = arith.constant 4 : index
      %c0_291 = arith.constant 0 : index
      %422 = vector.load %arg5[%c4_290, %c0_291] : memref<16x128xf32, #tpu.memory_space<vmem>>, vector<1x128xf32>
      %423 = vector.broadcast %422 : vector<1x128xf32> to vector<5x128xf32>
      %424 = arith.mulf %421, %423 : vector<5x128xf32>
      %425 = arith.addf %420, %424 : vector<5x128xf32>
      %c6_292 = arith.constant 6 : index
      %c0_293 = arith.constant 0 : index
      %426 = tpu.strided_load %arg13[%c6_292, %c0_293] {strides = array<i32: 8, 1>} : memref<56x128xf32, #tpu.memory_space<vmem>>, vector<5x128xf32>
      %c5_294 = arith.constant 5 : index
      %c0_295 = arith.constant 0 : index
      %427 = vector.load %arg5[%c5_294, %c0_295] : memref<16x128xf32, #tpu.memory_space<vmem>>, vector<1x128xf32>
      %428 = vector.broadcast %427 : vector<1x128xf32> to vector<5x128xf32>
      %429 = arith.mulf %426, %428 : vector<5x128xf32>
      %430 = arith.addf %425, %429 : vector<5x128xf32>
      %c7_296 = arith.constant 7 : index
      %c0_297 = arith.constant 0 : index
      %431 = tpu.strided_load %arg13[%c7_296, %c0_297] {strides = array<i32: 8, 1>} : memref<56x128xf32, #tpu.memory_space<vmem>>, vector<5x128xf32>
      %c6_298 = arith.constant 6 : index
      %c0_299 = arith.constant 0 : index
      %432 = vector.load %arg5[%c6_298, %c0_299] : memref<16x128xf32, #tpu.memory_space<vmem>>, vector<1x128xf32>
      %433 = vector.broadcast %432 : vector<1x128xf32> to vector<5x128xf32>
      %434 = arith.mulf %431, %433 : vector<5x128xf32>
      %435 = arith.addf %430, %434 : vector<5x128xf32>
      %c8_300 = arith.constant 8 : index
      %c0_301 = arith.constant 0 : index
      %436 = tpu.strided_load %arg13[%c8_300, %c0_301] {strides = array<i32: 8, 1>} : memref<56x128xf32, #tpu.memory_space<vmem>>, vector<5x128xf32>
      %c7_302 = arith.constant 7 : index
      %c0_303 = arith.constant 0 : index
      %437 = vector.load %arg5[%c7_302, %c0_303] : memref<16x128xf32, #tpu.memory_space<vmem>>, vector<1x128xf32>
      %438 = vector.broadcast %437 : vector<1x128xf32> to vector<5x128xf32>
      %439 = arith.mulf %436, %438 : vector<5x128xf32>
      %440 = arith.addf %435, %439 : vector<5x128xf32>
      %c9_304 = arith.constant 9 : index
      %c0_305 = arith.constant 0 : index
      %441 = tpu.strided_load %arg13[%c9_304, %c0_305] {strides = array<i32: 8, 1>} : memref<56x128xf32, #tpu.memory_space<vmem>>, vector<5x128xf32>
      %c8_306 = arith.constant 8 : index
      %c0_307 = arith.constant 0 : index
      %442 = vector.load %arg5[%c8_306, %c0_307] : memref<16x128xf32, #tpu.memory_space<vmem>>, vector<1x128xf32>
      %443 = vector.broadcast %442 : vector<1x128xf32> to vector<5x128xf32>
      %444 = arith.mulf %441, %443 : vector<5x128xf32>
      %445 = arith.addf %440, %444 : vector<5x128xf32>
      %c10_308 = arith.constant 10 : index
      %c0_309 = arith.constant 0 : index
      %446 = tpu.strided_load %arg13[%c10_308, %c0_309] {strides = array<i32: 8, 1>} : memref<56x128xf32, #tpu.memory_space<vmem>>, vector<5x128xf32>
      %c9_310 = arith.constant 9 : index
      %c0_311 = arith.constant 0 : index
      %447 = vector.load %arg5[%c9_310, %c0_311] : memref<16x128xf32, #tpu.memory_space<vmem>>, vector<1x128xf32>
      %448 = vector.broadcast %447 : vector<1x128xf32> to vector<5x128xf32>
      %449 = arith.mulf %446, %448 : vector<5x128xf32>
      %450 = arith.addf %445, %449 : vector<5x128xf32>
      %c11_312 = arith.constant 11 : index
      %c0_313 = arith.constant 0 : index
      %451 = tpu.strided_load %arg13[%c11_312, %c0_313] {strides = array<i32: 8, 1>} : memref<56x128xf32, #tpu.memory_space<vmem>>, vector<5x128xf32>
      %c10_314 = arith.constant 10 : index
      %c0_315 = arith.constant 0 : index
      %452 = vector.load %arg5[%c10_314, %c0_315] : memref<16x128xf32, #tpu.memory_space<vmem>>, vector<1x128xf32>
      %453 = vector.broadcast %452 : vector<1x128xf32> to vector<5x128xf32>
      %454 = arith.mulf %451, %453 : vector<5x128xf32>
      %455 = arith.addf %450, %454 : vector<5x128xf32>
      %c12_316 = arith.constant 12 : index
      %c0_317 = arith.constant 0 : index
      %456 = tpu.strided_load %arg13[%c12_316, %c0_317] {strides = array<i32: 8, 1>} : memref<56x128xf32, #tpu.memory_space<vmem>>, vector<5x128xf32>
      %c11_318 = arith.constant 11 : index
      %c0_319 = arith.constant 0 : index
      %457 = vector.load %arg5[%c11_318, %c0_319] : memref<16x128xf32, #tpu.memory_space<vmem>>, vector<1x128xf32>
      %458 = vector.broadcast %457 : vector<1x128xf32> to vector<5x128xf32>
      %459 = arith.mulf %456, %458 : vector<5x128xf32>
      %460 = arith.addf %455, %459 : vector<5x128xf32>
      %c13_320 = arith.constant 13 : index
      %c0_321 = arith.constant 0 : index
      %461 = tpu.strided_load %arg13[%c13_320, %c0_321] {strides = array<i32: 8, 1>} : memref<56x128xf32, #tpu.memory_space<vmem>>, vector<5x128xf32>
      %c12_322 = arith.constant 12 : index
      %c0_323 = arith.constant 0 : index
      %462 = vector.load %arg5[%c12_322, %c0_323] : memref<16x128xf32, #tpu.memory_space<vmem>>, vector<1x128xf32>
      %463 = vector.broadcast %462 : vector<1x128xf32> to vector<5x128xf32>
      %464 = arith.mulf %461, %463 : vector<5x128xf32>
      %465 = arith.addf %460, %464 : vector<5x128xf32>
      %c14_324 = arith.constant 14 : index
      %c0_325 = arith.constant 0 : index
      %466 = tpu.strided_load %arg13[%c14_324, %c0_325] {strides = array<i32: 8, 1>} : memref<56x128xf32, #tpu.memory_space<vmem>>, vector<5x128xf32>
      %c13_326 = arith.constant 13 : index
      %c0_327 = arith.constant 0 : index
      %467 = vector.load %arg5[%c13_326, %c0_327] : memref<16x128xf32, #tpu.memory_space<vmem>>, vector<1x128xf32>
      %468 = vector.broadcast %467 : vector<1x128xf32> to vector<5x128xf32>
      %469 = arith.mulf %466, %468 : vector<5x128xf32>
      %470 = arith.addf %465, %469 : vector<5x128xf32>
      %c15_328 = arith.constant 15 : index
      %c0_329 = arith.constant 0 : index
      %471 = tpu.strided_load %arg13[%c15_328, %c0_329] {strides = array<i32: 8, 1>} : memref<56x128xf32, #tpu.memory_space<vmem>>, vector<5x128xf32>
      %c14_330 = arith.constant 14 : index
      %c0_331 = arith.constant 0 : index
      %472 = vector.load %arg5[%c14_330, %c0_331] : memref<16x128xf32, #tpu.memory_space<vmem>>, vector<1x128xf32>
      %473 = vector.broadcast %472 : vector<1x128xf32> to vector<5x128xf32>
      %474 = arith.mulf %471, %473 : vector<5x128xf32>
      %475 = arith.addf %470, %474 : vector<5x128xf32>
      %c16_332 = arith.constant 16 : index
      %c0_333 = arith.constant 0 : index
      %476 = tpu.strided_load %arg13[%c16_332, %c0_333] {strides = array<i32: 8, 1>} : memref<56x128xf32, #tpu.memory_space<vmem>>, vector<5x128xf32>
      %c15_334 = arith.constant 15 : index
      %c0_335 = arith.constant 0 : index
      %477 = vector.load %arg5[%c15_334, %c0_335] : memref<16x128xf32, #tpu.memory_space<vmem>>, vector<1x128xf32>
      %478 = vector.broadcast %477 : vector<1x128xf32> to vector<5x128xf32>
      %479 = arith.mulf %476, %478 : vector<5x128xf32>
      %480 = arith.addf %475, %479 : vector<5x128xf32>
      %c0_336 = arith.constant 0 : index
      %c0_337 = arith.constant 0 : index
      %481 = vector.load %arg6[%c0_336, %c0_337] : memref<1x128xf32, #tpu.memory_space<vmem>>, vector<1x128xf32>
      %482 = vector.broadcast %481 : vector<1x128xf32> to vector<5x128xf32>
      %483 = arith.addf %480, %482 : vector<5x128xf32>
      %c8_i32 = arith.constant 8 : i32
      %484 = arith.muli %59, %c8_i32 : i32
      %485 = tpu.assume_multiple %484, 8 : i32
      %486 = arith.index_cast %485 : i32 to index
      %c0_338 = arith.constant 0 : index
      %487 = vector.load %arg14[%486, %c0_338] : memref<16x128xf32, #tpu.memory_space<vmem>>, vector<5x128xf32>
      tpu.vector_store %arg14[%486, %c0_338], %483 {strides = array<i32>} : memref<16x128xf32, #tpu.memory_space<vmem>>, vector<5x128xf32>,
    }
    %c2_i32_11 = arith.constant 2 : i32
    %c0_12 = arith.constant 0 : index
    %c0_13 = arith.constant 0 : index
    %11 = vector.load %arg14[%c0_12, %c0_13] : memref<16x128xf32, #tpu.memory_space<vmem>>, vector<16x128xf32>
    %c0_14 = arith.constant 0 : index
    %c0_15 = arith.constant 0 : index
    %12 = vector.load %arg7[%c0_14, %c0_15] : memref<128x128xf32, #tpu.memory_space<vmem>>, vector<128x128xf32>
    %cst_16 = arith.constant dense<0.000000e+00> : vector<16x128xf32>
    %13 = tpu.matmul %11, %12, %cst_16 {dimension_numbers = #tpu.dot_dimension_numbers<[1], [0], [0], [1], [0, 0, 1, 1], [], []>} : vector<16x128xf32>, vector<128x128xf32>, vector<16x128xf32> -> vector<16x128xf32>
    %c0_17 = arith.constant 0 : index
    %c0_18 = arith.constant 0 : index
    %14 = vector.load %arg8[%c0_17, %c0_18] : memref<1x128xf32, #tpu.memory_space<vmem>>, vector<1x128xf32>
    %15 = vector.broadcast %14 : vector<1x128xf32> to vector<16x128xf32>
    %16 = arith.addf %13, %15 : vector<16x128xf32>
    %cst_19 = arith.constant 0.000000e+00 : f32
    %17 = vector.broadcast %cst_19 : f32 to vector<16x128xf32>
    %18 = arith.cmpf ogt, %16, %17 : vector<16x128xf32>
    %cst_20 = arith.constant 0.000000e+00 : f32
    %19 = vector.broadcast %cst_20 : f32 to vector<16x128xf32>
    %20 = arith.minimumf %16, %19 : vector<16x128xf32>
    %21 = math.exp %20 : vector<16x128xf32>
    %cst_21 = arith.constant 1.000000e+00 : f32
    %22 = vector.broadcast %cst_21 : f32 to vector<16x128xf32>
    %23 = arith.subf %21, %22 : vector<16x128xf32>
    %24 = arith.select %18, %16, %23 : vector<16x128xi1>, vector<16x128xf32>
    %c0_22 = arith.constant 0 : index
    %c0_23 = arith.constant 0 : index
    %25 = vector.load %arg15[%c0_22, %c0_23] : memref<24x128xf32, #tpu.memory_space<vmem>>, vector<16x128xf32>
    tpu.vector_store %arg15[%c0_22, %c0_23], %24 {strides = array<i32>} : memref<24x128xf32, #tpu.memory_space<vmem>>, vector<16x128xf32>,
    %cst_24 = arith.constant 0.000000e+00 : f32
    %26 = vector.broadcast %cst_24 : f32 to vector<2x128xf32>
    %c0_25 = arith.constant 0 : index
    %c0_26 = arith.constant 0 : index
    %27 = tpu.strided_load %arg15[%c0_25, %c0_26] {strides = array<i32: 8, 1>} : memref<24x128xf32, #tpu.memory_space<vmem>>, vector<2x128xf32>
    %c0_27 = arith.constant 0 : index
    %c0_28 = arith.constant 0 : index
    %c0_29 = arith.constant 0 : index
    %28 = vector.load %arg9[%c0_27, %c0_28, %c0_29] : memref<5x128x128xf32, #tpu.memory_space<vmem>>, vector<1x128x128xf32>
    %29 = vector.shape_cast %28 : vector<1x128x128xf32> to vector<128x128xf32>
    %cst_30 = arith.constant dense<0.000000e+00> : vector<2x128xf32>
    %30 = tpu.matmul %27, %29, %cst_30 {dimension_numbers = #tpu.dot_dimension_numbers<[1], [0], [0], [1], [0, 0, 1, 1], [], []>} : vector<2x128xf32>, vector<128x128xf32>, vector<2x128xf32> -> vector<2x128xf32>
    %31 = arith.addf %26, %30 : vector<2x128xf32>
    %c1 = arith.constant 1 : index
    %c0_31 = arith.constant 0 : index
    %32 = tpu.strided_load %arg15[%c1, %c0_31] {strides = array<i32: 8, 1>} : memref<24x128xf32, #tpu.memory_space<vmem>>, vector<2x128xf32>
    %c1_32 = arith.constant 1 : index
    %c0_33 = arith.constant 0 : index
    %c0_34 = arith.constant 0 : index
    %33 = vector.load %arg9[%c1_32, %c0_33, %c0_34] : memref<5x128x128xf32, #tpu.memory_space<vmem>>, vector<1x128x128xf32>
    %34 = vector.shape_cast %33 : vector<1x128x128xf32> to vector<128x128xf32>
    %cst_35 = arith.constant dense<0.000000e+00> : vector<2x128xf32>
    %35 = tpu.matmul %32, %34, %cst_35 {dimension_numbers = #tpu.dot_dimension_numbers<[1], [0], [0], [1], [0, 0, 1, 1], [], []>} : vector<2x128xf32>, vector<128x128xf32>, vector<2x128xf32> -> vector<2x128xf32>
    %36 = arith.addf %31, %35 : vector<2x128xf32>
    %c2 = arith.constant 2 : index
    %c0_36 = arith.constant 0 : index
    %37 = tpu.strided_load %arg15[%c2, %c0_36] {strides = array<i32: 8, 1>} : memref<24x128xf32, #tpu.memory_space<vmem>>, vector<2x128xf32>
    %c2_37 = arith.constant 2 : index
    %c0_38 = arith.constant 0 : index
    %c0_39 = arith.constant 0 : index
    %38 = vector.load %arg9[%c2_37, %c0_38, %c0_39] : memref<5x128x128xf32, #tpu.memory_space<vmem>>, vector<1x128x128xf32>
    %39 = vector.shape_cast %38 : vector<1x128x128xf32> to vector<128x128xf32>
    %cst_40 = arith.constant dense<0.000000e+00> : vector<2x128xf32>
    %40 = tpu.matmul %37, %39, %cst_40 {dimension_numbers = #tpu.dot_dimension_numbers<[1], [0], [0], [1], [0, 0, 1, 1], [], []>} : vector<2x128xf32>, vector<128x128xf32>, vector<2x128xf32> -> vector<2x128xf32>
    %41 = arith.addf %36, %40 : vector<2x128xf32>
    %c3 = arith.constant 3 : index
    %c0_41 = arith.constant 0 : index
    %42 = tpu.strided_load %arg15[%c3, %c0_41] {strides = array<i32: 8, 1>} : memref<24x128xf32, #tpu.memory_space<vmem>>, vector<2x128xf32>
    %c3_42 = arith.constant 3 : index
    %c0_43 = arith.constant 0 : index
    %c0_44 = arith.constant 0 : index
    %43 = vector.load %arg9[%c3_42, %c0_43, %c0_44] : memref<5x128x128xf32, #tpu.memory_space<vmem>>, vector<1x128x128xf32>
    %44 = vector.shape_cast %43 : vector<1x128x128xf32> to vector<128x128xf32>
    %cst_45 = arith.constant dense<0.000000e+00> : vector<2x128xf32>
    %45 = tpu.matmul %42, %44, %cst_45 {dimension_numbers = #tpu.dot_dimension_numbers<[1], [0], [0], [1], [0, 0, 1, 1], [], []>} : vector<2x128xf32>, vector<128x128xf32>, vector<2x128xf32> -> vector<2x128xf32>
    %46 = arith.addf %41, %45 : vector<2x128xf32>
    %c4 = arith.constant 4 : index
    %c0_46 = arith.constant 0 : index
    %47 = tpu.strided_load %arg15[%c4, %c0_46] {strides = array<i32: 8, 1>} : memref<24x128xf32, #tpu.memory_space<vmem>>, vector<2x128xf32>
    %c4_47 = arith.constant 4 : index
    %c0_48 = arith.constant 0 : index
    %c0_49 = arith.constant 0 : index
    %48 = vector.load %arg9[%c4_47, %c0_48, %c0_49] : memref<5x128x128xf32, #tpu.memory_space<vmem>>, vector<1x128x128xf32>
    %49 = vector.shape_cast %48 : vector<1x128x128xf32> to vector<128x128xf32>
    %cst_50 = arith.constant dense<0.000000e+00> : vector<2x128xf32>
    %50 = tpu.matmul %47, %49, %cst_50 {dimension_numbers = #tpu.dot_dimension_numbers<[1], [0], [0], [1], [0, 0, 1, 1], [], []>} : vector<2x128xf32>, vector<128x128xf32>, vector<2x128xf32> -> vector<2x128xf32>
    %51 = arith.addf %46, %50 : vector<2x128xf32>
    %c0_51 = arith.constant 0 : index
    %c0_52 = arith.constant 0 : index
    %52 = vector.load %arg10[%c0_51, %c0_52] : memref<1x128xf32, #tpu.memory_space<vmem>>, vector<1x128xf32>
    %53 = vector.broadcast %52 : vector<1x128xf32> to vector<2x128xf32>
    %54 = arith.addf %51, %53 : vector<2x128xf32>
    %c0_53 = arith.constant 0 : index
    %c0_54 = arith.constant 0 : index
    %c0_55 = arith.constant 0 : index
    %55 = vector.load %arg11[%c0_53, %c0_54, %c0_55] : memref<1x2x128xf32, #tpu.memory_space<vmem>>, vector<1x2x128xf32>
    %56 = vector.shape_cast %55 : vector<1x2x128xf32> to vector<2x128xf32>
    %57 = vector.shape_cast %54 : vector<2x128xf32> to vector<1x2x128xf32>
    tpu.vector_store %arg11[%c0_53, %c0_54, %c0_55], %57 {strides = array<i32>} : memref<1x2x128xf32, #tpu.memory_space<vmem>>, vector<1x2x128xf32>,
    return
  }
  func.func @transform_0(%arg0: i32) -> (i32, i32, i32, i32) {
    %c0_i32 = arith.constant 0 : i32
    %c0_i32_0 = arith.constant 0 : i32
    %c0_i32_1 = arith.constant 0 : i32
    %c0_i32_2 = arith.constant 0 : i32
    return %arg0, %c0_i32, %c0_i32_0, %c0_i32_1 : i32, i32, i32, i32
  }
  func.func @transform_1(%arg0: i32) -> (i32, i32) {
    %c0_i32 = arith.constant 0 : i32
    %c0_i32_0 = arith.constant 0 : i32
    %c0_i32_1 = arith.constant 0 : i32
    return %c0_i32, %c0_i32_0 : i32, i32
  }
  func.func @transform_2(%arg0: i32) -> (i32, i32) {
    %c0_i32 = arith.constant 0 : i32
    %c0_i32_0 = arith.constant 0 : i32
    %c0_i32_1 = arith.constant 0 : i32
    return %c0_i32, %c0_i32_0 : i32, i32
  }
  func.func @transform_3(%arg0: i32) -> (i32, i32) {
    %c0_i32 = arith.constant 0 : i32
    %c0_i32_0 = arith.constant 0 : i32
    %c0_i32_1 = arith.constant 0 : i32
    return %c0_i32, %c0_i32_0 : i32, i32
  }
  func.func @transform_4(%arg0: i32) -> (i32, i32) {
    %c0_i32 = arith.constant 0 : i32
    %c0_i32_0 = arith.constant 0 : i32
    %c0_i32_1 = arith.constant 0 : i32
    return %c0_i32, %c0_i32_0 : i32, i32
  }
  func.func @transform_5(%arg0: i32) -> (i32, i32) {
    %c0_i32 = arith.constant 0 : i32
    %c0_i32_0 = arith.constant 0 : i32
    %c0_i32_1 = arith.constant 0 : i32
    return %c0_i32, %c0_i32_0 : i32, i32
  }
  func.func @transform_6(%arg0: i32) -> (i32, i32) {
    %c0_i32 = arith.constant 0 : i32
    %c0_i32_0 = arith.constant 0 : i32
    %c0_i32_1 = arith.constant 0 : i32
    return %c0_i32, %c0_i32_0 : i32, i32
  }
  func.func @transform_7(%arg0: i32) -> (i32, i32) {
    %c0_i32 = arith.constant 0 : i32
    %c0_i32_0 = arith.constant 0 : i32
    %c0_i32_1 = arith.constant 0 : i32
    return %c0_i32, %c0_i32_0 : i32, i32
  }
  func.func @transform_8(%arg0: i32) -> (i32, i32, i32) {
    %c0_i32 = arith.constant 0 : i32
    %c0_i32_0 = arith.constant 0 : i32
    %c0_i32_1 = arith.constant 0 : i32
    %c0_i32_2 = arith.constant 0 : i32
    return %c0_i32, %c0_i32_0, %c0_i32_1 : i32, i32, i32
  }
  func.func @transform_9(%arg0: i32) -> (i32, i32) {
    %c0_i32 = arith.constant 0 : i32
    %c0_i32_0 = arith.constant 0 : i32
    %c0_i32_1 = arith.constant 0 : i32
    return %c0_i32, %c0_i32_0 : i32, i32
  }
  func.func @transform_10(%arg0: i32) -> (i32, i32, i32) {
    %c0_i32 = arith.constant 0 : i32
    %c0_i32_0 = arith.constant 0 : i32
    %c0_i32_1 = arith.constant 0 : i32
    return %arg0, %c0_i32, %c0_i32_0 : i32, i32, i32
  }
}

</mosaic_0001>

<llo_original>
// kernel: tile.38
$region0: #{tile.38}
  #allocation0 [shape = 's32[1]{0}', space=sflag, size = 0x4, scoped, tag = 'scoped memory for tile.38']
  %s0 = inlined_call_operand.vmem [shape: f32[16], index: 0, kind: input, shape index: {}]
  %s1 = inlined_call_operand.vmem [shape: f32[8,16], index: 1, kind: output, shape index: {}]
  // Predicated region
  $region2: #{tile.38} parent=0 // pred_check
    _
  $region3: #{tile.38} parent=0 // pred_check_branch
    %3 = sbr.rel (0) target = $region5
  $region4: #{tile.38} parent=0 // pred_region
    _
  $region5: #{tile.38} parent=0 // pred_fallthru
    _
  %v4 = vld [vmem:[%s0] ss:$0 sm:$0xff]
  %5 = vst [vmem:[%s1] sm:$0xff] %v4

// kernel: tile.39
$region0: #{tile.39}
  %s0 = inlined_call_operand.vmem [shape: f32[8,16], index: 0, kind: input, shape index: {}]
  %s1 = inlined_call_operand.vmem [shape: f32[1,128], index: 1, kind: output, shape index: {}]
  $region1: #{tile.39} parent=0
    #allocation0 [shape = 'u8[4096]{0}', space=vmem, size = 0x1000, scoped, tag = 'scoped mem for output reshape']
    %v2 = vld [vmem:[%s0] sm:$0x1]
    %vm3 = vcmask 130048
    %4 = vst.msk [vmem:[#allocation0] sm:$0x1] %vm3, %v2
    %s5 = scalar_lea.vmem %s0, 7
    %v6 = vld [vmem:[%s5] sm:$0x1]
    %7 = vrot.lane.b32.xlu0 %v6, 112
    %v8 = vpop.permute.xlu0 %7
    %vm9 = vcmask 1048448
    %10 = vst.msk [vmem:[#allocation0] sm:$0x1] %vm9, %v8
    %s11 = scalar_lea.vmem %s0, 6
    %v12 = vld [vmem:[%s11] sm:$0x1]
    %13 = vrot.lane.b32.xlu0 %v12, 96
    %v14 = vpop.permute.xlu0 %13
    %vm15 = vcmask 917248
    %16 = vst.msk [vmem:[#allocation0] sm:$0x1] %vm15, %v14
    %s17 = scalar_lea.vmem %s0, 5
    %v18 = vld [vmem:[%s17] sm:$0x1]
    %19 = vrot.lane.b32.xlu0 %v18, 80
    %v20 = vpop.permute.xlu0 %19
    %vm21 = vcmask 786048
    %22 = vst.msk [vmem:[#allocation0] sm:$0x1] %vm21, %v20
    %s23 = scalar_lea.vmem %s0, 4
    %v24 = vld [vmem:[%s23] sm:$0x1]
    %25 = vrot.lane.b32.xlu0 %v24, 64
    %v26 = vpop.permute.xlu0 %25
    %vm27 = vcmask 654848
    %28 = vst.msk [vmem:[#allocation0] sm:$0x1] %vm27, %v26
    %s29 = scalar_lea.vmem %s0, 3
    %v30 = vld [vmem:[%s29] sm:$0x1]
    %31 = vrot.lane.b32.xlu0 %v30, 48
    %v32 = vpop.permute.xlu0 %31
    %vm33 = vcmask 523648
    %34 = vst.msk [vmem:[#allocation0] sm:$0x1] %vm33, %v32
    %s35 = scalar_lea.vmem %s0, 2
    %v36 = vld [vmem:[%s35] sm:$0x1]
    %37 = vrot.lane.b32.xlu0 %v36, 32
    %v38 = vpop.permute.xlu0 %37
    %vm39 = vcmask 392448
    %40 = vst.msk [vmem:[#allocation0] sm:$0x1] %vm39, %v38
    %s41 = scalar_lea.vmem %s0, 1
    %v42 = vld [vmem:[%s41] sm:$0x1]
    %43 = vrot.lane.b32.xlu0 %v42, 16
    %v44 = vpop.permute.xlu0 %43
    %vm45 = vcmask 261248
    %46 = vst.msk [vmem:[#allocation0] sm:$0x1] %vm45, %v44
    %s48 = sshll.u32 1, 1
    %s49 = ssub.s32 %s48, 1
    %v51 = vld [vmem:[#allocation0] sm:%s49]
    %s52 = sshll.u32 1, 1
    %s53 = ssub.s32 %s52, 1
    %54 = vst [vmem:[%s1] sm:%s53] %v51

// kernel: tile.44
$region0: #{tile.44}
  %s0 = inlined_call_operand.vmem [shape: f32[16,8,16], index: 0, kind: input, shape index: {}]
  %s1 = inlined_call_operand.vmem [shape: f32[16,128], index: 1, kind: output, shape index: {}]
  %v2 = vld [vmem:[%s0] ss:$8 sm:$0xf]
  %v3 = vld [vmem:[%s0] ss:$8 sm:$0xf0]
  %vm4 = vcmask 1047556
  %v5 = vsel %vm4, %v3, %v2
  %vm6 = vcmask 130048
  %7 = vst.msk [vmem:[%s1] sm:$0xff] %vm6, %v5
  %s8 = scalar_lea.vmem %s0, 64
  %v9 = vld [vmem:[%s8] ss:$8 sm:$0xf]
  %s10 = scalar_lea.vmem %s0, 64
  %v11 = vld [vmem:[%s10] ss:$8 sm:$0xf0]
  %vm12 = vcmask 1047556
  %v13 = vsel %vm12, %v11, %v9
  %vm14 = vcmask 130048
  %s15 = scalar_lea.vmem %s1, 8
  %16 = vst.msk [vmem:[%s15] sm:$0xff] %vm14, %v13
  %s17 = scalar_lea.vmem %s0, 7
  %v18 = vld [vmem:[%s17] ss:$8 sm:$0xf]
  %s19 = scalar_lea.vmem %s0, 7
  %v20 = vld [vmem:[%s19] ss:$8 sm:$0xf0]
  %vm21 = vcmask 1047556
  %v22 = vsel %vm21, %v20, %v18
  %23 = vrot.lane.b32.xlu0 %v22, 112
  %v24 = vpop.permute.xlu0 %23
  %vm25 = vcmask 1048448
  %26 = vst.msk [vmem:[%s1] sm:$0xff] %vm25, %v24
  %s27 = scalar_lea.vmem %s0, 71
  %v28 = vld [vmem:[%s27] ss:$8 sm:$0xf]
  %s29 = scalar_lea.vmem %s0, 71
  %v30 = vld [vmem:[%s29] ss:$8 sm:$0xf0]
  %vm31 = vcmask 1047556
  %v32 = vsel %vm31, %v30, %v28
  %33 = vrot.lane.b32.xlu0 %v32, 112
  %v34 = vpop.permute.xlu0 %33
  %vm35 = vcmask 1048448
  %s36 = scalar_lea.vmem %s1, 8
  %37 = vst.msk [vmem:[%s36] sm:$0xff] %vm35, %v34
  %s38 = scalar_lea.vmem %s0, 6
  %v39 = vld [vmem:[%s38] ss:$8 sm:$0xf]
  %s40 = scalar_lea.vmem %s0, 6
  %v41 = vld [vmem:[%s40] ss:$8 sm:$0xf0]
  %vm42 = vcmask 1047556
  %v43 = vsel %vm42, %v41, %v39
  %44 = vrot.lane.b32.xlu0 %v43, 96
  %v45 = vpop.permute.xlu0 %44
  %vm46 = vcmask 917248
  %47 = vst.msk [vmem:[%s1] sm:$0xff] %vm46, %v45
  %s48 = scalar_lea.vmem %s0, 70
  %v49 = vld [vmem:[%s48] ss:$8 sm:$0xf]
  %s50 = scalar_lea.vmem %s0, 70
  %v51 = vld [vmem:[%s50] ss:$8 sm:$0xf0]
  %vm52 = vcmask 1047556
  %v53 = vsel %vm52, %v51, %v49
  %54 = vrot.lane.b32.xlu0 %v53, 96
  %v55 = vpop.permute.xlu0 %54
  %vm56 = vcmask 917248
  %s57 = scalar_lea.vmem %s1, 8
  %58 = vst.msk [vmem:[%s57] sm:$0xff] %vm56, %v55
  %s59 = scalar_lea.vmem %s0, 5
  %v60 = vld [vmem:[%s59] ss:$8 sm:$0xf]
  %s61 = scalar_lea.vmem %s0, 5
  %v62 = vld [vmem:[%s61] ss:$8 sm:$0xf0]
  %vm63 = vcmask 1047556
  %v64 = vsel %vm63, %v62, %v60
  %65 = vrot.lane.b32.xlu0 %v64, 80
  %v66 = vpop.permute.xlu0 %65
  %vm67 = vcmask 786048
  %68 = vst.msk [vmem:[%s1] sm:$0xff] %vm67, %v66
  %s69 = scalar_lea.vmem %s0, 69
  %v70 = vld [vmem:[%s69] ss:$8 sm:$0xf]
  %s71 = scalar_lea.vmem %s0, 69
  %v72 = vld [vmem:[%s71] ss:$8 sm:$0xf0]
  %vm73 = vcmask 1047556
  %v74 = vsel %vm73, %v72, %v70
  %75 = vrot.lane.b32.xlu0 %v74, 80
  %v76 = vpop.permute.xlu0 %75
  %vm77 = vcmask 786048
  %s78 = scalar_lea.vmem %s1, 8
  %79 = vst.msk [vmem:[%s78] sm:$0xff] %vm77, %v76
  %s80 = scalar_lea.vmem %s0, 4
  %v81 = vld [vmem:[%s80] ss:$8 sm:$0xf]
  %s82 = scalar_lea.vmem %s0, 4
  %v83 = vld [vmem:[%s82] ss:$8 sm:$0xf0]
  %vm84 = vcmask 1047556
  %v85 = vsel %vm84, %v83, %v81
  %86 = vrot.lane.b32.xlu0 %v85, 64
  %v87 = vpop.permute.xlu0 %86
  %vm88 = vcmask 654848
  %89 = vst.msk [vmem:[%s1] sm:$0xff] %vm88, %v87
  %s90 = scalar_lea.vmem %s0, 68
  %v91 = vld [vmem:[%s90] ss:$8 sm:$0xf]
  %s92 = scalar_lea.vmem %s0, 68
  %v93 = vld [vmem:[%s92] ss:$8 sm:$0xf0]
  %vm94 = vcmask 1047556
  %v95 = vsel %vm94, %v93, %v91
  %96 = vrot.lane.b32.xlu0 %v95, 64
  %v97 = vpop.permute.xlu0 %96
  %vm98 = vcmask 654848
  %s99 = scalar_lea.vmem %s1, 8
  %100 = vst.msk [vmem:[%s99] sm:$0xff] %vm98, %v97
  %s101 = scalar_lea.vmem %s0, 3
  %v102 = vld [vmem:[%s101] ss:$8 sm:$0xf]
  %s103 = scalar_lea.vmem %s0, 3
  %v104 = vld [vmem:[%s103] ss:$8 sm:$0xf0]
  %vm105 = vcmask 1047556
  %v106 = vsel %vm105, %v104, %v102
  %107 = vrot.lane.b32.xlu0 %v106, 48
  %v108 = vpop.permute.xlu0 %107
  %vm109 = vcmask 523648
  %110 = vst.msk [vmem:[%s1] sm:$0xff] %vm109, %v108
  %s111 = scalar_lea.vmem %s0, 67
  %v112 = vld [vmem:[%s111] ss:$8 sm:$0xf]
  %s113 = scalar_lea.vmem %s0, 67
  %v114 = vld [vmem:[%s113] ss:$8 sm:$0xf0]
  %vm115 = vcmask 1047556
  %v116 = vsel %vm115, %v114, %v112
  %117 = vrot.lane.b32.xlu0 %v116, 48
  %v118 = vpop.permute.xlu0 %117
  %vm119 = vcmask 523648
  %s120 = scalar_lea.vmem %s1, 8
  %121 = vst.msk [vmem:[%s120] sm:$0xff] %vm119, %v118
  %s122 = scalar_lea.vmem %s0, 2
  %v123 = vld [vmem:[%s122] ss:$8 sm:$0xf]
  %s124 = scalar_lea.vmem %s0, 2
  %v125 = vld [vmem:[%s124] ss:$8 sm:$0xf0]
  %vm126 = vcmask 1047556
  %v127 = vsel %vm126, %v125, %v123
  %128 = vrot.lane.b32.xlu0 %v127, 32
  %v129 = vpop.permute.xlu0 %128
  %vm130 = vcmask 392448
  %131 = vst.msk [vmem:[%s1] sm:$0xff] %vm130, %v129
  %s132 = scalar_lea.vmem %s0, 66
  %v133 = vld [vmem:[%s132] ss:$8 sm:$0xf]
  %s134 = scalar_lea.vmem %s0, 66
  %v135 = vld [vmem:[%s134] ss:$8 sm:$0xf0]
  %vm136 = vcmask 1047556
  %v137 = vsel %vm136, %v135, %v133
  %138 = vrot.lane.b32.xlu0 %v137, 32
  %v139 = vpop.permute.xlu0 %138
  %vm140 = vcmask 392448
  %s141 = scalar_lea.vmem %s1, 8
  %142 = vst.msk [vmem:[%s141] sm:$0xff] %vm140, %v139
  %s143 = scalar_lea.vmem %s0, 1
  %v144 = vld [vmem:[%s143] ss:$8 sm:$0xf]
  %s145 = scalar_lea.vmem %s0, 1
  %v146 = vld [vmem:[%s145] ss:$8 sm:$0xf0]
  %vm147 = vcmask 1047556
  %v148 = vsel %vm147, %v146, %v144
  %149 = vrot.lane.b32.xlu0 %v148, 16
  %v150 = vpop.permute.xlu0 %149
  %vm151 = vcmask 261248
  %152 = vst.msk [vmem:[%s1] sm:$0xff] %vm151, %v150
  %s153 = scalar_lea.vmem %s0, 65
  %v154 = vld [vmem:[%s153] ss:$8 sm:$0xf]
  %s155 = scalar_lea.vmem %s0, 65
  %v156 = vld [vmem:[%s155] ss:$8 sm:$0xf0]
  %vm157 = vcmask 1047556
  %v158 = vsel %vm157, %v156, %v154
  %159 = vrot.lane.b32.xlu0 %v158, 16
  %v160 = vpop.permute.xlu0 %159
  %vm161 = vcmask 261248
  %s162 = scalar_lea.vmem %s1, 8
  %163 = vst.msk [vmem:[%s162] sm:$0xff] %vm161, %v160

// kernel: eegnet_forward.1
$region0: #{eegnet_forward.1}
  #allocation0 [shape = 'u32[]', space=smem, size = 0x4, offset = 0x4, fixed_abs, tag = 'smem constant byte address 0x4 - core index']
  #allocation1 [shape = 'u32[144,128]{1,0:T(1,128)}', space=vmem, size = 0x12000, scoped, tag = 'internal scratch']
  #allocation2 [shape = 'f32[224,128]{1,0:T(8,128)}', space=vmem, size = 0x1c000, scoped, tag = 'scratch operand']
  #allocation3 [shape = 'f32[56,128]{1,0:T(8,128)}', space=vmem, size = 0x7000, scoped, tag = 'scratch operand']
  #allocation4 [shape = 'f32[16,128]{1,0:T(8,128)}', space=vmem, size = 0x2000, scoped, tag = 'scratch operand']
  #allocation5 [shape = 'f32[24,128]{1,0:T(8,128)}', space=vmem, size = 0x3000, scoped, tag = 'scratch operand']
  %s0 = inlined_call_operand.vmem [shape: bf16[2,2,160,512], index: 0, kind: input, shape index: {}]
  %s1 = inlined_call_operand.vmem [shape: f32[512,128], index: 1, kind: input, shape index: {}]
  %s2 = inlined_call_operand.vmem [shape: f32[64,128], index: 2, kind: input, shape index: {}]
  %s3 = inlined_call_operand.vmem [shape: f32[1,128], index: 3, kind: input, shape index: {}]
  %s4 = inlined_call_operand.vmem [shape: f32[16,128], index: 4, kind: input, shape index: {}]
  %s5 = inlined_call_operand.vmem [shape: f32[1,128], index: 5, kind: input, shape index: {}]
  %s6 = inlined_call_operand.vmem [shape: f32[128,128], index: 6, kind: input, shape index: {}]
  %s7 = inlined_call_operand.vmem [shape: f32[1,128], index: 7, kind: input, shape index: {}]
  %s8 = inlined_call_operand.vmem [shape: f32[5,128,128], index: 8, kind: input, shape index: {}]
  %s9 = inlined_call_operand.vmem [shape: f32[1,128], index: 9, kind: input, shape index: {}]
  %s10 = inlined_call_operand.vmem [shape: f32[2,2,128], index: 10, kind: output, shape index: {}]
  %s11 = sld [smem:[#allocation0]]
  $region80: #{eegnet_forward.1} parent=0
    _
  %s13 = ssub.s32 1, %s11
  %s14 = scalar_select 0, %s13, %s11
  loop: start=0, step=1, limit=4
  $region2: #{eegnet_forward.1} parent=0 // loop_pre_header
    _
  $region3: #{eegnet_forward.1} parent=0 // loop_header
    %s16 = sphi 0, %s20
    %p17 = scmp.ge.s32.totalorder %s16, 4
    %s26 = sphi 0, %s28
    %s29 = sphi 0, %s26
    %s30 = sphi 0, %s29
    %s46 = sphi 0, %s30
    %s50 = sphi 0, %s50
    %s52 = sphi 0, %s50
    %s53 = sphi 0, %s52
    %s67 = sphi 0, %s53
    %s71 = sphi 0, %s71
    %s73 = sphi 0, %s71
    %s74 = sphi 0, %s73
    %s88 = sphi 0, %s74
    %s92 = sphi 0, %s92
    %s94 = sphi 0, %s92
    %s95 = sphi 0, %s94
    %s109 = sphi 0, %s95
    %s113 = sphi 0, %s113
    %s115 = sphi 0, %s113
    %s116 = sphi 0, %s115
    %s130 = sphi 0, %s116
    %s134 = sphi 0, %s134
    %s136 = sphi 0, %s134
    %s137 = sphi 0, %s136
    %s151 = sphi 0, %s137
    %s155 = sphi 0, %s155
    %s157 = sphi 0, %s155
    %s158 = sphi 0, %s157
    %s172 = sphi 0, %s158
    %s176 = sphi 0, %s176
    %s178 = sphi 0, %s176
    %s179 = sphi 0, %s178
    %s193 = sphi 0, %s179
    %s197 = sphi 0, %s197
    %s199 = sphi 0, %s197
    %s200 = sphi 0, %s199
    %s214 = sphi 0, %s200
    %s218 = sphi 0, %s218
    %s220 = sphi 0, %s218
    %s221 = sphi 0, %s220
    %s235 = sphi 0, %s221
    %s241 = sphi 0, %s243
    %s244 = sphi 0, %s241
    %s245 = sphi 0, %s244
    %s261 = sphi 0, %s245
  $region4: #{eegnet_forward.1} parent=0 // loop_header_branch
    %19 = sbr.rel (%p17) target = $region8
  $region5: #{eegnet_forward.1} parent=0 // loop_body
    %s21 = ssub.s32 %s16, 1
    %s22 = ssub.s32 %s16, 2
    %s23 = sadd.s32 %s16, 1
    %s24 = ssub.s32 %s16, %s23
    %p25 = scmp.eq.s32.totalorder %s24, 0
    %s27 = sadd.s32 %s26, 1
    %s28 = scalar_select %p25, %s26, %s27
    %p31 = pneg %p25
    %p32 = scmp.eq.s32.totalorder %s16, 1
    %p33 = por %p31, %p32
    %p34 = scmp.ne.s32.totalorder %s26, %s29
    %p35 = scmp.eq.s32.totalorder %s16, 0
    %p36 = por %p34, %p35
    %p37 = scmp.ne.s32.totalorder %s26, %s29
    %p38 = scmp.eq.s32.totalorder %s21, 1
    %p39 = por %p37, %p38
    %p40 = scmp.ne.s32.totalorder %s29, %s30
    %p41 = scmp.eq.s32.totalorder %s21, 0
    %p42 = por %p40, %p41
    %p43 = scmp.ne.s32.totalorder %s29, %s30
    %p44 = scmp.eq.s32.totalorder %s22, 1
    %p45 = por %p43, %p44
    %p47 = scmp.ne.s32.totalorder %s30, %s46
    %p48 = scmp.eq.s32.totalorder %s22, 0
    %p49 = por %p47, %p48
    %s51 = sadd.s32 %s50, 1
    %p54 = scmp.eq.s32.totalorder %s16, 1
    %p55 = scmp.ne.s32.totalorder %s50, %s52
    %p56 = scmp.eq.s32.totalorder %s16, 0
    %p57 = por %p55, %p56
    %p58 = scmp.ne.s32.totalorder %s50, %s52
    %p59 = scmp.eq.s32.totalorder %s21, 1
    %p60 = por %p58, %p59
    %p61 = scmp.ne.s32.totalorder %s52, %s53
    %p62 = scmp.eq.s32.totalorder %s21, 0
    %p63 = por %p61, %p62
    %p64 = scmp.ne.s32.totalorder %s52, %s53
    %p65 = scmp.eq.s32.totalorder %s22, 1
    %p66 = por %p64, %p65
    %p68 = scmp.ne.s32.totalorder %s53, %s67
    %p69 = scmp.eq.s32.totalorder %s22, 0
    %p70 = por %p68, %p69
    %s72 = sadd.s32 %s71, 1
    %p75 = scmp.eq.s32.totalorder %s16, 1
    %p76 = scmp.ne.s32.totalorder %s71, %s73
    %p77 = scmp.eq.s32.totalorder %s16, 0
    %p78 = por %p76, %p77
    %p79 = scmp.ne.s32.totalorder %s71, %s73
    %p80 = scmp.eq.s32.totalorder %s21, 1
    %p81 = por %p79, %p80
    %p82 = scmp.ne.s32.totalorder %s73, %s74
    %p83 = scmp.eq.s32.totalorder %s21, 0
    %p84 = por %p82, %p83
    %p85 = scmp.ne.s32.totalorder %s73, %s74
    %p86 = scmp.eq.s32.totalorder %s22, 1
    %p87 = por %p85, %p86
    %p89 = scmp.ne.s32.totalorder %s74, %s88
    %p90 = scmp.eq.s32.totalorder %s22, 0
    %p91 = por %p89, %p90
    %s93 = sadd.s32 %s92, 1
    %p96 = scmp.eq.s32.totalorder %s16, 1
    %p97 = scmp.ne.s32.totalorder %s92, %s94
    %p98 = scmp.eq.s32.totalorder %s16, 0
    %p99 = por %p97, %p98
    %p100 = scmp.ne.s32.totalorder %s92, %s94
    %p101 = scmp.eq.s32.totalorder %s21, 1
    %p102 = por %p100, %p101
    %p103 = scmp.ne.s32.totalorder %s94, %s95
    %p104 = scmp.eq.s32.totalorder %s21, 0
    %p105 = por %p103, %p104
    %p106 = scmp.ne.s32.totalorder %s94, %s95
    %p107 = scmp.eq.s32.totalorder %s22, 1
    %p108 = por %p106, %p107
    %p110 = scmp.ne.s32.totalorder %s95, %s109
    %p111 = scmp.eq.s32.totalorder %s22, 0
    %p112 = por %p110, %p111
    %s114 = sadd.s32 %s113, 1
    %p117 = scmp.eq.s32.totalorder %s16, 1
    %p118 = scmp.ne.s32.totalorder %s113, %s115
    %p119 = scmp.eq.s32.totalorder %s16, 0
    %p120 = por %p118, %p119
    %p121 = scmp.ne.s32.totalorder %s113, %s115
    %p122 = scmp.eq.s32.totalorder %s21, 1
    %p123 = por %p121, %p122
    %p124 = scmp.ne.s32.totalorder %s115, %s116
    %p125 = scmp.eq.s32.totalorder %s21, 0
    %p126 = por %p124, %p125
    %p127 = scmp.ne.s32.totalorder %s115, %s116
    %p128 = scmp.eq.s32.totalorder %s22, 1
    %p129 = por %p127, %p128
    %p131 = scmp.ne.s32.totalorder %s116, %s130
    %p132 = scmp.eq.s32.totalorder %s22, 0
    %p133 = por %p131, %p132
    %s135 = sadd.s32 %s134, 1
    %p138 = scmp.eq.s32.totalorder %s16, 1
    %p139 = scmp.ne.s32.totalorder %s134, %s136
    %p140 = scmp.eq.s32.totalorder %s16, 0
    %p141 = por %p139, %p140
    %p142 = scmp.ne.s32.totalorder %s134, %s136
    %p143 = scmp.eq.s32.totalorder %s21, 1
    %p144 = por %p142, %p143
    %p145 = scmp.ne.s32.totalorder %s136, %s137
    %p146 = scmp.eq.s32.totalorder %s21, 0
    %p147 = por %p145, %p146
    %p148 = scmp.ne.s32.totalorder %s136, %s137
    %p149 = scmp.eq.s32.totalorder %s22, 1
    %p150 = por %p148, %p149
    %p152 = scmp.ne.s32.totalorder %s137, %s151
    %p153 = scmp.eq.s32.totalorder %s22, 0
    %p154 = por %p152, %p153
    %s156 = sadd.s32 %s155, 1
    %p159 = scmp.eq.s32.totalorder %s16, 1
    %p160 = scmp.ne.s32.totalorder %s155, %s157
    %p161 = scmp.eq.s32.totalorder %s16, 0
    %p162 = por %p160, %p161
    %p163 = scmp.ne.s32.totalorder %s155, %s157
    %p164 = scmp.eq.s32.totalorder %s21, 1
    %p165 = por %p163, %p164
    %p166 = scmp.ne.s32.totalorder %s157, %s158
    %p167 = scmp.eq.s32.totalorder %s21, 0
    %p168 = por %p166, %p167
    %p169 = scmp.ne.s32.totalorder %s157, %s158
    %p170 = scmp.eq.s32.totalorder %s22, 1
    %p171 = por %p169, %p170
    %p173 = scmp.ne.s32.totalorder %s158, %s172
    %p174 = scmp.eq.s32.totalorder %s22, 0
    %p175 = por %p173, %p174
    %s177 = sadd.s32 %s176, 1
    %p180 = scmp.eq.s32.totalorder %s16, 1
    %p181 = scmp.ne.s32.totalorder %s176, %s178
    %p182 = scmp.eq.s32.totalorder %s16, 0
    %p183 = por %p181, %p182
    %p184 = scmp.ne.s32.totalorder %s176, %s178
    %p185 = scmp.eq.s32.totalorder %s21, 1
    %p186 = por %p184, %p185
    %p187 = scmp.ne.s32.totalorder %s178, %s179
    %p188 = scmp.eq.s32.totalorder %s21, 0
    %p189 = por %p187, %p188
    %p190 = scmp.ne.s32.totalorder %s178, %s179
    %p191 = scmp.eq.s32.totalorder %s22, 1
    %p192 = por %p190, %p191
    %p194 = scmp.ne.s32.totalorder %s179, %s193
    %p195 = scmp.eq.s32.totalorder %s22, 0
    %p196 = por %p194, %p195
    %s198 = sadd.s32 %s197, 1
    %p201 = scmp.eq.s32.totalorder %s16, 1
    %p202 = scmp.ne.s32.totalorder %s197, %s199
    %p203 = scmp.eq.s32.totalorder %s16, 0
    %p204 = por %p202, %p203
    %p205 = scmp.ne.s32.totalorder %s197, %s199
    %p206 = scmp.eq.s32.totalorder %s21, 1
    %p207 = por %p205, %p206
    %p208 = scmp.ne.s32.totalorder %s199, %s200
    %p209 = scmp.eq.s32.totalorder %s21, 0
    %p210 = por %p208, %p209
    %p211 = scmp.ne.s32.totalorder %s199, %s200
    %p212 = scmp.eq.s32.totalorder %s22, 1
    %p213 = por %p211, %p212
    %p215 = scmp.ne.s32.totalorder %s200, %s214
    %p216 = scmp.eq.s32.totalorder %s22, 0
    %p217 = por %p215, %p216
    %s219 = sadd.s32 %s218, 1
    %p222 = scmp.eq.s32.totalorder %s16, 1
    %p223 = scmp.ne.s32.totalorder %s218, %s220
    %p224 = scmp.eq.s32.totalorder %s16, 0
    %p225 = por %p223, %p224
    %p226 = scmp.ne.s32.totalorder %s218, %s220
    %p227 = scmp.eq.s32.totalorder %s21, 1
    %p228 = por %p226, %p227
    %p229 = scmp.ne.s32.totalorder %s220, %s221
    %p230 = scmp.eq.s32.totalorder %s21, 0
    %p231 = por %p229, %p230
    %p232 = scmp.ne.s32.totalorder %s220, %s221
    %p233 = scmp.eq.s32.totalorder %s22, 1
    %p234 = por %p232, %p233
    %p236 = scmp.ne.s32.totalorder %s221, %s235
    %p237 = scmp.eq.s32.totalorder %s22, 0
    %p238 = por %p236, %p237
    %s239 = ssub.s32 %s16, %s23
    %p240 = scmp.eq.s32.totalorder %s239, 0
    %s242 = sadd.s32 %s241, 1
    %s243 = scalar_select %p240, %s241, %s242
    %p246 = pneg %p240
    %p247 = scmp.eq.s32.totalorder %s16, 1
    %p248 = por %p246, %p247
    %p249 = scmp.ne.s32.totalorder %s241, %s244
    %p250 = scmp.eq.s32.totalorder %s16, 0
    %p251 = por %p249, %p250
    %p252 = scmp.ne.s32.totalorder %s241, %s244
    %p253 = scmp.eq.s32.totalorder %s21, 1
    %p254 = por %p252, %p253
    %p255 = scmp.ne.s32.totalorder %s244, %s245
    %p256 = scmp.eq.s32.totalorder %s21, 0
    %p257 = por %p255, %p256
    %p258 = scmp.ne.s32.totalorder %s244, %s245
    %p259 = scmp.eq.s32.totalorder %s22, 1
    %p260 = por %p258, %p259
    %p262 = scmp.ne.s32.totalorder %s245, %s261
    %p263 = scmp.eq.s32.totalorder %s22, 0
    %p264 = por %p262, %p263
    %p265 = scmp.le.s32.totalorder 1, %s16
    %p266 = scmp.lt.s32.totalorder %s16, 3
    %p267 = pnand %p265, %p266
    %p268 = pneg %p267
    // Predicated region
    $region9: #{eegnet_forward.1} parent=5 // pred_check
      _
    $region10: #{eegnet_forward.1} parent=5 // pred_check_branch
      %270 = sbr.rel (%p267) target = $region12
    $region11: #{eegnet_forward.1} parent=5 // pred_region
      %s271 = ssub.s32 %s16, 1
      // Predicated region
      $region13: #{eegnet_forward.1} parent=11 // pred_check
        %p272 = pneg %p63
      $region14: #{eegnet_forward.1} parent=11 // pred_check_branch
        %274 = sbr.rel (%p272) target = $region16
      $region15: #{eegnet_forward.1} parent=11 // pred_region
        _
      $region16: #{eegnet_forward.1} parent=11 // pred_fallthru
        _
      // Predicated region
      $region17: #{eegnet_forward.1} parent=11 // pred_check
        %p275 = pneg %p84
      $region18: #{eegnet_forward.1} parent=11 // pred_check_branch
        %277 = sbr.rel (%p275) target = $region20
      $region19: #{eegnet_forward.1} parent=11 // pred_region
        _
      $region20: #{eegnet_forward.1} parent=11 // pred_fallthru
        _
      // Predicated region
      $region21: #{eegnet_forward.1} parent=11 // pred_check
        %p278 = pneg %p105
      $region22: #{eegnet_forward.1} parent=11 // pred_check_branch
        %280 = sbr.rel (%p278) target = $region24
      $region23: #{eegnet_forward.1} parent=11 // pred_region
        _
      $region24: #{eegnet_forward.1} parent=11 // pred_fallthru
        _
      // Predicated region
      $region25: #{eegnet_forward.1} parent=11 // pred_check
        %p281 = pneg %p126
      $region26: #{eegnet_forward.1} parent=11 // pred_check_branch
        %283 = sbr.rel (%p281) target = $region28
      $region27: #{eegnet_forward.1} parent=11 // pred_region
        _
      $region28: #{eegnet_forward.1} parent=11 // pred_fallthru
        _
      // Predicated region
      $region29: #{eegnet_forward.1} parent=11 // pred_check
        %p284 = pneg %p147
      $region30: #{eegnet_forward.1} parent=11 // pred_check_branch
        %286 = sbr.rel (%p284) target = $region32
      $region31: #{eegnet_forward.1} parent=11 // pred_region
        _
      $region32: #{eegnet_forward.1} parent=11 // pred_fallthru
        _
      // Predicated region
      $region33: #{eegnet_forward.1} parent=11 // pred_check
        %p287 = pneg %p168
      $region34: #{eegnet_forward.1} parent=11 // pred_check_branch
        %289 = sbr.rel (%p287) target = $region36
      $region35: #{eegnet_forward.1} parent=11 // pred_region
        _
      $region36: #{eegnet_forward.1} parent=11 // pred_fallthru
        _
      // Predicated region
      $region37: #{eegnet_forward.1} parent=11 // pred_check
        %p290 = pneg %p189
      $region38: #{eegnet_forward.1} parent=11 // pred_check_branch
        %292 = sbr.rel (%p290) target = $region40
      $region39: #{eegnet_forward.1} parent=11 // pred_region
        _
      $region40: #{eegnet_forward.1} parent=11 // pred_fallthru
        _
      // Predicated region
      $region41: #{eegnet_forward.1} parent=11 // pred_check
        %p293 = pneg %p210
      $region42: #{eegnet_forward.1} parent=11 // pred_check_branch
        %295 = sbr.rel (%p293) target = $region44
      $region43: #{eegnet_forward.1} parent=11 // pred_region
        _
      $region44: #{eegnet_forward.1} parent=11 // pred_fallthru
        _
      // Predicated region
      $region45: #{eegnet_forward.1} parent=11 // pred_check
        %p296 = pneg %p231
      $region46: #{eegnet_forward.1} parent=11 // pred_check_branch
        %298 = sbr.rel (%p296) target = $region48
      $region47: #{eegnet_forward.1} parent=11 // pred_region
        _
      $region48: #{eegnet_forward.1} parent=11 // pred_fallthru
        _
    $region12: #{eegnet_forward.1} parent=5 // pred_fallthru
      _
    %p299 = scmp.lt.s32.totalorder %s16, 2
    // Predicated region
    $region49: #{eegnet_forward.1} parent=5 // pred_check
      %p300 = pneg %p299
    $region50: #{eegnet_forward.1} parent=5 // pred_check_branch
      %302 = sbr.rel (%p300) target = $region52
    $region51: #{eegnet_forward.1} parent=5 // pred_region
      // Predicated region
      $region53: #{eegnet_forward.1} parent=51 // pred_check
        %p303 = pneg %p36
      $region54: #{eegnet_forward.1} parent=51 // pred_check_branch
        %305 = sbr.rel (%p303) target = $region56
      $region55: #{eegnet_forward.1} parent=51 // pred_region
        %p306 = scmp.lt.s32.totalorder %s16, 1
        %s307 = scalar_select %p306, %s16, 1
        %s308 = smul.addr %s307, 160
        %s309 = smul.addr %s308, 4
        %s310 = scalar_lea.vmem %s0, %s309
      $region56: #{eegnet_forward.1} parent=51 // pred_fallthru
        _
    $region52: #{eegnet_forward.1} parent=5 // pred_fallthru
      _
    %p311 = scmp.le.s32.totalorder 1, %s16
    %p312 = scmp.lt.s32.totalorder %s16, 3
    %p313 = pnand %p311, %p312
    %p314 = pneg %p313
    // Predicated region
    $region57: #{eegnet_forward.1} parent=5 // pred_check
      _
    $region58: #{eegnet_forward.1} parent=5 // pred_check_branch
      %316 = sbr.rel (%p313) target = $region60
    $region59: #{eegnet_forward.1} parent=5 // pred_region
      %s317 = ssub.s32 %s16, 1
      %p318 = scmp.lt.s32.totalorder %s21, 1
      %s319 = scalar_select %p318, %s21, 1
      %s320 = smul.addr %s319, 160
      %s321 = smul.addr %s320, 4
      %s322 = scalar_lea.vmem %s0, %s321
      %p323 = pneg %p42
      %p324 = pneg %p39
      %p325 = pneg %p63
      %p326 = pneg %p60
      %p327 = pneg %p84
      %p328 = pneg %p81
      %p329 = pneg %p105
      %p330 = pneg %p102
      %p331 = pneg %p126
      %p332 = pneg %p123
      %p333 = pneg %p147
      %p334 = pneg %p144
      %p335 = pneg %p168
      %p336 = pneg %p165
      %p337 = pneg %p189
      %p338 = pneg %p186
      %p339 = pneg %p210
      %p340 = pneg %p207
      %p341 = pneg %p231
      %p342 = pneg %p228
      %p343 = pneg %p257
      %p344 = pneg %p254
      %p345 = scmp.lt.s32.totalorder %s21, 1
      %s346 = scalar_select %p345, %s21, 1
      %s347 = smul.addr %s346, 2
      %s348 = scalar_lea.vmem %s10, %s347
      %p349 = scmp.lt.s32.totalorder %s21, 1
      %s350 = scalar_select %p349, %s21, 1
      %s351 = smul.addr %s350, 160
      %s352 = smul.addr %s351, 4
      %s353 = scalar_lea.vmem %s0, %s352
      %p354 = scmp.lt.s32.totalorder %s21, 1
      %s355 = scalar_select %p354, %s21, 1
      %s356 = smul.addr %s355, 2
      %s357 = scalar_lea.vmem %s10, %s356
      %358 = vst [vmem:[#allocation2] sm:$0xff] 0.0
      %359 = vst [vmem:[#allocation2 + $0x8] sm:$0xff] 0.0
      %360 = vst [vmem:[#allocation2 + $0x10] sm:$0xff] 0.0
      %361 = vst [vmem:[#allocation2 + $0x18] sm:$0xff] 0.0
      %362 = vst [vmem:[#allocation2 + $0xc0] sm:$0xff] 0.0
      %363 = vst [vmem:[#allocation2 + $0xc8] sm:$0xff] 0.0
      %364 = vst [vmem:[#allocation2 + $0xd0] sm:$0xff] 0.0
      %365 = vst [vmem:[#allocation2 + $0xd8] sm:$0xff] 0.0
      %366 = vst [vmem:[#allocation3] sm:$0xff] 0.0
      %367 = vst [vmem:[#allocation3 + $0x30] sm:$0xff] 0.0
      %368 = vst [vmem:[#allocation4] sm:$0xff] 0.0
      %369 = vst [vmem:[#allocation4 + $0x8] sm:$0xff] 0.0
      loop: start=0, step=1, limit=2
      $region61: #{eegnet_forward.1} parent=59 // loop_pre_header
        _
      $region62: #{eegnet_forward.1} parent=59 // loop_header
        %s371 = sphi 0, %s375
        %p372 = scmp.ge.s32.totalorder %s371, 2
      $region63: #{eegnet_forward.1} parent=59 // loop_header_branch
        %374 = sbr.rel (%p372) target = $region67
      $region64: #{eegnet_forward.1} parent=59 // loop_body
        %s376 = smul.u32 %s371, 80
        %s377 = smul.addr %s376, 4
        %s378 = scalar_lea.vmem %s353, %s377
        %v379 = vld [vmem:[%s378] sm:$0xff]
        %v380 = vld [vmem:[%s378 + $0x8] sm:$0xff]
        %v381 = vld [vmem:[%s378 + $0x10] sm:$0xff]
        %v382 = vld [vmem:[%s378 + $0x18] sm:$0xff]
        %v383 = vld [vmem:[%s378 + $0x20] sm:$0xff]
        %v384 = vld [vmem:[%s378 + $0x28] sm:$0xff]
        %v385 = vld [vmem:[%s378 + $0x30] sm:$0xff]
        %v386 = vld [vmem:[%s378 + $0x38] sm:$0xff]
        %v387 = vld [vmem:[%s378 + $0x40] sm:$0xff]
        %v388 = vld [vmem:[%s378 + $0x48] sm:$0xff]
        %v389 = vld [vmem:[%s378 + $0x50] sm:$0xff]
        %v390 = vld [vmem:[%s378 + $0x58] sm:$0xff]
        %v391 = vld [vmem:[%s378 + $0x60] sm:$0xff]
        %v392 = vld [vmem:[%s378 + $0x68] sm:$0xff]
        %v393 = vld [vmem:[%s378 + $0x70] sm:$0xff]
        %v394 = vld [vmem:[%s378 + $0x78] sm:$0xff]
        %v395 = vld [vmem:[%s378 + $0x80] sm:$0xff]
        %v396 = vld [vmem:[%s378 + $0x88] sm:$0xff]
        %v397 = vld [vmem:[%s378 + $0x90] sm:$0xff]
        %v398 = vld [vmem:[%s378 + $0x98] sm:$0xff]
        %v399 = vld [vmem:[%s378 + $0xa0] sm:$0xff]
        %v400 = vld [vmem:[%s378 + $0xa8] sm:$0xff]
        %v401 = vld [vmem:[%s378 + $0xb0] sm:$0xff]
        %v402 = vld [vmem:[%s378 + $0xb8] sm:$0xff]
        %v403 = vld [vmem:[%s378 + $0xc0] sm:$0xff]
        %v404 = vld [vmem:[%s378 + $0xc8] sm:$0xff]
        %v405 = vld [vmem:[%s378 + $0xd0] sm:$0xff]
        %v406 = vld [vmem:[%s378 + $0xd8] sm:$0xff]
        %v407 = vld [vmem:[%s378 + $0xe0] sm:$0xff]
        %v408 = vld [vmem:[%s378 + $0xe8] sm:$0xff]
        %v409 = vld [vmem:[%s378 + $0xf0] sm:$0xff]
        %v410 = vld [vmem:[%s378 + $0xf8] sm:$0xff]
        %v411 = vld [vmem:[%s378 + $0x100] sm:$0xff]
        %v412 = vld [vmem:[%s378 + $0x108] sm:$0xff]
        %v413 = vld [vmem:[%s378 + $0x110] sm:$0xff]
        %v414 = vld [vmem:[%s378 + $0x118] sm:$0xff]
        %v415 = vld [vmem:[%s378 + $0x120] sm:$0xff]
        %v416 = vld [vmem:[%s378 + $0x128] sm:$0xff]
        %v417 = vld [vmem:[%s378 + $0x130] sm:$0xff]
        %v418 = vld [vmem:[%s378 + $0x138] sm:$0xff]
        %v419 = vunpack.c.l.bf16 %v379
        %v420 = vunpack.c.h.bf16 %v379
        %v421 = vunpack.c.l.bf16 %v380
        %v422 = vunpack.c.h.bf16 %v380
        %v423 = vunpack.c.l.bf16 %v381
        %v424 = vunpack.c.h.bf16 %v381
        %v425 = vunpack.c.l.bf16 %v382
        %v426 = vunpack.c.h.bf16 %v382
        %v427 = vunpack.c.l.bf16 %v383
        %v428 = vunpack.c.h.bf16 %v383
        %v429 = vunpack.c.l.bf16 %v384
        %v430 = vunpack.c.h.bf16 %v384
        %v431 = vunpack.c.l.bf16 %v385
        %v432 = vunpack.c.h.bf16 %v385
        %v433 = vunpack.c.l.bf16 %v386
        %v434 = vunpack.c.h.bf16 %v386
        %v435 = vunpack.c.l.bf16 %v387
        %v436 = vunpack.c.h.bf16 %v387
        %v437 = vunpack.c.l.bf16 %v388
        %v438 = vunpack.c.h.bf16 %v388
        %v439 = vunpack.c.l.bf16 %v389
        %v440 = vunpack.c.h.bf16 %v389
        %v441 = vunpack.c.l.bf16 %v390
        %v442 = vunpack.c.h.bf16 %v390
        %v443 = vunpack.c.l.bf16 %v391
        %v444 = vunpack.c.h.bf16 %v391
        %v445 = vunpack.c.l.bf16 %v392
        %v446 = vunpack.c.h.bf16 %v392
        %v447 = vunpack.c.l.bf16 %v393
        %v448 = vunpack.c.h.bf16 %v393
        %v449 = vunpack.c.l.bf16 %v394
        %v450 = vunpack.c.h.bf16 %v394
        %v451 = vunpack.c.l.bf16 %v395
        %v452 = vunpack.c.h.bf16 %v395
        %v453 = vunpack.c.l.bf16 %v396
        %v454 = vunpack.c.h.bf16 %v396
        %v455 = vunpack.c.l.bf16 %v397
        %v456 = vunpack.c.h.bf16 %v397
        %v457 = vunpack.c.l.bf16 %v398
        %v458 = vunpack.c.h.bf16 %v398
        %v459 = vunpack.c.l.bf16 %v399
        %v460 = vunpack.c.h.bf16 %v399
        %v461 = vunpack.c.l.bf16 %v400
        %v462 = vunpack.c.h.bf16 %v400
        %v463 = vunpack.c.l.bf16 %v401
        %v464 = vunpack.c.h.bf16 %v401
        %v465 = vunpack.c.l.bf16 %v402
        %v466 = vunpack.c.h.bf16 %v402
        %v467 = vunpack.c.l.bf16 %v403
        %v468 = vunpack.c.h.bf16 %v403
        %v469 = vunpack.c.l.bf16 %v404
        %v470 = vunpack.c.h.bf16 %v404
        %v471 = vunpack.c.l.bf16 %v405
        %v472 = vunpack.c.h.bf16 %v405
        %v473 = vunpack.c.l.bf16 %v406
        %v474 = vunpack.c.h.bf16 %v406
        %v475 = vunpack.c.l.bf16 %v407
        %v476 = vunpack.c.h.bf16 %v407
        %v477 = vunpack.c.l.bf16 %v408
        %v478 = vunpack.c.h.bf16 %v408
        %v479 = vunpack.c.l.bf16 %v409
        %v480 = vunpack.c.h.bf16 %v409
        %v481 = vunpack.c.l.bf16 %v410
        %v482 = vunpack.c.h.bf16 %v410
        %v483 = vunpack.c.l.bf16 %v411
        %v484 = vunpack.c.h.bf16 %v411
        %v485 = vunpack.c.l.bf16 %v412
        %v486 = vunpack.c.h.bf16 %v412
        %v487 = vunpack.c.l.bf16 %v413
        %v488 = vunpack.c.h.bf16 %v413
        %v489 = vunpack.c.l.bf16 %v414
        %v490 = vunpack.c.h.bf16 %v414
        %v491 = vunpack.c.l.bf16 %v415
        %v492 = vunpack.c.h.bf16 %v415
        %v493 = vunpack.c.l.bf16 %v416
        %v494 = vunpack.c.h.bf16 %v416
        %v495 = vunpack.c.l.bf16 %v417
        %v496 = vunpack.c.h.bf16 %v417
        %v497 = vunpack.c.l.bf16 %v418
        %v498 = vunpack.c.h.bf16 %v418
        %v499 = vld [vmem:[%s1] sm:$0xff]
        %v500 = vld [vmem:[%s1 + $0x8] sm:$0xff]
        %v501 = vld [vmem:[%s1 + $0x10] sm:$0xff]
        %v502 = vld [vmem:[%s1 + $0x18] sm:$0xff]
        %v503 = vld [vmem:[%s1 + $0x20] sm:$0xff]
        %v504 = vld [vmem:[%s1 + $0x28] sm:$0xff]
        %v505 = vld [vmem:[%s1 + $0x30] sm:$0xff]
        %v506 = vld [vmem:[%s1 + $0x38] sm:$0xff]
        %v507 = vld [vmem:[%s1 + $0x40] sm:$0xff]
        %v508 = vld [vmem:[%s1 + $0x48] sm:$0xff]
        %v509 = vld [vmem:[%s1 + $0x50] sm:$0xff]
        %v510 = vld [vmem:[%s1 + $0x58] sm:$0xff]
        %v511 = vld [vmem:[%s1 + $0x60] sm:$0xff]
        %v512 = vld [vmem:[%s1 + $0x68] sm:$0xff]
        %v513 = vld [vmem:[%s1 + $0x70] sm:$0xff]
        %v514 = vld [vmem:[%s1 + $0x78] sm:$0xff]
        %v515 = vld [vmem:[%s1 + $0x80] sm:$0xff]
        %v516 = vld [vmem:[%s1 + $0x88] sm:$0xff]
        %v517 = vld [vmem:[%s1 + $0x90] sm:$0xff]
        %v518 = vld [vmem:[%s1 + $0x98] sm:$0xff]
        %v519 = vld [vmem:[%s1 + $0xa0] sm:$0xff]
        %v520 = vld [vmem:[%s1 + $0xa8] sm:$0xff]
        %v521 = vld [vmem:[%s1 + $0xb0] sm:$0xff]
        %v522 = vld [vmem:[%s1 + $0xb8] sm:$0xff]
        %v523 = vld [vmem:[%s1 + $0xc0] sm:$0xff]
        %v524 = vld [vmem:[%s1 + $0xc8] sm:$0xff]
        %v525 = vld [vmem:[%s1 + $0xd0] sm:$0xff]
        %v526 = vld [vmem:[%s1 + $0xd8] sm:$0xff]
        %v527 = vld [vmem:[%s1 + $0xe0] sm:$0xff]
        %v528 = vld [vmem:[%s1 + $0xe8] sm:$0xff]
        %v529 = vld [vmem:[%s1 + $0xf0] sm:$0xff]
        %v530 = vld [vmem:[%s1 + $0xf8] sm:$0xff]
        %v531 = vld [vmem:[%s1 + $0x100] sm:$0xff]
        %v532 = vld [vmem:[%s1 + $0x108] sm:$0xff]
        %v533 = vld [vmem:[%s1 + $0x110] sm:$0xff]
        %v534 = vld [vmem:[%s1 + $0x118] sm:$0xff]
        %v535 = vld [vmem:[%s1 + $0x120] sm:$0xff]
        %v536 = vld [vmem:[%s1 + $0x128] sm:$0xff]
        %v537 = vld [vmem:[%s1 + $0x130] sm:$0xff]
        %v538 = vld [vmem:[%s1 + $0x138] sm:$0xff]
        %v539 = vld [vmem:[%s1 + $0x140] sm:$0xff]
        %v540 = vld [vmem:[%s1 + $0x148] sm:$0xff]
        %v541 = vld [vmem:[%s1 + $0x150] sm:$0xff]
        %v542 = vld [vmem:[%s1 + $0x158] sm:$0xff]
        %v543 = vld [vmem:[%s1 + $0x160] sm:$0xff]
        %v544 = vld [vmem:[%s1 + $0x168] sm:$0xff]
        %v545 = vld [vmem:[%s1 + $0x170] sm:$0xff]
        %v546 = vld [vmem:[%s1 + $0x178] sm:$0xff]
        %v547 = vld [vmem:[%s1 + $0x180] sm:$0xff]
        %v548 = vld [vmem:[%s1 + $0x188] sm:$0xff]
        %v549 = vld [vmem:[%s1 + $0x190] sm:$0xff]
        %v550 = vld [vmem:[%s1 + $0x198] sm:$0xff]
        %v551 = vld [vmem:[%s1 + $0x1a0] sm:$0xff]
        %v552 = vld [vmem:[%s1 + $0x1a8] sm:$0xff]
        %v553 = vld [vmem:[%s1 + $0x1b0] sm:$0xff]
        %v554 = vld [vmem:[%s1 + $0x1b8] sm:$0xff]
        %v555 = vld [vmem:[%s1 + $0x1c0] sm:$0xff]
        %v556 = vld [vmem:[%s1 + $0x1c8] sm:$0xff]
        %v557 = vld [vmem:[%s1 + $0x1d0] sm:$0xff]
        %v558 = vld [vmem:[%s1 + $0x1d8] sm:$0xff]
        %v559 = vld [vmem:[%s1 + $0x1e0] sm:$0xff]
        %v560 = vld [vmem:[%s1 + $0x1e8] sm:$0xff]
        %v561 = vld [vmem:[%s1 + $0x1f0] sm:$0xff]
        %v562 = vld [vmem:[%s1 + $0x1f8] sm:$0xff]
        %563 = vmatprep.subr.mxu0 0.0
        %564 = vmatpush1.msra.mxu0 %v514
        %565 = vmatprep.subr.mxu0 0.0
        %566 = vmatpush1.msra.mxu0 %v513
        %567 = vmatprep.subr.mxu0 0.0
        %568 = vmatpush1.msra.mxu0 %v512
        %569 = vmatprep.subr.mxu0 0.0
        %570 = vmatpush1.msra.mxu0 %v511
        %571 = vmatprep.subr.mxu0 0.0
        %572 = vmatpush1.msra.mxu0 %v510
        %573 = vmatprep.subr.mxu0 0.0
        %574 = vmatpush1.msra.mxu0 %v509
        %575 = vmatprep.subr.mxu0 0.0
        %576 = vmatpush1.msra.mxu0 %v508
        %577 = vmatprep.subr.mxu0 0.0
        %578 = vmatpush1.msra.mxu0 %v507
        %579 = vmatprep.subr.mxu0 0.0
        %580 = vmatpush1.msra.mxu0 %v506
        %581 = vmatprep.subr.mxu0 0.0
        %582 = vmatpush1.msra.mxu0 %v505
        %583 = vmatprep.subr.mxu0 0.0
        %584 = vmatpush1.msra.mxu0 %v504
        %585 = vmatprep.subr.mxu0 0.0
        %586 = vmatpush1.msra.mxu0 %v503
        %587 = vmatprep.subr.mxu0 0.0
        %588 = vmatpush1.msra.mxu0 %v502
        %589 = vmatprep.subr.mxu0 0.0
        %590 = vmatpush1.msra.mxu0 %v501
        %591 = vmatprep.subr.mxu0 0.0
        %592 = vmatpush1.msra.mxu0 %v500
        %593 = vmatprep.subr.mxu0 0.0
        %594 = vmatpush1.msra.mxu0 %v499
        %595 = vmatprep.subr.mxu0 0.0
        %596 = vmatpush2.msra.mxu0 %v530
        %597 = vmatprep.subr.mxu0 0.0
        %598 = vmatpush2.msra.mxu0 %v529
        %599 = vmatprep.subr.mxu0 0.0
        %600 = vmatpush2.msra.mxu0 %v528
        %601 = vmatprep.subr.mxu0 0.0
        %602 = vmatpush2.msra.mxu0 %v527
        %603 = vmatprep.subr.mxu0 0.0
        %604 = vmatpush2.msra.mxu0 %v526
        %605 = vmatprep.subr.mxu0 0.0
        %606 = vmatpush2.msra.mxu0 %v525
        %607 = vmatprep.subr.mxu0 0.0
        %608 = vmatpush2.msra.mxu0 %v524
        %609 = vmatprep.subr.mxu0 0.0
        %610 = vmatpush2.msra.mxu0 %v523
        %611 = vmatprep.subr.mxu0 0.0
        %612 = vmatpush2.msra.mxu0 %v522
        %613 = vmatprep.subr.mxu0 0.0
        %614 = vmatpush2.msra.mxu0 %v521
        %615 = vmatprep.subr.mxu0 0.0
        %616 = vmatpush2.msra.mxu0 %v520
        %617 = vmatprep.subr.mxu0 0.0
        %618 = vmatpush2.msra.mxu0 %v519
        %619 = vmatprep.subr.mxu0 0.0
        %620 = vmatpush2.msra.mxu0 %v518
        %621 = vmatprep.subr.mxu0 0.0
        %622 = vmatpush2.msra.mxu0 %v517
        %623 = vmatprep.subr.mxu0 0.0
        %624 = vmatpush2.msra.mxu0 %v516
        %625 = vmatprep.subr.mxu0 0.0
        %626 = vmatpush2.msra.mxu0 %v515
        %627 = vmatprep.mubr.f32.mxu0 %v420
        %628 = vmatmul.mubr.f32.gmra.mxu0 %v419
        %v629 = vpop.f32.mrf.mxu0
        %v630 = vadd.f32 0.0, %v629
        %v631 = vpop.f32.mrf.mxu0
        %632 = vmatprep.mubr.f32.mxu0 %v424
        %633 = vmatmul.mubr.f32.gmra.mxu0 %v423
        %v634 = vpop.f32.mrf.mxu0
        %v635 = vadd.f32 0.0, %v634
        %v636 = vpop.f32.mrf.mxu0
        %637 = vmatprep.mubr.f32.mxu0 %v428
        %638 = vmatmul.mubr.f32.gmra.mxu0 %v427
        %v639 = vpop.f32.mrf.mxu0
        %v640 = vadd.f32 0.0, %v639
        %v641 = vpop.f32.mrf.mxu0
        %642 = vmatprep.mubr.f32.mxu0 %v432
        %643 = vmatmul.mubr.f32.gmra.mxu0 %v431
        %v644 = vpop.f32.mrf.mxu0
        %v645 = vadd.f32 0.0, %v644
        %v646 = vpop.f32.mrf.mxu0
        %647 = vmatprep.mubr.f32.mxu0 %v436
        %648 = vmatmul.mubr.f32.gmra.mxu0 %v435
        %v649 = vpop.f32.mrf.mxu0
        %v650 = vadd.f32 0.0, %v649
        %v651 = vpop.f32.mrf.mxu0
        %652 = vmatprep.mubr.f32.mxu0 %v440
        %653 = vmatmul.mubr.f32.gmra.mxu0 %v439
        %v654 = vpop.f32.mrf.mxu0
        %v655 = vadd.f32 0.0, %v654
        %v656 = vpop.f32.mrf.mxu0
        %657 = vmatprep.mubr.f32.mxu0 %v444
        %658 = vmatmul.mubr.f32.gmra.mxu0 %v443
        %v659 = vpop.f32.mrf.mxu0
        %v660 = vadd.f32 0.0, %v659
        %v661 = vpop.f32.mrf.mxu0
        %662 = vmatprep.mubr.f32.mxu0 %v448
        %663 = vmatmul.mubr.f32.gmra.mxu0 %v447
        %v664 = vpop.f32.mrf.mxu0
        %v665 = vadd.f32 0.0, %v664
        %v666 = vpop.f32.mrf.mxu0
        %667 = vmatprep.mubr.f32.mxu0 %v452
        %668 = vmatmul.mubr.f32.gmra.mxu0 %v451
        %v669 = vpop.f32.mrf.mxu0
        %v670 = vadd.f32 0.0, %v669
        %v671 = vpop.f32.mrf.mxu0
        %672 = vmatprep.mubr.f32.mxu0 %v456
        %673 = vmatmul.mubr.f32.gmra.mxu0 %v455
        %v674 = vpop.f32.mrf.mxu0
        %v675 = vadd.f32 0.0, %v674
        %v676 = vpop.f32.mrf.mxu0
        %677 = vmatprep.mubr.f32.mxu0 %v460
        %678 = vmatmul.mubr.f32.gmra.mxu0 %v459
        %v679 = vpop.f32.mrf.mxu0
        %v680 = vadd.f32 0.0, %v679
        %v681 = vpop.f32.mrf.mxu0
        %682 = vmatprep.mubr.f32.mxu0 %v464
        %683 = vmatmul.mubr.f32.gmra.mxu0 %v463
        %v684 = vpop.f32.mrf.mxu0
        %v685 = vadd.f32 0.0, %v684
        %v686 = vpop.f32.mrf.mxu0
        %687 = vmatprep.mubr.f32.mxu0 %v468
        %688 = vmatmul.mubr.f32.gmra.mxu0 %v467
        %v689 = vpop.f32.mrf.mxu0
        %v690 = vadd.f32 0.0, %v689
        %v691 = vpop.f32.mrf.mxu0
        %692 = vmatprep.mubr.f32.mxu0 %v472
        %693 = vmatmul.mubr.f32.gmra.mxu0 %v471
        %v694 = vpop.f32.mrf.mxu0
        %v695 = vadd.f32 0.0, %v694
        %v696 = vpop.f32.mrf.mxu0
        %697 = vmatprep.mubr.f32.mxu0 %v476
        %698 = vmatmul.mubr.f32.gmra.mxu0 %v475
        %v699 = vpop.f32.mrf.mxu0
        %v700 = vadd.f32 0.0, %v699
        %v701 = vpop.f32.mrf.mxu0
        %702 = vmatprep.mubr.f32.mxu0 %v480
        %703 = vmatmul.mubr.f32.gmra.mxu0 %v479
        %v704 = vpop.f32.mrf.mxu0
        %v705 = vadd.f32 0.0, %v704
        %v706 = vpop.f32.mrf.mxu0
        %707 = vmatprep.mubr.f32.mxu0 %v484
        %708 = vmatmul.mubr.f32.gmra.mxu0 %v483
        %v709 = vpop.f32.mrf.mxu0
        %v710 = vadd.f32 0.0, %v709
        %v711 = vpop.f32.mrf.mxu0
        %712 = vmatprep.mubr.f32.mxu0 %v488
        %713 = vmatmul.mubr.f32.gmra.mxu0 %v487
        %v714 = vpop.f32.mrf.mxu0
        %v715 = vadd.f32 0.0, %v714
        %v716 = vpop.f32.mrf.mxu0
        %717 = vmatprep.mubr.f32.mxu0 %v492
        %718 = vmatmul.mubr.f32.gmra.mxu0 %v491
        %v719 = vpop.f32.mrf.mxu0
        %v720 = vadd.f32 0.0, %v719
        %v721 = vpop.f32.mrf.mxu0
        %722 = vmatprep.mubr.f32.mxu0 %v496
        %723 = vmatmul.mubr.f32.gmra.mxu0 %v495
        %v724 = vpop.f32.mrf.mxu0
        %v725 = vadd.f32 0.0, %v724
        %v726 = vpop.f32.mrf.mxu0
        %727 = vdwg.mxu0
        %728 = vmatprep.subr.mxu0 0.0
        %729 = vmatpush1.msra.mxu0 %v546
        %730 = vmatprep.subr.mxu0 0.0
        %731 = vmatpush1.msra.mxu0 %v545
        %732 = vmatprep.subr.mxu0 0.0
        %733 = vmatpush1.msra.mxu0 %v544
        %734 = vmatprep.subr.mxu0 0.0
        %735 = vmatpush1.msra.mxu0 %v543
        %736 = vmatprep.subr.mxu0 0.0
        %737 = vmatpush1.msra.mxu0 %v542
        %738 = vmatprep.subr.mxu0 0.0
        %739 = vmatpush1.msra.mxu0 %v541
        %740 = vmatprep.subr.mxu0 0.0
        %741 = vmatpush1.msra.mxu0 %v540
        %742 = vmatprep.subr.mxu0 0.0
        %743 = vmatpush1.msra.mxu0 %v539
        %744 = vmatprep.subr.mxu0 0.0
        %745 = vmatpush1.msra.mxu0 %v538
        %746 = vmatprep.subr.mxu0 0.0
        %747 = vmatpush1.msra.mxu0 %v537
        %748 = vmatprep.subr.mxu0 0.0
        %749 = vmatpush1.msra.mxu0 %v536
        %750 = vmatprep.subr.mxu0 0.0
        %751 = vmatpush1.msra.mxu0 %v535
        %752 = vmatprep.subr.mxu0 0.0
        %753 = vmatpush1.msra.mxu0 %v534
        %754 = vmatprep.subr.mxu0 0.0
        %755 = vmatpush1.msra.mxu0 %v533
        %756 = vmatprep.subr.mxu0 0.0
        %757 = vmatpush1.msra.mxu0 %v532
        %758 = vmatprep.subr.mxu0 0.0
        %759 = vmatpush1.msra.mxu0 %v531
        %760 = vmatprep.subr.mxu0 0.0
        %761 = vmatpush2.msra.mxu0 %v562
        %762 = vmatprep.subr.mxu0 0.0
        %763 = vmatpush2.msra.mxu0 %v561
        %764 = vmatprep.subr.mxu0 0.0
        %765 = vmatpush2.msra.mxu0 %v560
        %766 = vmatprep.subr.mxu0 0.0
        %767 = vmatpush2.msra.mxu0 %v559
        %768 = vmatprep.subr.mxu0 0.0
        %769 = vmatpush2.msra.mxu0 %v558
        %770 = vmatprep.subr.mxu0 0.0
        %771 = vmatpush2.msra.mxu0 %v557
        %772 = vmatprep.subr.mxu0 0.0
        %773 = vmatpush2.msra.mxu0 %v556
        %774 = vmatprep.subr.mxu0 0.0
        %775 = vmatpush2.msra.mxu0 %v555
        %776 = vmatprep.subr.mxu0 0.0
        %777 = vmatpush2.msra.mxu0 %v554
        %778 = vmatprep.subr.mxu0 0.0
        %779 = vmatpush2.msra.mxu0 %v553
        %780 = vmatprep.subr.mxu0 0.0
        %781 = vmatpush2.msra.mxu0 %v552
        %782 = vmatprep.subr.mxu0 0.0
        %783 = vmatpush2.msra.mxu0 %v551
        %784 = vmatprep.subr.mxu0 0.0
        %785 = vmatpush2.msra.mxu0 %v550
        %786 = vmatprep.subr.mxu0 0.0
        %787 = vmatpush2.msra.mxu0 %v549
        %788 = vmatprep.subr.mxu0 0.0
        %789 = vmatpush2.msra.mxu0 %v548
        %790 = vmatprep.subr.mxu0 0.0
        %791 = vmatpush2.msra.mxu0 %v547
        %792 = vmatprep.mubr.f32.mxu0 %v422
        %793 = vmatmul.mubr.f32.gmra.mxu0 %v421
        %v794 = vpop.f32.mrf.mxu0
        %v795 = vadd.f32 %v630, %v794
        %v796 = vpop.f32.mrf.mxu0
        %797 = vmatprep.mubr.f32.mxu0 %v426
        %798 = vmatmul.mubr.f32.gmra.mxu0 %v425
        %v799 = vpop.f32.mrf.mxu0
        %v800 = vadd.f32 %v635, %v799
        %v801 = vpop.f32.mrf.mxu0
        %802 = vmatprep.mubr.f32.mxu0 %v430
        %803 = vmatmul.mubr.f32.gmra.mxu0 %v429
        %v804 = vpop.f32.mrf.mxu0
        %v805 = vadd.f32 %v640, %v804
        %v806 = vpop.f32.mrf.mxu0
        %807 = vmatprep.mubr.f32.mxu0 %v434
        %808 = vmatmul.mubr.f32.gmra.mxu0 %v433
        %v809 = vpop.f32.mrf.mxu0
        %v810 = vadd.f32 %v645, %v809
        %v811 = vpop.f32.mrf.mxu0
        %812 = vmatprep.mubr.f32.mxu0 %v438
        %813 = vmatmul.mubr.f32.gmra.mxu0 %v437
        %v814 = vpop.f32.mrf.mxu0
        %v815 = vadd.f32 %v650, %v814
        %v816 = vpop.f32.mrf.mxu0
        %817 = vmatprep.mubr.f32.mxu0 %v442
        %818 = vmatmul.mubr.f32.gmra.mxu0 %v441
        %v819 = vpop.f32.mrf.mxu0
        %v820 = vadd.f32 %v655, %v819
        %v821 = vpop.f32.mrf.mxu0
        %822 = vmatprep.mubr.f32.mxu0 %v446
        %823 = vmatmul.mubr.f32.gmra.mxu0 %v445
        %v824 = vpop.f32.mrf.mxu0
        %v825 = vadd.f32 %v660, %v824
        %v826 = vpop.f32.mrf.mxu0
        %827 = vmatprep.mubr.f32.mxu0 %v450
        %828 = vmatmul.mubr.f32.gmra.mxu0 %v449
        %v829 = vpop.f32.mrf.mxu0
        %v830 = vadd.f32 %v665, %v829
        %v831 = vpop.f32.mrf.mxu0
        %832 = vmatprep.mubr.f32.mxu0 %v454
        %833 = vmatmul.mubr.f32.gmra.mxu0 %v453
        %v834 = vpop.f32.mrf.mxu0
        %v835 = vadd.f32 %v670, %v834
        %v836 = vpop.f32.mrf.mxu0
        %837 = vmatprep.mubr.f32.mxu0 %v458
        %838 = vmatmul.mubr.f32.gmra.mxu0 %v457
        %v839 = vpop.f32.mrf.mxu0
        %v840 = vadd.f32 %v675, %v839
        %v841 = vpop.f32.mrf.mxu0
        %842 = vmatprep.mubr.f32.mxu0 %v462
        %843 = vmatmul.mubr.f32.gmra.mxu0 %v461
        %v844 = vpop.f32.mrf.mxu0
        %v845 = vadd.f32 %v680, %v844
        %v846 = vpop.f32.mrf.mxu0
        %847 = vmatprep.mubr.f32.mxu0 %v466
        %848 = vmatmul.mubr.f32.gmra.mxu0 %v465
        %v849 = vpop.f32.mrf.mxu0
        %v850 = vadd.f32 %v685, %v849
        %v851 = vpop.f32.mrf.mxu0
        %852 = vmatprep.mubr.f32.mxu0 %v470
        %853 = vmatmul.mubr.f32.gmra.mxu0 %v469
        %v854 = vpop.f32.mrf.mxu0
        %v855 = vadd.f32 %v690, %v854
        %v856 = vpop.f32.mrf.mxu0
        %857 = vmatprep.mubr.f32.mxu0 %v474
        %858 = vmatmul.mubr.f32.gmra.mxu0 %v473
        %v859 = vpop.f32.mrf.mxu0
        %v860 = vadd.f32 %v695, %v859
        %v861 = vpop.f32.mrf.mxu0
        %862 = vmatprep.mubr.f32.mxu0 %v478
        %863 = vmatmul.mubr.f32.gmra.mxu0 %v477
        %v864 = vpop.f32.mrf.mxu0
        %v865 = vadd.f32 %v700, %v864
        %v866 = vpop.f32.mrf.mxu0
        %867 = vmatprep.mubr.f32.mxu0 %v482
        %868 = vmatmul.mubr.f32.gmra.mxu0 %v481
        %v869 = vpop.f32.mrf.mxu0
        %v870 = vadd.f32 %v705, %v869
        %v871 = vpop.f32.mrf.mxu0
        %872 = vmatprep.mubr.f32.mxu0 %v486
        %873 = vmatmul.mubr.f32.gmra.mxu0 %v485
        %v874 = vpop.f32.mrf.mxu0
        %v875 = vadd.f32 %v710, %v874
        %v876 = vpop.f32.mrf.mxu0
        %877 = vmatprep.mubr.f32.mxu0 %v490
        %878 = vmatmul.mubr.f32.gmra.mxu0 %v489
        %v879 = vpop.f32.mrf.mxu0
        %v880 = vadd.f32 %v715, %v879
        %v881 = vpop.f32.mrf.mxu0
        %882 = vmatprep.mubr.f32.mxu0 %v494
        %883 = vmatmul.mubr.f32.gmra.mxu0 %v493
        %v884 = vpop.f32.mrf.mxu0
        %v885 = vadd.f32 %v720, %v884
        %v886 = vpop.f32.mrf.mxu0
        %887 = vmatprep.mubr.f32.mxu0 %v498
        %888 = vmatmul.mubr.f32.gmra.mxu0 %v497
        %v889 = vpop.f32.mrf.mxu0
        %v890 = vadd.f32 %v725, %v889
        %v891 = vpop.f32.mrf.mxu0
        %892 = vdwg.mxu0
        %893 = vst [vmem:[#allocation2 + $0x20] sm:$0xff] %v795
        %894 = vst [vmem:[#allocation2 + $0x28] sm:$0xff] %v800
        %895 = vst [vmem:[#allocation2 + $0x30] sm:$0xff] %v805
        %896 = vst [vmem:[#allocation2 + $0x38] sm:$0xff] %v810
        %897 = vst [vmem:[#allocation2 + $0x40] sm:$0xff] %v815
        %898 = vst [vmem:[#allocation2 + $0x48] sm:$0xff] %v820
        %899 = vst [vmem:[#allocation2 + $0x50] sm:$0xff] %v825
        %900 = vst [vmem:[#allocation2 + $0x58] sm:$0xff] %v830
        %901 = vst [vmem:[#allocation2 + $0x60] sm:$0xff] %v835
        %902 = vst [vmem:[#allocation2 + $0x68] sm:$0xff] %v840
        %903 = vst [vmem:[#allocation2 + $0x70] sm:$0xff] %v845
        %904 = vst [vmem:[#allocation2 + $0x78] sm:$0xff] %v850
        %905 = vst [vmem:[#allocation2 + $0x80] sm:$0xff] %v855
        %906 = vst [vmem:[#allocation2 + $0x88] sm:$0xff] %v860
        %907 = vst [vmem:[#allocation2 + $0x90] sm:$0xff] %v865
        %908 = vst [vmem:[#allocation2 + $0x98] sm:$0xff] %v870
        %909 = vst [vmem:[#allocation2 + $0xa0] sm:$0xff] %v875
        %910 = vst [vmem:[#allocation2 + $0xa8] sm:$0xff] %v880
        %911 = vst [vmem:[#allocation2 + $0xb0] sm:$0xff] %v885
        %912 = vst [vmem:[#allocation2 + $0xb8] sm:$0xff] %v890
        %s913 = scalar_lea.vmem [#allocation2], 1
        %v914 = vld [vmem:[%s913] ss:$4 sm:$0xff]
        %s915 = scalar_lea.vmem [#allocation2], 33
        %v916 = vld [vmem:[%s915] ss:$4 sm:$0xff]
        %s917 = scalar_lea.vmem [#allocation2], 65
        %v918 = vld [vmem:[%s917] ss:$4 sm:$0xff]
        %s919 = scalar_lea.vmem [#allocation2], 97
        %v920 = vld [vmem:[%s919] ss:$4 sm:$0xff]
        %s921 = scalar_lea.vmem [#allocation2], 129
        %v922 = vld [vmem:[%s921] ss:$4 sm:$0xff]
        %v923 = vld [vmem:[%s2] sm:$0x1]
        %v924 = vlaneseq
        %v925 = vshrl.u32 %v924, 7
        %v926 = vsub.s32 0, %v925
        %v927 = vrot.slane %v923, %v926
        %v928 = vmul.f32 %v914, %v927
        %v929 = vmul.f32 %v916, %v927
        %v930 = vmul.f32 %v918, %v927
        %v931 = vmul.f32 %v920, %v927
        %v932 = vmul.f32 %v922, %v927
        %v933 = vadd.f32 %v928, 0.0
        %v934 = vadd.f32 %v929, 0.0
        %v935 = vadd.f32 %v930, 0.0
        %v936 = vadd.f32 %v931, 0.0
        %v937 = vadd.f32 %v932, 0.0
        %s938 = scalar_lea.vmem [#allocation2], 2
        %v939 = vld [vmem:[%s938] ss:$4 sm:$0xff]
        %s940 = scalar_lea.vmem [#allocation2], 34
        %v941 = vld [vmem:[%s940] ss:$4 sm:$0xff]
        %s942 = scalar_lea.vmem [#allocation2], 66
        %v943 = vld [vmem:[%s942] ss:$4 sm:$0xff]
        %s944 = scalar_lea.vmem [#allocation2], 98
        %v945 = vld [vmem:[%s944] ss:$4 sm:$0xff]
        %s946 = scalar_lea.vmem [#allocation2], 130
        %v947 = vld [vmem:[%s946] ss:$4 sm:$0xff]
        %v948 = vld [vmem:[%s2 + $0x1] sm:$0x1]
        %v949 = vlaneseq
        %v950 = vshrl.u32 %v949, 7
        %v951 = vsub.s32 0, %v950
        %v952 = vrot.slane %v948, %v951
        %v953 = vmul.f32 %v939, %v952
        %v954 = vmul.f32 %v941, %v952
        %v955 = vmul.f32 %v943, %v952
        %v956 = vmul.f32 %v945, %v952
        %v957 = vmul.f32 %v947, %v952
        %v958 = vadd.f32 %v933, %v953
        %v959 = vadd.f32 %v934, %v954
        %v960 = vadd.f32 %v935, %v955
        %v961 = vadd.f32 %v936, %v956
        %v962 = vadd.f32 %v937, %v957
        %s963 = scalar_lea.vmem [#allocation2], 3
        %v964 = vld [vmem:[%s963] ss:$4 sm:$0xff]
        %s965 = scalar_lea.vmem [#allocation2], 35
        %v966 = vld [vmem:[%s965] ss:$4 sm:$0xff]
        %s967 = scalar_lea.vmem [#allocation2], 67
        %v968 = vld [vmem:[%s967] ss:$4 sm:$0xff]
        %s969 = scalar_lea.vmem [#allocation2], 99
        %v970 = vld [vmem:[%s969] ss:$4 sm:$0xff]
        %s971 = scalar_lea.vmem [#allocation2], 131
        %v972 = vld [vmem:[%s971] ss:$4 sm:$0xff]
        %v973 = vld [vmem:[%s2 + $0x2] sm:$0x1]
        %v974 = vlaneseq
        %v975 = vshrl.u32 %v974, 7
        %v976 = vsub.s32 0, %v975
        %v977 = vrot.slane %v973, %v976
        %v978 = vmul.f32 %v964, %v977
        %v979 = vmul.f32 %v966, %v977
        %v980 = vmul.f32 %v968, %v977
        %v981 = vmul.f32 %v970, %v977
        %v982 = vmul.f32 %v972, %v977
        %v983 = vadd.f32 %v958, %v978
        %v984 = vadd.f32 %v959, %v979
        %v985 = vadd.f32 %v960, %v980
        %v986 = vadd.f32 %v961, %v981
        %v987 = vadd.f32 %v962, %v982
        %s988 = scalar_lea.vmem [#allocation2], 4
        %v989 = vld [vmem:[%s988] ss:$4 sm:$0xff]
        %s990 = scalar_lea.vmem [#allocation2], 36
        %v991 = vld [vmem:[%s990] ss:$4 sm:$0xff]
        %s992 = scalar_lea.vmem [#allocation2], 68
        %v993 = vld [vmem:[%s992] ss:$4 sm:$0xff]
        %s994 = scalar_lea.vmem [#allocation2], 100
        %v995 = vld [vmem:[%s994] ss:$4 sm:$0xff]
        %s996 = scalar_lea.vmem [#allocation2], 132
        %v997 = vld [vmem:[%s996] ss:$4 sm:$0xff]
        %v998 = vld [vmem:[%s2 + $0x3] sm:$0x1]
        %v999 = vlaneseq
        %v1000 = vshrl.u32 %v999, 7
        %v1001 = vsub.s32 0, %v1000
        %v1002 = vrot.slane %v998, %v1001
        %v1003 = vmul.f32 %v989, %v1002
        %v1004 = vmul.f32 %v991, %v1002
        %v1005 = vmul.f32 %v993, %v1002
        %v1006 = vmul.f32 %v995, %v1002
        %v1007 = vmul.f32 %v997, %v1002
        %v1008 = vadd.f32 %v983, %v1003
        %v1009 = vadd.f32 %v984, %v1004
        %v1010 = vadd.f32 %v985, %v1005
        %v1011 = vadd.f32 %v986, %v1006
        %v1012 = vadd.f32 %v987, %v1007
        %s1013 = scalar_lea.vmem [#allocation2], 5
        %v1014 = vld [vmem:[%s1013] ss:$4 sm:$0xff]
        %s1015 = scalar_lea.vmem [#allocation2], 37
        %v1016 = vld [vmem:[%s1015] ss:$4 sm:$0xff]
        %s1017 = scalar_lea.vmem [#allocation2], 69
        %v1018 = vld [vmem:[%s1017] ss:$4 sm:$0xff]
        %s1019 = scalar_lea.vmem [#allocation2], 101
        %v1020 = vld [vmem:[%s1019] ss:$4 sm:$0xff]
        %s1021 = scalar_lea.vmem [#allocation2], 133
        %v1022 = vld [vmem:[%s1021] ss:$4 sm:$0xff]
        %v1023 = vld [vmem:[%s2 + $0x4] sm:$0x1]
        %v1024 = vlaneseq
        %v1025 = vshrl.u32 %v1024, 7
        %v1026 = vsub.s32 0, %v1025
        %v1027 = vrot.slane %v1023, %v1026
        %v1028 = vmul.f32 %v1014, %v1027
        %v1029 = vmul.f32 %v1016, %v1027
        %v1030 = vmul.f32 %v1018, %v1027
        %v1031 = vmul.f32 %v1020, %v1027
        %v1032 = vmul.f32 %v1022, %v1027
        %v1033 = vadd.f32 %v1008, %v1028
        %v1034 = vadd.f32 %v1009, %v1029
        %v1035 = vadd.f32 %v1010, %v1030
        %v1036 = vadd.f32 %v1011, %v1031
        %v1037 = vadd.f32 %v1012, %v1032
        %s1038 = scalar_lea.vmem [#allocation2], 6
        %v1039 = vld [vmem:[%s1038] ss:$4 sm:$0xff]
        %s1040 = scalar_lea.vmem [#allocation2], 38
        %v1041 = vld [vmem:[%s1040] ss:$4 sm:$0xff]
        %s1042 = scalar_lea.vmem [#allocation2], 70
        %v1043 = vld [vmem:[%s1042] ss:$4 sm:$0xff]
        %s1044 = scalar_lea.vmem [#allocation2], 102
        %v1045 = vld [vmem:[%s1044] ss:$4 sm:$0xff]
        %s1046 = scalar_lea.vmem [#allocation2], 134
        %v1047 = vld [vmem:[%s1046] ss:$4 sm:$0xff]
        %v1048 = vld [vmem:[%s2 + $0x5] sm:$0x1]
        %v1049 = vlaneseq
        %v1050 = vshrl.u32 %v1049, 7
        %v1051 = vsub.s32 0, %v1050
        %v1052 = vrot.slane %v1048, %v1051
        %v1053 = vmul.f32 %v1039, %v1052
        %v1054 = vmul.f32 %v1041, %v1052
        %v1055 = vmul.f32 %v1043, %v1052
        %v1056 = vmul.f32 %v1045, %v1052
        %v1057 = vmul.f32 %v1047, %v1052
        %v1058 = vadd.f32 %v1033, %v1053
        %v1059 = vadd.f32 %v1034, %v1054
        %v1060 = vadd.f32 %v1035, %v1055
        %v1061 = vadd.f32 %v1036, %v1056
        %v1062 = vadd.f32 %v1037, %v1057
        %s1063 = scalar_lea.vmem [#allocation2], 7
        %v1064 = vld [vmem:[%s1063] ss:$4 sm:$0xff]
        %s1065 = scalar_lea.vmem [#allocation2], 39
        %v1066 = vld [vmem:[%s1065] ss:$4 sm:$0xff]
        %s1067 = scalar_lea.vmem [#allocation2], 71
        %v1068 = vld [vmem:[%s1067] ss:$4 sm:$0xff]
        %s1069 = scalar_lea.vmem [#allocation2], 103
        %v1070 = vld [vmem:[%s1069] ss:$4 sm:$0xff]
        %s1071 = scalar_lea.vmem [#allocation2], 135
        %v1072 = vld [vmem:[%s1071] ss:$4 sm:$0xff]
        %v1073 = vld [vmem:[%s2 + $0x6] sm:$0x1]
        %v1074 = vlaneseq
        %v1075 = vshrl.u32 %v1074, 7
        %v1076 = vsub.s32 0, %v1075
        %v1077 = vrot.slane %v1073, %v1076
        %v1078 = vmul.f32 %v1064, %v1077
        %v1079 = vmul.f32 %v1066, %v1077
        %v1080 = vmul.f32 %v1068, %v1077
        %v1081 = vmul.f32 %v1070, %v1077
        %v1082 = vmul.f32 %v1072, %v1077
        %v1083 = vadd.f32 %v1058, %v1078
        %v1084 = vadd.f32 %v1059, %v1079
        %v1085 = vadd.f32 %v1060, %v1080
        %v1086 = vadd.f32 %v1061, %v1081
        %v1087 = vadd.f32 %v1062, %v1082
        %s1088 = scalar_lea.vmem [#allocation2], 8
        %v1089 = vld [vmem:[%s1088] ss:$4 sm:$0xff]
        %s1090 = scalar_lea.vmem [#allocation2], 40
        %v1091 = vld [vmem:[%s1090] ss:$4 sm:$0xff]
        %s1092 = scalar_lea.vmem [#allocation2], 72
        %v1093 = vld [vmem:[%s1092] ss:$4 sm:$0xff]
        %s1094 = scalar_lea.vmem [#allocation2], 104
        %v1095 = vld [vmem:[%s1094] ss:$4 sm:$0xff]
        %s1096 = scalar_lea.vmem [#allocation2], 136
        %v1097 = vld [vmem:[%s1096] ss:$4 sm:$0xff]
        %v1098 = vld [vmem:[%s2 + $0x7] sm:$0x1]
        %v1099 = vlaneseq
        %v1100 = vshrl.u32 %v1099, 7
        %v1101 = vsub.s32 0, %v1100
        %v1102 = vrot.slane %v1098, %v1101
        %v1103 = vmul.f32 %v1089, %v1102
        %v1104 = vmul.f32 %v1091, %v1102
        %v1105 = vmul.f32 %v1093, %v1102
        %v1106 = vmul.f32 %v1095, %v1102
        %v1107 = vmul.f32 %v1097, %v1102
        %v1108 = vadd.f32 %v1083, %v1103
        %v1109 = vadd.f32 %v1084, %v1104
        %v1110 = vadd.f32 %v1085, %v1105
        %v1111 = vadd.f32 %v1086, %v1106
        %v1112 = vadd.f32 %v1087, %v1107
        %s1113 = scalar_lea.vmem [#allocation2], 9
        %v1114 = vld [vmem:[%s1113] ss:$4 sm:$0xff]
        %s1115 = scalar_lea.vmem [#allocation2], 41
        %v1116 = vld [vmem:[%s1115] ss:$4 sm:$0xff]
        %s1117 = scalar_lea.vmem [#allocation2], 73
        %v1118 = vld [vmem:[%s1117] ss:$4 sm:$0xff]
        %s1119 = scalar_lea.vmem [#allocation2], 105
        %v1120 = vld [vmem:[%s1119] ss:$4 sm:$0xff]
        %s1121 = scalar_lea.vmem [#allocation2], 137
        %v1122 = vld [vmem:[%s1121] ss:$4 sm:$0xff]
        %v1123 = vld [vmem:[%s2 + $0x8] sm:$0x1]
        %v1124 = vlaneseq
        %v1125 = vshrl.u32 %v1124, 7
        %v1126 = vsub.s32 0, %v1125
        %v1127 = vrot.slane %v1123, %v1126
        %v1128 = vmul.f32 %v1114, %v1127
        %v1129 = vmul.f32 %v1116, %v1127
        %v1130 = vmul.f32 %v1118, %v1127
        %v1131 = vmul.f32 %v1120, %v1127
        %v1132 = vmul.f32 %v1122, %v1127
        %v1133 = vadd.f32 %v1108, %v1128
        %v1134 = vadd.f32 %v1109, %v1129
        %v1135 = vadd.f32 %v1110, %v1130
        %v1136 = vadd.f32 %v1111, %v1131
        %v1137 = vadd.f32 %v1112, %v1132
        %s1138 = scalar_lea.vmem [#allocation2], 10
        %v1139 = vld [vmem:[%s1138] ss:$4 sm:$0xff]
        %s1140 = scalar_lea.vmem [#allocation2], 42
        %v1141 = vld [vmem:[%s1140] ss:$4 sm:$0xff]
        %s1142 = scalar_lea.vmem [#allocation2], 74
        %v1143 = vld [vmem:[%s1142] ss:$4 sm:$0xff]
        %s1144 = scalar_lea.vmem [#allocation2], 106
        %v1145 = vld [vmem:[%s1144] ss:$4 sm:$0xff]
        %s1146 = scalar_lea.vmem [#allocation2], 138
        %v1147 = vld [vmem:[%s1146] ss:$4 sm:$0xff]
        %v1148 = vld [vmem:[%s2 + $0x9] sm:$0x1]
        %v1149 = vlaneseq
        %v1150 = vshrl.u32 %v1149, 7
        %v1151 = vsub.s32 0, %v1150
        %v1152 = vrot.slane %v1148, %v1151
        %v1153 = vmul.f32 %v1139, %v1152
        %v1154 = vmul.f32 %v1141, %v1152
        %v1155 = vmul.f32 %v1143, %v1152
        %v1156 = vmul.f32 %v1145, %v1152
        %v1157 = vmul.f32 %v1147, %v1152
        %v1158 = vadd.f32 %v1133, %v1153
        %v1159 = vadd.f32 %v1134, %v1154
        %v1160 = vadd.f32 %v1135, %v1155
        %v1161 = vadd.f32 %v1136, %v1156
        %v1162 = vadd.f32 %v1137, %v1157
        %s1163 = scalar_lea.vmem [#allocation2], 11
        %v1164 = vld [vmem:[%s1163] ss:$4 sm:$0xff]
        %s1165 = scalar_lea.vmem [#allocation2], 43
        %v1166 = vld [vmem:[%s1165] ss:$4 sm:$0xff]
        %s1167 = scalar_lea.vmem [#allocation2], 75
        %v1168 = vld [vmem:[%s1167] ss:$4 sm:$0xff]
        %s1169 = scalar_lea.vmem [#allocation2], 107
        %v1170 = vld [vmem:[%s1169] ss:$4 sm:$0xff]
        %s1171 = scalar_lea.vmem [#allocation2], 139
        %v1172 = vld [vmem:[%s1171] ss:$4 sm:$0xff]
        %v1173 = vld [vmem:[%s2 + $0xa] sm:$0x1]
        %v1174 = vlaneseq
        %v1175 = vshrl.u32 %v1174, 7
        %v1176 = vsub.s32 0, %v1175
        %v1177 = vrot.slane %v1173, %v1176
        %v1178 = vmul.f32 %v1164, %v1177
        %v1179 = vmul.f32 %v1166, %v1177
        %v1180 = vmul.f32 %v1168, %v1177
        %v1181 = vmul.f32 %v1170, %v1177
        %v1182 = vmul.f32 %v1172, %v1177
        %v1183 = vadd.f32 %v1158, %v1178
        %v1184 = vadd.f32 %v1159, %v1179
        %v1185 = vadd.f32 %v1160, %v1180
        %v1186 = vadd.f32 %v1161, %v1181
        %v1187 = vadd.f32 %v1162, %v1182
        %s1188 = scalar_lea.vmem [#allocation2], 12
        %v1189 = vld [vmem:[%s1188] ss:$4 sm:$0xff]
        %s1190 = scalar_lea.vmem [#allocation2], 44
        %v1191 = vld [vmem:[%s1190] ss:$4 sm:$0xff]
        %s1192 = scalar_lea.vmem [#allocation2], 76
        %v1193 = vld [vmem:[%s1192] ss:$4 sm:$0xff]
        %s1194 = scalar_lea.vmem [#allocation2], 108
        %v1195 = vld [vmem:[%s1194] ss:$4 sm:$0xff]
        %s1196 = scalar_lea.vmem [#allocation2], 140
        %v1197 = vld [vmem:[%s1196] ss:$4 sm:$0xff]
        %v1198 = vld [vmem:[%s2 + $0xb] sm:$0x1]
        %v1199 = vlaneseq
        %v1200 = vshrl.u32 %v1199, 7
        %v1201 = vsub.s32 0, %v1200
        %v1202 = vrot.slane %v1198, %v1201
        %v1203 = vmul.f32 %v1189, %v1202
        %v1204 = vmul.f32 %v1191, %v1202
        %v1205 = vmul.f32 %v1193, %v1202
        %v1206 = vmul.f32 %v1195, %v1202
        %v1207 = vmul.f32 %v1197, %v1202
        %v1208 = vadd.f32 %v1183, %v1203
        %v1209 = vadd.f32 %v1184, %v1204
        %v1210 = vadd.f32 %v1185, %v1205
        %v1211 = vadd.f32 %v1186, %v1206
        %v1212 = vadd.f32 %v1187, %v1207
        %s1213 = scalar_lea.vmem [#allocation2], 13
        %v1214 = vld [vmem:[%s1213] ss:$4 sm:$0xff]
        %s1215 = scalar_lea.vmem [#allocation2], 45
        %v1216 = vld [vmem:[%s1215] ss:$4 sm:$0xff]
        %s1217 = scalar_lea.vmem [#allocation2], 77
        %v1218 = vld [vmem:[%s1217] ss:$4 sm:$0xff]
        %s1219 = scalar_lea.vmem [#allocation2], 109
        %v1220 = vld [vmem:[%s1219] ss:$4 sm:$0xff]
        %s1221 = scalar_lea.vmem [#allocation2], 141
        %v1222 = vld [vmem:[%s1221] ss:$4 sm:$0xff]
        %v1223 = vld [vmem:[%s2 + $0xc] sm:$0x1]
        %v1224 = vlaneseq
        %v1225 = vshrl.u32 %v1224, 7
        %v1226 = vsub.s32 0, %v1225
        %v1227 = vrot.slane %v1223, %v1226
        %v1228 = vmul.f32 %v1214, %v1227
        %v1229 = vmul.f32 %v1216, %v1227
        %v1230 = vmul.f32 %v1218, %v1227
        %v1231 = vmul.f32 %v1220, %v1227
        %v1232 = vmul.f32 %v1222, %v1227
        %v1233 = vadd.f32 %v1208, %v1228
        %v1234 = vadd.f32 %v1209, %v1229
        %v1235 = vadd.f32 %v1210, %v1230
        %v1236 = vadd.f32 %v1211, %v1231
        %v1237 = vadd.f32 %v1212, %v1232
        %s1238 = scalar_lea.vmem [#allocation2], 14
        %v1239 = vld [vmem:[%s1238] ss:$4 sm:$0xff]
        %s1240 = scalar_lea.vmem [#allocation2], 46
        %v1241 = vld [vmem:[%s1240] ss:$4 sm:$0xff]
        %s1242 = scalar_lea.vmem [#allocation2], 78
        %v1243 = vld [vmem:[%s1242] ss:$4 sm:$0xff]
        %s1244 = scalar_lea.vmem [#allocation2], 110
        %v1245 = vld [vmem:[%s1244] ss:$4 sm:$0xff]
        %s1246 = scalar_lea.vmem [#allocation2], 142
        %v1247 = vld [vmem:[%s1246] ss:$4 sm:$0xff]
        %v1248 = vld [vmem:[%s2 + $0xd] sm:$0x1]
        %v1249 = vlaneseq
        %v1250 = vshrl.u32 %v1249, 7
        %v1251 = vsub.s32 0, %v1250
        %v1252 = vrot.slane %v1248, %v1251
        %v1253 = vmul.f32 %v1239, %v1252
        %v1254 = vmul.f32 %v1241, %v1252
        %v1255 = vmul.f32 %v1243, %v1252
        %v1256 = vmul.f32 %v1245, %v1252
        %v1257 = vmul.f32 %v1247, %v1252
        %v1258 = vadd.f32 %v1233, %v1253
        %v1259 = vadd.f32 %v1234, %v1254
        %v1260 = vadd.f32 %v1235, %v1255
        %v1261 = vadd.f32 %v1236, %v1256
        %v1262 = vadd.f32 %v1237, %v1257
        %s1263 = scalar_lea.vmem [#allocation2], 15
        %v1264 = vld [vmem:[%s1263] ss:$4 sm:$0xff]
        %s1265 = scalar_lea.vmem [#allocation2], 47
        %v1266 = vld [vmem:[%s1265] ss:$4 sm:$0xff]
        %s1267 = scalar_lea.vmem [#allocation2], 79
        %v1268 = vld [vmem:[%s1267] ss:$4 sm:$0xff]
        %s1269 = scalar_lea.vmem [#allocation2], 111
        %v1270 = vld [vmem:[%s1269] ss:$4 sm:$0xff]
        %s1271 = scalar_lea.vmem [#allocation2], 143
        %v1272 = vld [vmem:[%s1271] ss:$4 sm:$0xff]
        %v1273 = vld [vmem:[%s2 + $0xe] sm:$0x1]
        %v1274 = vlaneseq
        %v1275 = vshrl.u32 %v1274, 7
        %v1276 = vsub.s32 0, %v1275
        %v1277 = vrot.slane %v1273, %v1276
        %v1278 = vmul.f32 %v1264, %v1277
        %v1279 = vmul.f32 %v1266, %v1277
        %v1280 = vmul.f32 %v1268, %v1277
        %v1281 = vmul.f32 %v1270, %v1277
        %v1282 = vmul.f32 %v1272, %v1277
        %v1283 = vadd.f32 %v1258, %v1278
        %v1284 = vadd.f32 %v1259, %v1279
        %v1285 = vadd.f32 %v1260, %v1280
        %v1286 = vadd.f32 %v1261, %v1281
        %v1287 = vadd.f32 %v1262, %v1282
        %s1288 = scalar_lea.vmem [#allocation2], 16
        %v1289 = vld [vmem:[%s1288] ss:$4 sm:$0xff]
        %s1290 = scalar_lea.vmem [#allocation2], 48
        %v1291 = vld [vmem:[%s1290] ss:$4 sm:$0xff]
        %s1292 = scalar_lea.vmem [#allocation2], 80
        %v1293 = vld [vmem:[%s1292] ss:$4 sm:$0xff]
        %s1294 = scalar_lea.vmem [#allocation2], 112
        %v1295 = vld [vmem:[%s1294] ss:$4 sm:$0xff]
        %s1296 = scalar_lea.vmem [#allocation2], 144
        %v1297 = vld [vmem:[%s1296] ss:$4 sm:$0xff]
        %v1298 = vld [vmem:[%s2 + $0xf] sm:$0x1]
        %v1299 = vlaneseq
        %v1300 = vshrl.u32 %v1299, 7
        %v1301 = vsub.s32 0, %v1300
        %v1302 = vrot.slane %v1298, %v1301
        %v1303 = vmul.f32 %v1289, %v1302
        %v1304 = vmul.f32 %v1291, %v1302
        %v1305 = vmul.f32 %v1293, %v1302
        %v1306 = vmul.f32 %v1295, %v1302
        %v1307 = vmul.f32 %v1297, %v1302
        %v1308 = vadd.f32 %v1283, %v1303
        %v1309 = vadd.f32 %v1284, %v1304
        %v1310 = vadd.f32 %v1285, %v1305
        %v1311 = vadd.f32 %v1286, %v1306
        %v1312 = vadd.f32 %v1287, %v1307
        %s1313 = scalar_lea.vmem [#allocation2], 17
        %v1314 = vld [vmem:[%s1313] ss:$4 sm:$0xff]
        %s1315 = scalar_lea.vmem [#allocation2], 49
        %v1316 = vld [vmem:[%s1315] ss:$4 sm:$0xff]
        %s1317 = scalar_lea.vmem [#allocation2], 81
        %v1318 = vld [vmem:[%s1317] ss:$4 sm:$0xff]
        %s1319 = scalar_lea.vmem [#allocation2], 113
        %v1320 = vld [vmem:[%s1319] ss:$4 sm:$0xff]
        %s1321 = scalar_lea.vmem [#allocation2], 145
        %v1322 = vld [vmem:[%s1321] ss:$4 sm:$0xff]
        %v1323 = vld [vmem:[%s2 + $0x10] sm:$0x1]
        %v1324 = vlaneseq
        %v1325 = vshrl.u32 %v1324, 7
        %v1326 = vsub.s32 0, %v1325
        %v1327 = vrot.slane %v1323, %v1326
        %v1328 = vmul.f32 %v1314, %v1327
        %v1329 = vmul.f32 %v1316, %v1327
        %v1330 = vmul.f32 %v1318, %v1327
        %v1331 = vmul.f32 %v1320, %v1327
        %v1332 = vmul.f32 %v1322, %v1327
        %v1333 = vadd.f32 %v1308, %v1328
        %v1334 = vadd.f32 %v1309, %v1329
        %v1335 = vadd.f32 %v1310, %v1330
        %v1336 = vadd.f32 %v1311, %v1331
        %v1337 = vadd.f32 %v1312, %v1332
        %s1338 = scalar_lea.vmem [#allocation2], 18
        %v1339 = vld [vmem:[%s1338] ss:$4 sm:$0xff]
        %s1340 = scalar_lea.vmem [#allocation2], 50
        %v1341 = vld [vmem:[%s1340] ss:$4 sm:$0xff]
        %s1342 = scalar_lea.vmem [#allocation2], 82
        %v1343 = vld [vmem:[%s1342] ss:$4 sm:$0xff]
        %s1344 = scalar_lea.vmem [#allocation2], 114
        %v1345 = vld [vmem:[%s1344] ss:$4 sm:$0xff]
        %s1346 = scalar_lea.vmem [#allocation2], 146
        %v1347 = vld [vmem:[%s1346] ss:$4 sm:$0xff]
        %v1348 = vld [vmem:[%s2 + $0x11] sm:$0x1]
        %v1349 = vlaneseq
        %v1350 = vshrl.u32 %v1349, 7
        %v1351 = vsub.s32 0, %v1350
        %v1352 = vrot.slane %v1348, %v1351
        %v1353 = vmul.f32 %v1339, %v1352
        %v1354 = vmul.f32 %v1341, %v1352
        %v1355 = vmul.f32 %v1343, %v1352
        %v1356 = vmul.f32 %v1345, %v1352
        %v1357 = vmul.f32 %v1347, %v1352
        %v1358 = vadd.f32 %v1333, %v1353
        %v1359 = vadd.f32 %v1334, %v1354
        %v1360 = vadd.f32 %v1335, %v1355
        %v1361 = vadd.f32 %v1336, %v1356
        %v1362 = vadd.f32 %v1337, %v1357
        %s1363 = scalar_lea.vmem [#allocation2], 19
        %v1364 = vld [vmem:[%s1363] ss:$4 sm:$0xff]
        %s1365 = scalar_lea.vmem [#allocation2], 51
        %v1366 = vld [vmem:[%s1365] ss:$4 sm:$0xff]
        %s1367 = scalar_lea.vmem [#allocation2], 83
        %v1368 = vld [vmem:[%s1367] ss:$4 sm:$0xff]
        %s1369 = scalar_lea.vmem [#allocation2], 115
        %v1370 = vld [vmem:[%s1369] ss:$4 sm:$0xff]
        %s1371 = scalar_lea.vmem [#allocation2], 147
        %v1372 = vld [vmem:[%s1371] ss:$4 sm:$0xff]
        %v1373 = vld [vmem:[%s2 + $0x12] sm:$0x1]
        %v1374 = vlaneseq
        %v1375 = vshrl.u32 %v1374, 7
        %v1376 = vsub.s32 0, %v1375
        %v1377 = vrot.slane %v1373, %v1376
        %v1378 = vmul.f32 %v1364, %v1377
        %v1379 = vmul.f32 %v1366, %v1377
        %v1380 = vmul.f32 %v1368, %v1377
        %v1381 = vmul.f32 %v1370, %v1377
        %v1382 = vmul.f32 %v1372, %v1377
        %v1383 = vadd.f32 %v1358, %v1378
        %v1384 = vadd.f32 %v1359, %v1379
        %v1385 = vadd.f32 %v1360, %v1380
        %v1386 = vadd.f32 %v1361, %v1381
        %v1387 = vadd.f32 %v1362, %v1382
        %s1388 = scalar_lea.vmem [#allocation2], 20
        %v1389 = vld [vmem:[%s1388] ss:$4 sm:$0xff]
        %s1390 = scalar_lea.vmem [#allocation2], 52
        %v1391 = vld [vmem:[%s1390] ss:$4 sm:$0xff]
        %s1392 = scalar_lea.vmem [#allocation2], 84
        %v1393 = vld [vmem:[%s1392] ss:$4 sm:$0xff]
        %s1394 = scalar_lea.vmem [#allocation2], 116
        %v1395 = vld [vmem:[%s1394] ss:$4 sm:$0xff]
        %s1396 = scalar_lea.vmem [#allocation2], 148
        %v1397 = vld [vmem:[%s1396] ss:$4 sm:$0xff]
        %v1398 = vld [vmem:[%s2 + $0x13] sm:$0x1]
        %v1399 = vlaneseq
        %v1400 = vshrl.u32 %v1399, 7
        %v1401 = vsub.s32 0, %v1400
        %v1402 = vrot.slane %v1398, %v1401
        %v1403 = vmul.f32 %v1389, %v1402
        %v1404 = vmul.f32 %v1391, %v1402
        %v1405 = vmul.f32 %v1393, %v1402
        %v1406 = vmul.f32 %v1395, %v1402
        %v1407 = vmul.f32 %v1397, %v1402
        %v1408 = vadd.f32 %v1383, %v1403
        %v1409 = vadd.f32 %v1384, %v1404
        %v1410 = vadd.f32 %v1385, %v1405
        %v1411 = vadd.f32 %v1386, %v1406
        %v1412 = vadd.f32 %v1387, %v1407
        %s1413 = scalar_lea.vmem [#allocation2], 21
        %v1414 = vld [vmem:[%s1413] ss:$4 sm:$0xff]
        %s1415 = scalar_lea.vmem [#allocation2], 53
        %v1416 = vld [vmem:[%s1415] ss:$4 sm:$0xff]
        %s1417 = scalar_lea.vmem [#allocation2], 85
        %v1418 = vld [vmem:[%s1417] ss:$4 sm:$0xff]
        %s1419 = scalar_lea.vmem [#allocation2], 117
        %v1420 = vld [vmem:[%s1419] ss:$4 sm:$0xff]
        %s1421 = scalar_lea.vmem [#allocation2], 149
        %v1422 = vld [vmem:[%s1421] ss:$4 sm:$0xff]
        %v1423 = vld [vmem:[%s2 + $0x14] sm:$0x1]
        %v1424 = vlaneseq
        %v1425 = vshrl.u32 %v1424, 7
        %v1426 = vsub.s32 0, %v1425
        %v1427 = vrot.slane %v1423, %v1426
        %v1428 = vmul.f32 %v1414, %v1427
        %v1429 = vmul.f32 %v1416, %v1427
        %v1430 = vmul.f32 %v1418, %v1427
        %v1431 = vmul.f32 %v1420, %v1427
        %v1432 = vmul.f32 %v1422, %v1427
        %v1433 = vadd.f32 %v1408, %v1428
        %v1434 = vadd.f32 %v1409, %v1429
        %v1435 = vadd.f32 %v1410, %v1430
        %v1436 = vadd.f32 %v1411, %v1431
        %v1437 = vadd.f32 %v1412, %v1432
        %s1438 = scalar_lea.vmem [#allocation2], 22
        %v1439 = vld [vmem:[%s1438] ss:$4 sm:$0xff]
        %s1440 = scalar_lea.vmem [#allocation2], 54
        %v1441 = vld [vmem:[%s1440] ss:$4 sm:$0xff]
        %s1442 = scalar_lea.vmem [#allocation2], 86
        %v1443 = vld [vmem:[%s1442] ss:$4 sm:$0xff]
        %s1444 = scalar_lea.vmem [#allocation2], 118
        %v1445 = vld [vmem:[%s1444] ss:$4 sm:$0xff]
        %s1446 = scalar_lea.vmem [#allocation2], 150
        %v1447 = vld [vmem:[%s1446] ss:$4 sm:$0xff]
        %v1448 = vld [vmem:[%s2 + $0x15] sm:$0x1]
        %v1449 = vlaneseq
        %v1450 = vshrl.u32 %v1449, 7
        %v1451 = vsub.s32 0, %v1450
        %v1452 = vrot.slane %v1448, %v1451
        %v1453 = vmul.f32 %v1439, %v1452
        %v1454 = vmul.f32 %v1441, %v1452
        %v1455 = vmul.f32 %v1443, %v1452
        %v1456 = vmul.f32 %v1445, %v1452
        %v1457 = vmul.f32 %v1447, %v1452
        %v1458 = vadd.f32 %v1433, %v1453
        %v1459 = vadd.f32 %v1434, %v1454
        %v1460 = vadd.f32 %v1435, %v1455
        %v1461 = vadd.f32 %v1436, %v1456
        %v1462 = vadd.f32 %v1437, %v1457
        %s1463 = scalar_lea.vmem [#allocation2], 23
        %v1464 = vld [vmem:[%s1463] ss:$4 sm:$0xff]
        %s1465 = scalar_lea.vmem [#allocation2], 55
        %v1466 = vld [vmem:[%s1465] ss:$4 sm:$0xff]
        %s1467 = scalar_lea.vmem [#allocation2], 87
        %v1468 = vld [vmem:[%s1467] ss:$4 sm:$0xff]
        %s1469 = scalar_lea.vmem [#allocation2], 119
        %v1470 = vld [vmem:[%s1469] ss:$4 sm:$0xff]
        %s1471 = scalar_lea.vmem [#allocation2], 151
        %v1472 = vld [vmem:[%s1471] ss:$4 sm:$0xff]
        %v1473 = vld [vmem:[%s2 + $0x16] sm:$0x1]
        %v1474 = vlaneseq
        %v1475 = vshrl.u32 %v1474, 7
        %v1476 = vsub.s32 0, %v1475
        %v1477 = vrot.slane %v1473, %v1476
        %v1478 = vmul.f32 %v1464, %v1477
        %v1479 = vmul.f32 %v1466, %v1477
        %v1480 = vmul.f32 %v1468, %v1477
        %v1481 = vmul.f32 %v1470, %v1477
        %v1482 = vmul.f32 %v1472, %v1477
        %v1483 = vadd.f32 %v1458, %v1478
        %v1484 = vadd.f32 %v1459, %v1479
        %v1485 = vadd.f32 %v1460, %v1480
        %v1486 = vadd.f32 %v1461, %v1481
        %v1487 = vadd.f32 %v1462, %v1482
        %s1488 = scalar_lea.vmem [#allocation2], 24
        %v1489 = vld [vmem:[%s1488] ss:$4 sm:$0xff]
        %s1490 = scalar_lea.vmem [#allocation2], 56
        %v1491 = vld [vmem:[%s1490] ss:$4 sm:$0xff]
        %s1492 = scalar_lea.vmem [#allocation2], 88
        %v1493 = vld [vmem:[%s1492] ss:$4 sm:$0xff]
        %s1494 = scalar_lea.vmem [#allocation2], 120
        %v1495 = vld [vmem:[%s1494] ss:$4 sm:$0xff]
        %s1496 = scalar_lea.vmem [#allocation2], 152
        %v1497 = vld [vmem:[%s1496] ss:$4 sm:$0xff]
        %v1498 = vld [vmem:[%s2 + $0x17] sm:$0x1]
        %v1499 = vlaneseq
        %v1500 = vshrl.u32 %v1499, 7
        %v1501 = vsub.s32 0, %v1500
        %v1502 = vrot.slane %v1498, %v1501
        %v1503 = vmul.f32 %v1489, %v1502
        %v1504 = vmul.f32 %v1491, %v1502
        %v1505 = vmul.f32 %v1493, %v1502
        %v1506 = vmul.f32 %v1495, %v1502
        %v1507 = vmul.f32 %v1497, %v1502
        %v1508 = vadd.f32 %v1483, %v1503
        %v1509 = vadd.f32 %v1484, %v1504
        %v1510 = vadd.f32 %v1485, %v1505
        %v1511 = vadd.f32 %v1486, %v1506
        %v1512 = vadd.f32 %v1487, %v1507
        %s1513 = scalar_lea.vmem [#allocation2], 25
        %v1514 = vld [vmem:[%s1513] ss:$4 sm:$0xff]
        %s1515 = scalar_lea.vmem [#allocation2], 57
        %v1516 = vld [vmem:[%s1515] ss:$4 sm:$0xff]
        %s1517 = scalar_lea.vmem [#allocation2], 89
        %v1518 = vld [vmem:[%s1517] ss:$4 sm:$0xff]
        %s1519 = scalar_lea.vmem [#allocation2], 121
        %v1520 = vld [vmem:[%s1519] ss:$4 sm:$0xff]
        %s1521 = scalar_lea.vmem [#allocation2], 153
        %v1522 = vld [vmem:[%s1521] ss:$4 sm:$0xff]
        %v1523 = vld [vmem:[%s2 + $0x18] sm:$0x1]
        %v1524 = vlaneseq
        %v1525 = vshrl.u32 %v1524, 7
        %v1526 = vsub.s32 0, %v1525
        %v1527 = vrot.slane %v1523, %v1526
        %v1528 = vmul.f32 %v1514, %v1527
        %v1529 = vmul.f32 %v1516, %v1527
        %v1530 = vmul.f32 %v1518, %v1527
        %v1531 = vmul.f32 %v1520, %v1527
        %v1532 = vmul.f32 %v1522, %v1527
        %v1533 = vadd.f32 %v1508, %v1528
        %v1534 = vadd.f32 %v1509, %v1529
        %v1535 = vadd.f32 %v1510, %v1530
        %v1536 = vadd.f32 %v1511, %v1531
        %v1537 = vadd.f32 %v1512, %v1532
        %s1538 = scalar_lea.vmem [#allocation2], 26
        %v1539 = vld [vmem:[%s1538] ss:$4 sm:$0xff]
        %s1540 = scalar_lea.vmem [#allocation2], 58
        %v1541 = vld [vmem:[%s1540] ss:$4 sm:$0xff]
        %s1542 = scalar_lea.vmem [#allocation2], 90
        %v1543 = vld [vmem:[%s1542] ss:$4 sm:$0xff]
        %s1544 = scalar_lea.vmem [#allocation2], 122
        %v1545 = vld [vmem:[%s1544] ss:$4 sm:$0xff]
        %s1546 = scalar_lea.vmem [#allocation2], 154
        %v1547 = vld [vmem:[%s1546] ss:$4 sm:$0xff]
        %v1548 = vld [vmem:[%s2 + $0x19] sm:$0x1]
        %v1549 = vlaneseq
        %v1550 = vshrl.u32 %v1549, 7
        %v1551 = vsub.s32 0, %v1550
        %v1552 = vrot.slane %v1548, %v1551
        %v1553 = vmul.f32 %v1539, %v1552
        %v1554 = vmul.f32 %v1541, %v1552
        %v1555 = vmul.f32 %v1543, %v1552
        %v1556 = vmul.f32 %v1545, %v1552
        %v1557 = vmul.f32 %v1547, %v1552
        %v1558 = vadd.f32 %v1533, %v1553
        %v1559 = vadd.f32 %v1534, %v1554
        %v1560 = vadd.f32 %v1535, %v1555
        %v1561 = vadd.f32 %v1536, %v1556
        %v1562 = vadd.f32 %v1537, %v1557
        %s1563 = scalar_lea.vmem [#allocation2], 27
        %v1564 = vld [vmem:[%s1563] ss:$4 sm:$0xff]
        %s1565 = scalar_lea.vmem [#allocation2], 59
        %v1566 = vld [vmem:[%s1565] ss:$4 sm:$0xff]
        %s1567 = scalar_lea.vmem [#allocation2], 91
        %v1568 = vld [vmem:[%s1567] ss:$4 sm:$0xff]
        %s1569 = scalar_lea.vmem [#allocation2], 123
        %v1570 = vld [vmem:[%s1569] ss:$4 sm:$0xff]
        %s1571 = scalar_lea.vmem [#allocation2], 155
        %v1572 = vld [vmem:[%s1571] ss:$4 sm:$0xff]
        %v1573 = vld [vmem:[%s2 + $0x1a] sm:$0x1]
        %v1574 = vlaneseq
        %v1575 = vshrl.u32 %v1574, 7
        %v1576 = vsub.s32 0, %v1575
        %v1577 = vrot.slane %v1573, %v1576
        %v1578 = vmul.f32 %v1564, %v1577
        %v1579 = vmul.f32 %v1566, %v1577
        %v1580 = vmul.f32 %v1568, %v1577
        %v1581 = vmul.f32 %v1570, %v1577
        %v1582 = vmul.f32 %v1572, %v1577
        %v1583 = vadd.f32 %v1558, %v1578
        %v1584 = vadd.f32 %v1559, %v1579
        %v1585 = vadd.f32 %v1560, %v1580
        %v1586 = vadd.f32 %v1561, %v1581
        %v1587 = vadd.f32 %v1562, %v1582
        %s1588 = scalar_lea.vmem [#allocation2], 28
        %v1589 = vld [vmem:[%s1588] ss:$4 sm:$0xff]
        %s1590 = scalar_lea.vmem [#allocation2], 60
        %v1591 = vld [vmem:[%s1590] ss:$4 sm:$0xff]
        %s1592 = scalar_lea.vmem [#allocation2], 92
        %v1593 = vld [vmem:[%s1592] ss:$4 sm:$0xff]
        %s1594 = scalar_lea.vmem [#allocation2], 124
        %v1595 = vld [vmem:[%s1594] ss:$4 sm:$0xff]
        %s1596 = scalar_lea.vmem [#allocation2], 156
        %v1597 = vld [vmem:[%s1596] ss:$4 sm:$0xff]
        %v1598 = vld [vmem:[%s2 + $0x1b] sm:$0x1]
        %v1599 = vlaneseq
        %v1600 = vshrl.u32 %v1599, 7
        %v1601 = vsub.s32 0, %v1600
        %v1602 = vrot.slane %v1598, %v1601
        %v1603 = vmul.f32 %v1589, %v1602
        %v1604 = vmul.f32 %v1591, %v1602
        %v1605 = vmul.f32 %v1593, %v1602
        %v1606 = vmul.f32 %v1595, %v1602
        %v1607 = vmul.f32 %v1597, %v1602
        %v1608 = vadd.f32 %v1583, %v1603
        %v1609 = vadd.f32 %v1584, %v1604
        %v1610 = vadd.f32 %v1585, %v1605
        %v1611 = vadd.f32 %v1586, %v1606
        %v1612 = vadd.f32 %v1587, %v1607
        %s1613 = scalar_lea.vmem [#allocation2], 29
        %v1614 = vld [vmem:[%s1613] ss:$4 sm:$0xff]
        %s1615 = scalar_lea.vmem [#allocation2], 61
        %v1616 = vld [vmem:[%s1615] ss:$4 sm:$0xff]
        %s1617 = scalar_lea.vmem [#allocation2], 93
        %v1618 = vld [vmem:[%s1617] ss:$4 sm:$0xff]
        %s1619 = scalar_lea.vmem [#allocation2], 125
        %v1620 = vld [vmem:[%s1619] ss:$4 sm:$0xff]
        %s1621 = scalar_lea.vmem [#allocation2], 157
        %v1622 = vld [vmem:[%s1621] ss:$4 sm:$0xff]
        %v1623 = vld [vmem:[%s2 + $0x1c] sm:$0x1]
        %v1624 = vlaneseq
        %v1625 = vshrl.u32 %v1624, 7
        %v1626 = vsub.s32 0, %v1625
        %v1627 = vrot.slane %v1623, %v1626
        %v1628 = vmul.f32 %v1614, %v1627
        %v1629 = vmul.f32 %v1616, %v1627
        %v1630 = vmul.f32 %v1618, %v1627
        %v1631 = vmul.f32 %v1620, %v1627
        %v1632 = vmul.f32 %v1622, %v1627
        %v1633 = vadd.f32 %v1608, %v1628
        %v1634 = vadd.f32 %v1609, %v1629
        %v1635 = vadd.f32 %v1610, %v1630
        %v1636 = vadd.f32 %v1611, %v1631
        %v1637 = vadd.f32 %v1612, %v1632
        %s1638 = scalar_lea.vmem [#allocation2], 30
        %v1639 = vld [vmem:[%s1638] ss:$4 sm:$0xff]
        %s1640 = scalar_lea.vmem [#allocation2], 62
        %v1641 = vld [vmem:[%s1640] ss:$4 sm:$0xff]
        %s1642 = scalar_lea.vmem [#allocation2], 94
        %v1643 = vld [vmem:[%s1642] ss:$4 sm:$0xff]
        %s1644 = scalar_lea.vmem [#allocation2], 126
        %v1645 = vld [vmem:[%s1644] ss:$4 sm:$0xff]
        %s1646 = scalar_lea.vmem [#allocation2], 158
        %v1647 = vld [vmem:[%s1646] ss:$4 sm:$0xff]
        %v1648 = vld [vmem:[%s2 + $0x1d] sm:$0x1]
        %v1649 = vlaneseq
        %v1650 = vshrl.u32 %v1649, 7
        %v1651 = vsub.s32 0, %v1650
        %v1652 = vrot.slane %v1648, %v1651
        %v1653 = vmul.f32 %v1639, %v1652
        %v1654 = vmul.f32 %v1641, %v1652
        %v1655 = vmul.f32 %v1643, %v1652
        %v1656 = vmul.f32 %v1645, %v1652
        %v1657 = vmul.f32 %v1647, %v1652
        %v1658 = vadd.f32 %v1633, %v1653
        %v1659 = vadd.f32 %v1634, %v1654
        %v1660 = vadd.f32 %v1635, %v1655
        %v1661 = vadd.f32 %v1636, %v1656
        %v1662 = vadd.f32 %v1637, %v1657
        %s1663 = scalar_lea.vmem [#allocation2], 31
        %v1664 = vld [vmem:[%s1663] ss:$4 sm:$0xff]
        %s1665 = scalar_lea.vmem [#allocation2], 63
        %v1666 = vld [vmem:[%s1665] ss:$4 sm:$0xff]
        %s1667 = scalar_lea.vmem [#allocation2], 95
        %v1668 = vld [vmem:[%s1667] ss:$4 sm:$0xff]
        %s1669 = scalar_lea.vmem [#allocation2], 127
        %v1670 = vld [vmem:[%s1669] ss:$4 sm:$0xff]
        %s1671 = scalar_lea.vmem [#allocation2], 159
        %v1672 = vld [vmem:[%s1671] ss:$4 sm:$0xff]
        %v1673 = vld [vmem:[%s2 + $0x1e] sm:$0x1]
        %v1674 = vlaneseq
        %v1675 = vshrl.u32 %v1674, 7
        %v1676 = vsub.s32 0, %v1675
        %v1677 = vrot.slane %v1673, %v1676
        %v1678 = vmul.f32 %v1664, %v1677
        %v1679 = vmul.f32 %v1666, %v1677
        %v1680 = vmul.f32 %v1668, %v1677
        %v1681 = vmul.f32 %v1670, %v1677
        %v1682 = vmul.f32 %v1672, %v1677
        %v1683 = vadd.f32 %v1658, %v1678
        %v1684 = vadd.f32 %v1659, %v1679
        %v1685 = vadd.f32 %v1660, %v1680
        %v1686 = vadd.f32 %v1661, %v1681
        %v1687 = vadd.f32 %v1662, %v1682
        %s1688 = scalar_lea.vmem [#allocation2], 32
        %v1689 = vld [vmem:[%s1688] ss:$4 sm:$0xff]
        %s1690 = scalar_lea.vmem [#allocation2], 64
        %v1691 = vld [vmem:[%s1690] ss:$4 sm:$0xff]
        %s1692 = scalar_lea.vmem [#allocation2], 96
        %v1693 = vld [vmem:[%s1692] ss:$4 sm:$0xff]
        %s1694 = scalar_lea.vmem [#allocation2], 128
        %v1695 = vld [vmem:[%s1694] ss:$4 sm:$0xff]
        %s1696 = scalar_lea.vmem [#allocation2], 160
        %v1697 = vld [vmem:[%s1696] ss:$4 sm:$0xff]
        %v1698 = vld [vmem:[%s2 + $0x1f] sm:$0x1]
        %v1699 = vlaneseq
        %v1700 = vshrl.u32 %v1699, 7
        %v1701 = vsub.s32 0, %v1700
        %v1702 = vrot.slane %v1698, %v1701
        %v1703 = vmul.f32 %v1689, %v1702
        %v1704 = vmul.f32 %v1691, %v1702
        %v1705 = vmul.f32 %v1693, %v1702
        %v1706 = vmul.f32 %v1695, %v1702
        %v1707 = vmul.f32 %v1697, %v1702
        %v1708 = vadd.f32 %v1683, %v1703
        %v1709 = vadd.f32 %v1684, %v1704
        %v1710 = vadd.f32 %v1685, %v1705
        %v1711 = vadd.f32 %v1686, %v1706
        %v1712 = vadd.f32 %v1687, %v1707
        %s1713 = scalar_lea.vmem [#allocation2], 161
        %v1714 = vld [vmem:[%s1713] ss:$4 sm:$0xff]
        %v1715 = vld [vmem:[%s2 + $0x20] sm:$0x1]
        %v1716 = vlaneseq
        %v1717 = vshrl.u32 %v1716, 7
        %v1718 = vsub.s32 0, %v1717
        %v1719 = vrot.slane %v1715, %v1718
        %v1720 = vmul.f32 %v916, %v1719
        %v1721 = vmul.f32 %v918, %v1719
        %v1722 = vmul.f32 %v920, %v1719
        %v1723 = vmul.f32 %v922, %v1719
        %v1724 = vmul.f32 %v1714, %v1719
        %v1725 = vadd.f32 %v1708, %v1720
        %v1726 = vadd.f32 %v1709, %v1721
        %v1727 = vadd.f32 %v1710, %v1722
        %v1728 = vadd.f32 %v1711, %v1723
        %v1729 = vadd.f32 %v1712, %v1724
        %s1730 = scalar_lea.vmem [#allocation2], 162
        %v1731 = vld [vmem:[%s1730] ss:$4 sm:$0xff]
        %v1732 = vld [vmem:[%s2 + $0x21] sm:$0x1]
        %v1733 = vlaneseq
        %v1734 = vshrl.u32 %v1733, 7
        %v1735 = vsub.s32 0, %v1734
        %v1736 = vrot.slane %v1732, %v1735
        %v1737 = vmul.f32 %v941, %v1736
        %v1738 = vmul.f32 %v943, %v1736
        %v1739 = vmul.f32 %v945, %v1736
        %v1740 = vmul.f32 %v947, %v1736
        %v1741 = vmul.f32 %v1731, %v1736
        %v1742 = vadd.f32 %v1725, %v1737
        %v1743 = vadd.f32 %v1726, %v1738
        %v1744 = vadd.f32 %v1727, %v1739
        %v1745 = vadd.f32 %v1728, %v1740
        %v1746 = vadd.f32 %v1729, %v1741
        %s1747 = scalar_lea.vmem [#allocation2], 163
        %v1748 = vld [vmem:[%s1747] ss:$4 sm:$0xff]
        %v1749 = vld [vmem:[%s2 + $0x22] sm:$0x1]
        %v1750 = vlaneseq
        %v1751 = vshrl.u32 %v1750, 7
        %v1752 = vsub.s32 0, %v1751
        %v1753 = vrot.slane %v1749, %v1752
        %v1754 = vmul.f32 %v966, %v1753
        %v1755 = vmul.f32 %v968, %v1753
        %v1756 = vmul.f32 %v970, %v1753
        %v1757 = vmul.f32 %v972, %v1753
        %v1758 = vmul.f32 %v1748, %v1753
        %v1759 = vadd.f32 %v1742, %v1754
        %v1760 = vadd.f32 %v1743, %v1755
        %v1761 = vadd.f32 %v1744, %v1756
        %v1762 = vadd.f32 %v1745, %v1757
        %v1763 = vadd.f32 %v1746, %v1758
        %s1764 = scalar_lea.vmem [#allocation2], 164
        %v1765 = vld [vmem:[%s1764] ss:$4 sm:$0xff]
        %v1766 = vld [vmem:[%s2 + $0x23] sm:$0x1]
        %v1767 = vlaneseq
        %v1768 = vshrl.u32 %v1767, 7
        %v1769 = vsub.s32 0, %v1768
        %v1770 = vrot.slane %v1766, %v1769
        %v1771 = vmul.f32 %v991, %v1770
        %v1772 = vmul.f32 %v993, %v1770
        %v1773 = vmul.f32 %v995, %v1770
        %v1774 = vmul.f32 %v997, %v1770
        %v1775 = vmul.f32 %v1765, %v1770
        %v1776 = vadd.f32 %v1759, %v1771
        %v1777 = vadd.f32 %v1760, %v1772
        %v1778 = vadd.f32 %v1761, %v1773
        %v1779 = vadd.f32 %v1762, %v1774
        %v1780 = vadd.f32 %v1763, %v1775
        %s1781 = scalar_lea.vmem [#allocation2], 165
        %v1782 = vld [vmem:[%s1781] ss:$4 sm:$0xff]
        %v1783 = vld [vmem:[%s2 + $0x24] sm:$0x1]
        %v1784 = vlaneseq
        %v1785 = vshrl.u32 %v1784, 7
        %v1786 = vsub.s32 0, %v1785
        %v1787 = vrot.slane %v1783, %v1786
        %v1788 = vmul.f32 %v1016, %v1787
        %v1789 = vmul.f32 %v1018, %v1787
        %v1790 = vmul.f32 %v1020, %v1787
        %v1791 = vmul.f32 %v1022, %v1787
        %v1792 = vmul.f32 %v1782, %v1787
        %v1793 = vadd.f32 %v1776, %v1788
        %v1794 = vadd.f32 %v1777, %v1789
        %v1795 = vadd.f32 %v1778, %v1790
        %v1796 = vadd.f32 %v1779, %v1791
        %v1797 = vadd.f32 %v1780, %v1792
        %s1798 = scalar_lea.vmem [#allocation2], 166
        %v1799 = vld [vmem:[%s1798] ss:$4 sm:$0xff]
        %v1800 = vld [vmem:[%s2 + $0x25] sm:$0x1]
        %v1801 = vlaneseq
        %v1802 = vshrl.u32 %v1801, 7
        %v1803 = vsub.s32 0, %v1802
        %v1804 = vrot.slane %v1800, %v1803
        %v1805 = vmul.f32 %v1041, %v1804
        %v1806 = vmul.f32 %v1043, %v1804
        %v1807 = vmul.f32 %v1045, %v1804
        %v1808 = vmul.f32 %v1047, %v1804
        %v1809 = vmul.f32 %v1799, %v1804
        %v1810 = vadd.f32 %v1793, %v1805
        %v1811 = vadd.f32 %v1794, %v1806
        %v1812 = vadd.f32 %v1795, %v1807
        %v1813 = vadd.f32 %v1796, %v1808
        %v1814 = vadd.f32 %v1797, %v1809
        %s1815 = scalar_lea.vmem [#allocation2], 167
        %v1816 = vld [vmem:[%s1815] ss:$4 sm:$0xff]
        %v1817 = vld [vmem:[%s2 + $0x26] sm:$0x1]
        %v1818 = vlaneseq
        %v1819 = vshrl.u32 %v1818, 7
        %v1820 = vsub.s32 0, %v1819
        %v1821 = vrot.slane %v1817, %v1820
        %v1822 = vmul.f32 %v1066, %v1821
        %v1823 = vmul.f32 %v1068, %v1821
        %v1824 = vmul.f32 %v1070, %v1821
        %v1825 = vmul.f32 %v1072, %v1821
        %v1826 = vmul.f32 %v1816, %v1821
        %v1827 = vadd.f32 %v1810, %v1822
        %v1828 = vadd.f32 %v1811, %v1823
        %v1829 = vadd.f32 %v1812, %v1824
        %v1830 = vadd.f32 %v1813, %v1825
        %v1831 = vadd.f32 %v1814, %v1826
        %s1832 = scalar_lea.vmem [#allocation2], 168
        %v1833 = vld [vmem:[%s1832] ss:$4 sm:$0xff]
        %v1834 = vld [vmem:[%s2 + $0x27] sm:$0x1]
        %v1835 = vlaneseq
        %v1836 = vshrl.u32 %v1835, 7
        %v1837 = vsub.s32 0, %v1836
        %v1838 = vrot.slane %v1834, %v1837
        %v1839 = vmul.f32 %v1091, %v1838
        %v1840 = vmul.f32 %v1093, %v1838
        %v1841 = vmul.f32 %v1095, %v1838
        %v1842 = vmul.f32 %v1097, %v1838
        %v1843 = vmul.f32 %v1833, %v1838
        %v1844 = vadd.f32 %v1827, %v1839
        %v1845 = vadd.f32 %v1828, %v1840
        %v1846 = vadd.f32 %v1829, %v1841
        %v1847 = vadd.f32 %v1830, %v1842
        %v1848 = vadd.f32 %v1831, %v1843
        %s1849 = scalar_lea.vmem [#allocation2], 169
        %v1850 = vld [vmem:[%s1849] ss:$4 sm:$0xff]
        %v1851 = vld [vmem:[%s2 + $0x28] sm:$0x1]
        %v1852 = vlaneseq
        %v1853 = vshrl.u32 %v1852, 7
        %v1854 = vsub.s32 0, %v1853
        %v1855 = vrot.slane %v1851, %v1854
        %v1856 = vmul.f32 %v1116, %v1855
        %v1857 = vmul.f32 %v1118, %v1855
        %v1858 = vmul.f32 %v1120, %v1855
        %v1859 = vmul.f32 %v1122, %v1855
        %v1860 = vmul.f32 %v1850, %v1855
        %v1861 = vadd.f32 %v1844, %v1856
        %v1862 = vadd.f32 %v1845, %v1857
        %v1863 = vadd.f32 %v1846, %v1858
        %v1864 = vadd.f32 %v1847, %v1859
        %v1865 = vadd.f32 %v1848, %v1860
        %s1866 = scalar_lea.vmem [#allocation2], 170
        %v1867 = vld [vmem:[%s1866] ss:$4 sm:$0xff]
        %v1868 = vld [vmem:[%s2 + $0x29] sm:$0x1]
        %v1869 = vlaneseq
        %v1870 = vshrl.u32 %v1869, 7
        %v1871 = vsub.s32 0, %v1870
        %v1872 = vrot.slane %v1868, %v1871
        %v1873 = vmul.f32 %v1141, %v1872
        %v1874 = vmul.f32 %v1143, %v1872
        %v1875 = vmul.f32 %v1145, %v1872
        %v1876 = vmul.f32 %v1147, %v1872
        %v1877 = vmul.f32 %v1867, %v1872
        %v1878 = vadd.f32 %v1861, %v1873
        %v1879 = vadd.f32 %v1862, %v1874
        %v1880 = vadd.f32 %v1863, %v1875
        %v1881 = vadd.f32 %v1864, %v1876
        %v1882 = vadd.f32 %v1865, %v1877
        %s1883 = scalar_lea.vmem [#allocation2], 171
        %v1884 = vld [vmem:[%s1883] ss:$4 sm:$0xff]
        %v1885 = vld [vmem:[%s2 + $0x2a] sm:$0x1]
        %v1886 = vlaneseq
        %v1887 = vshrl.u32 %v1886, 7
        %v1888 = vsub.s32 0, %v1887
        %v1889 = vrot.slane %v1885, %v1888
        %v1890 = vmul.f32 %v1166, %v1889
        %v1891 = vmul.f32 %v1168, %v1889
        %v1892 = vmul.f32 %v1170, %v1889
        %v1893 = vmul.f32 %v1172, %v1889
        %v1894 = vmul.f32 %v1884, %v1889
        %v1895 = vadd.f32 %v1878, %v1890
        %v1896 = vadd.f32 %v1879, %v1891
        %v1897 = vadd.f32 %v1880, %v1892
        %v1898 = vadd.f32 %v1881, %v1893
        %v1899 = vadd.f32 %v1882, %v1894
        %s1900 = scalar_lea.vmem [#allocation2], 172
        %v1901 = vld [vmem:[%s1900] ss:$4 sm:$0xff]
        %v1902 = vld [vmem:[%s2 + $0x2b] sm:$0x1]
        %v1903 = vlaneseq
        %v1904 = vshrl.u32 %v1903, 7
        %v1905 = vsub.s32 0, %v1904
        %v1906 = vrot.slane %v1902, %v1905
        %v1907 = vmul.f32 %v1191, %v1906
        %v1908 = vmul.f32 %v1193, %v1906
        %v1909 = vmul.f32 %v1195, %v1906
        %v1910 = vmul.f32 %v1197, %v1906
        %v1911 = vmul.f32 %v1901, %v1906
        %v1912 = vadd.f32 %v1895, %v1907
        %v1913 = vadd.f32 %v1896, %v1908
        %v1914 = vadd.f32 %v1897, %v1909
        %v1915 = vadd.f32 %v1898, %v1910
        %v1916 = vadd.f32 %v1899, %v1911
        %s1917 = scalar_lea.vmem [#allocation2], 173
        %v1918 = vld [vmem:[%s1917] ss:$4 sm:$0xff]
        %v1919 = vld [vmem:[%s2 + $0x2c] sm:$0x1]
        %v1920 = vlaneseq
        %v1921 = vshrl.u32 %v1920, 7
        %v1922 = vsub.s32 0, %v1921
        %v1923 = vrot.slane %v1919, %v1922
        %v1924 = vmul.f32 %v1216, %v1923
        %v1925 = vmul.f32 %v1218, %v1923
        %v1926 = vmul.f32 %v1220, %v1923
        %v1927 = vmul.f32 %v1222, %v1923
        %v1928 = vmul.f32 %v1918, %v1923
        %v1929 = vadd.f32 %v1912, %v1924
        %v1930 = vadd.f32 %v1913, %v1925
        %v1931 = vadd.f32 %v1914, %v1926
        %v1932 = vadd.f32 %v1915, %v1927
        %v1933 = vadd.f32 %v1916, %v1928
        %s1934 = scalar_lea.vmem [#allocation2], 174
        %v1935 = vld [vmem:[%s1934] ss:$4 sm:$0xff]
        %v1936 = vld [vmem:[%s2 + $0x2d] sm:$0x1]
        %v1937 = vlaneseq
        %v1938 = vshrl.u32 %v1937, 7
        %v1939 = vsub.s32 0, %v1938
        %v1940 = vrot.slane %v1936, %v1939
        %v1941 = vmul.f32 %v1241, %v1940
        %v1942 = vmul.f32 %v1243, %v1940
        %v1943 = vmul.f32 %v1245, %v1940
        %v1944 = vmul.f32 %v1247, %v1940
        %v1945 = vmul.f32 %v1935, %v1940
        %v1946 = vadd.f32 %v1929, %v1941
        %v1947 = vadd.f32 %v1930, %v1942
        %v1948 = vadd.f32 %v1931, %v1943
        %v1949 = vadd.f32 %v1932, %v1944
        %v1950 = vadd.f32 %v1933, %v1945
        %s1951 = scalar_lea.vmem [#allocation2], 175
        %v1952 = vld [vmem:[%s1951] ss:$4 sm:$0xff]
        %v1953 = vld [vmem:[%s2 + $0x2e] sm:$0x1]
        %v1954 = vlaneseq
        %v1955 = vshrl.u32 %v1954, 7
        %v1956 = vsub.s32 0, %v1955
        %v1957 = vrot.slane %v1953, %v1956
        %v1958 = vmul.f32 %v1266, %v1957
        %v1959 = vmul.f32 %v1268, %v1957
        %v1960 = vmul.f32 %v1270, %v1957
        %v1961 = vmul.f32 %v1272, %v1957
        %v1962 = vmul.f32 %v1952, %v1957
        %v1963 = vadd.f32 %v1946, %v1958
        %v1964 = vadd.f32 %v1947, %v1959
        %v1965 = vadd.f32 %v1948, %v1960
        %v1966 = vadd.f32 %v1949, %v1961
        %v1967 = vadd.f32 %v1950, %v1962
        %s1968 = scalar_lea.vmem [#allocation2], 176
        %v1969 = vld [vmem:[%s1968] ss:$4 sm:$0xff]
        %v1970 = vld [vmem:[%s2 + $0x2f] sm:$0x1]
        %v1971 = vlaneseq
        %v1972 = vshrl.u32 %v1971, 7
        %v1973 = vsub.s32 0, %v1972
        %v1974 = vrot.slane %v1970, %v1973
        %v1975 = vmul.f32 %v1291, %v1974
        %v1976 = vmul.f32 %v1293, %v1974
        %v1977 = vmul.f32 %v1295, %v1974
        %v1978 = vmul.f32 %v1297, %v1974
        %v1979 = vmul.f32 %v1969, %v1974
        %v1980 = vadd.f32 %v1963, %v1975
        %v1981 = vadd.f32 %v1964, %v1976
        %v1982 = vadd.f32 %v1965, %v1977
        %v1983 = vadd.f32 %v1966, %v1978
        %v1984 = vadd.f32 %v1967, %v1979
        %s1985 = scalar_lea.vmem [#allocation2], 177
        %v1986 = vld [vmem:[%s1985] ss:$4 sm:$0xff]
        %v1987 = vld [vmem:[%s2 + $0x30] sm:$0x1]
        %v1988 = vlaneseq
        %v1989 = vshrl.u32 %v1988, 7
        %v1990 = vsub.s32 0, %v1989
        %v1991 = vrot.slane %v1987, %v1990
        %v1992 = vmul.f32 %v1316, %v1991
        %v1993 = vmul.f32 %v1318, %v1991
        %v1994 = vmul.f32 %v1320, %v1991
        %v1995 = vmul.f32 %v1322, %v1991
        %v1996 = vmul.f32 %v1986, %v1991
        %v1997 = vadd.f32 %v1980, %v1992
        %v1998 = vadd.f32 %v1981, %v1993
        %v1999 = vadd.f32 %v1982, %v1994
        %v2000 = vadd.f32 %v1983, %v1995
        %v2001 = vadd.f32 %v1984, %v1996
        %s2002 = scalar_lea.vmem [#allocation2], 178
        %v2003 = vld [vmem:[%s2002] ss:$4 sm:$0xff]
        %v2004 = vld [vmem:[%s2 + $0x31] sm:$0x1]
        %v2005 = vlaneseq
        %v2006 = vshrl.u32 %v2005, 7
        %v2007 = vsub.s32 0, %v2006
        %v2008 = vrot.slane %v2004, %v2007
        %v2009 = vmul.f32 %v1341, %v2008
        %v2010 = vmul.f32 %v1343, %v2008
        %v2011 = vmul.f32 %v1345, %v2008
        %v2012 = vmul.f32 %v1347, %v2008
        %v2013 = vmul.f32 %v2003, %v2008
        %v2014 = vadd.f32 %v1997, %v2009
        %v2015 = vadd.f32 %v1998, %v2010
        %v2016 = vadd.f32 %v1999, %v2011
        %v2017 = vadd.f32 %v2000, %v2012
        %v2018 = vadd.f32 %v2001, %v2013
        %s2019 = scalar_lea.vmem [#allocation2], 179
        %v2020 = vld [vmem:[%s2019] ss:$4 sm:$0xff]
        %v2021 = vld [vmem:[%s2 + $0x32] sm:$0x1]
        %v2022 = vlaneseq
        %v2023 = vshrl.u32 %v2022, 7
        %v2024 = vsub.s32 0, %v2023
        %v2025 = vrot.slane %v2021, %v2024
        %v2026 = vmul.f32 %v1366, %v2025
        %v2027 = vmul.f32 %v1368, %v2025
        %v2028 = vmul.f32 %v1370, %v2025
        %v2029 = vmul.f32 %v1372, %v2025
        %v2030 = vmul.f32 %v2020, %v2025
        %v2031 = vadd.f32 %v2014, %v2026
        %v2032 = vadd.f32 %v2015, %v2027
        %v2033 = vadd.f32 %v2016, %v2028
        %v2034 = vadd.f32 %v2017, %v2029
        %v2035 = vadd.f32 %v2018, %v2030
        %s2036 = scalar_lea.vmem [#allocation2], 180
        %v2037 = vld [vmem:[%s2036] ss:$4 sm:$0xff]
        %v2038 = vld [vmem:[%s2 + $0x33] sm:$0x1]
        %v2039 = vlaneseq
        %v2040 = vshrl.u32 %v2039, 7
        %v2041 = vsub.s32 0, %v2040
        %v2042 = vrot.slane %v2038, %v2041
        %v2043 = vmul.f32 %v1391, %v2042
        %v2044 = vmul.f32 %v1393, %v2042
        %v2045 = vmul.f32 %v1395, %v2042
        %v2046 = vmul.f32 %v1397, %v2042
        %v2047 = vmul.f32 %v2037, %v2042
        %v2048 = vadd.f32 %v2031, %v2043
        %v2049 = vadd.f32 %v2032, %v2044
        %v2050 = vadd.f32 %v2033, %v2045
        %v2051 = vadd.f32 %v2034, %v2046
        %v2052 = vadd.f32 %v2035, %v2047
        %s2053 = scalar_lea.vmem [#allocation2], 181
        %v2054 = vld [vmem:[%s2053] ss:$4 sm:$0xff]
        %v2055 = vld [vmem:[%s2 + $0x34] sm:$0x1]
        %v2056 = vlaneseq
        %v2057 = vshrl.u32 %v2056, 7
        %v2058 = vsub.s32 0, %v2057
        %v2059 = vrot.slane %v2055, %v2058
        %v2060 = vmul.f32 %v1416, %v2059
        %v2061 = vmul.f32 %v1418, %v2059
        %v2062 = vmul.f32 %v1420, %v2059
        %v2063 = vmul.f32 %v1422, %v2059
        %v2064 = vmul.f32 %v2054, %v2059
        %v2065 = vadd.f32 %v2048, %v2060
        %v2066 = vadd.f32 %v2049, %v2061
        %v2067 = vadd.f32 %v2050, %v2062
        %v2068 = vadd.f32 %v2051, %v2063
        %v2069 = vadd.f32 %v2052, %v2064
        %s2070 = scalar_lea.vmem [#allocation2], 182
        %v2071 = vld [vmem:[%s2070] ss:$4 sm:$0xff]
        %v2072 = vld [vmem:[%s2 + $0x35] sm:$0x1]
        %v2073 = vlaneseq
        %v2074 = vshrl.u32 %v2073, 7
        %v2075 = vsub.s32 0, %v2074
        %v2076 = vrot.slane %v2072, %v2075
        %v2077 = vmul.f32 %v1441, %v2076
        %v2078 = vmul.f32 %v1443, %v2076
        %v2079 = vmul.f32 %v1445, %v2076
        %v2080 = vmul.f32 %v1447, %v2076
        %v2081 = vmul.f32 %v2071, %v2076
        %v2082 = vadd.f32 %v2065, %v2077
        %v2083 = vadd.f32 %v2066, %v2078
        %v2084 = vadd.f32 %v2067, %v2079
        %v2085 = vadd.f32 %v2068, %v2080
        %v2086 = vadd.f32 %v2069, %v2081
        %s2087 = scalar_lea.vmem [#allocation2], 183
        %v2088 = vld [vmem:[%s2087] ss:$4 sm:$0xff]
        %v2089 = vld [vmem:[%s2 + $0x36] sm:$0x1]
        %v2090 = vlaneseq
        %v2091 = vshrl.u32 %v2090, 7
        %v2092 = vsub.s32 0, %v2091
        %v2093 = vrot.slane %v2089, %v2092
        %v2094 = vmul.f32 %v1466, %v2093
        %v2095 = vmul.f32 %v1468, %v2093
        %v2096 = vmul.f32 %v1470, %v2093
        %v2097 = vmul.f32 %v1472, %v2093
        %v2098 = vmul.f32 %v2088, %v2093
        %v2099 = vadd.f32 %v2082, %v2094
        %v2100 = vadd.f32 %v2083, %v2095
        %v2101 = vadd.f32 %v2084, %v2096
        %v2102 = vadd.f32 %v2085, %v2097
        %v2103 = vadd.f32 %v2086, %v2098
        %s2104 = scalar_lea.vmem [#allocation2], 184
        %v2105 = vld [vmem:[%s2104] ss:$4 sm:$0xff]
        %v2106 = vld [vmem:[%s2 + $0x37] sm:$0x1]
        %v2107 = vlaneseq
        %v2108 = vshrl.u32 %v2107, 7
        %v2109 = vsub.s32 0, %v2108
        %v2110 = vrot.slane %v2106, %v2109
        %v2111 = vmul.f32 %v1491, %v2110
        %v2112 = vmul.f32 %v1493, %v2110
        %v2113 = vmul.f32 %v1495, %v2110
        %v2114 = vmul.f32 %v1497, %v2110
        %v2115 = vmul.f32 %v2105, %v2110
        %v2116 = vadd.f32 %v2099, %v2111
        %v2117 = vadd.f32 %v2100, %v2112
        %v2118 = vadd.f32 %v2101, %v2113
        %v2119 = vadd.f32 %v2102, %v2114
        %v2120 = vadd.f32 %v2103, %v2115
        %s2121 = scalar_lea.vmem [#allocation2], 185
        %v2122 = vld [vmem:[%s2121] ss:$4 sm:$0xff]
        %v2123 = vld [vmem:[%s2 + $0x38] sm:$0x1]
        %v2124 = vlaneseq
        %v2125 = vshrl.u32 %v2124, 7
        %v2126 = vsub.s32 0, %v2125
        %v2127 = vrot.slane %v2123, %v2126
        %v2128 = vmul.f32 %v1516, %v2127
        %v2129 = vmul.f32 %v1518, %v2127
        %v2130 = vmul.f32 %v1520, %v2127
        %v2131 = vmul.f32 %v1522, %v2127
        %v2132 = vmul.f32 %v2122, %v2127
        %v2133 = vadd.f32 %v2116, %v2128
        %v2134 = vadd.f32 %v2117, %v2129
        %v2135 = vadd.f32 %v2118, %v2130
        %v2136 = vadd.f32 %v2119, %v2131
        %v2137 = vadd.f32 %v2120, %v2132
        %s2138 = scalar_lea.vmem [#allocation2], 186
        %v2139 = vld [vmem:[%s2138] ss:$4 sm:$0xff]
        %v2140 = vld [vmem:[%s2 + $0x39] sm:$0x1]
        %v2141 = vlaneseq
        %v2142 = vshrl.u32 %v2141, 7
        %v2143 = vsub.s32 0, %v2142
        %v2144 = vrot.slane %v2140, %v2143
        %v2145 = vmul.f32 %v1541, %v2144
        %v2146 = vmul.f32 %v1543, %v2144
        %v2147 = vmul.f32 %v1545, %v2144
        %v2148 = vmul.f32 %v1547, %v2144
        %v2149 = vmul.f32 %v2139, %v2144
        %v2150 = vadd.f32 %v2133, %v2145
        %v2151 = vadd.f32 %v2134, %v2146
        %v2152 = vadd.f32 %v2135, %v2147
        %v2153 = vadd.f32 %v2136, %v2148
        %v2154 = vadd.f32 %v2137, %v2149
        %s2155 = scalar_lea.vmem [#allocation2], 187
        %v2156 = vld [vmem:[%s2155] ss:$4 sm:$0xff]
        %v2157 = vld [vmem:[%s2 + $0x3a] sm:$0x1]
        %v2158 = vlaneseq
        %v2159 = vshrl.u32 %v2158, 7
        %v2160 = vsub.s32 0, %v2159
        %v2161 = vrot.slane %v2157, %v2160
        %v2162 = vmul.f32 %v1566, %v2161
        %v2163 = vmul.f32 %v1568, %v2161
        %v2164 = vmul.f32 %v1570, %v2161
        %v2165 = vmul.f32 %v1572, %v2161
        %v2166 = vmul.f32 %v2156, %v2161
        %v2167 = vadd.f32 %v2150, %v2162
        %v2168 = vadd.f32 %v2151, %v2163
        %v2169 = vadd.f32 %v2152, %v2164
        %v2170 = vadd.f32 %v2153, %v2165
        %v2171 = vadd.f32 %v2154, %v2166
        %s2172 = scalar_lea.vmem [#allocation2], 188
        %v2173 = vld [vmem:[%s2172] ss:$4 sm:$0xff]
        %v2174 = vld [vmem:[%s2 + $0x3b] sm:$0x1]
        %v2175 = vlaneseq
        %v2176 = vshrl.u32 %v2175, 7
        %v2177 = vsub.s32 0, %v2176
        %v2178 = vrot.slane %v2174, %v2177
        %v2179 = vmul.f32 %v1591, %v2178
        %v2180 = vmul.f32 %v1593, %v2178
        %v2181 = vmul.f32 %v1595, %v2178
        %v2182 = vmul.f32 %v1597, %v2178
        %v2183 = vmul.f32 %v2173, %v2178
        %v2184 = vadd.f32 %v2167, %v2179
        %v2185 = vadd.f32 %v2168, %v2180
        %v2186 = vadd.f32 %v2169, %v2181
        %v2187 = vadd.f32 %v2170, %v2182
        %v2188 = vadd.f32 %v2171, %v2183
        %s2189 = scalar_lea.vmem [#allocation2], 189
        %v2190 = vld [vmem:[%s2189] ss:$4 sm:$0xff]
        %v2191 = vld [vmem:[%s2 + $0x3c] sm:$0x1]
        %v2192 = vlaneseq
        %v2193 = vshrl.u32 %v2192, 7
        %v2194 = vsub.s32 0, %v2193
        %v2195 = vrot.slane %v2191, %v2194
        %v2196 = vmul.f32 %v1616, %v2195
        %v2197 = vmul.f32 %v1618, %v2195
        %v2198 = vmul.f32 %v1620, %v2195
        %v2199 = vmul.f32 %v1622, %v2195
        %v2200 = vmul.f32 %v2190, %v2195
        %v2201 = vadd.f32 %v2184, %v2196
        %v2202 = vadd.f32 %v2185, %v2197
        %v2203 = vadd.f32 %v2186, %v2198
        %v2204 = vadd.f32 %v2187, %v2199
        %v2205 = vadd.f32 %v2188, %v2200
        %s2206 = scalar_lea.vmem [#allocation2], 190
        %v2207 = vld [vmem:[%s2206] ss:$4 sm:$0xff]
        %v2208 = vld [vmem:[%s2 + $0x3d] sm:$0x1]
        %v2209 = vlaneseq
        %v2210 = vshrl.u32 %v2209, 7
        %v2211 = vsub.s32 0, %v2210
        %v2212 = vrot.slane %v2208, %v2211
        %v2213 = vmul.f32 %v1641, %v2212
        %v2214 = vmul.f32 %v1643, %v2212
        %v2215 = vmul.f32 %v1645, %v2212
        %v2216 = vmul.f32 %v1647, %v2212
        %v2217 = vmul.f32 %v2207, %v2212
        %v2218 = vadd.f32 %v2201, %v2213
        %v2219 = vadd.f32 %v2202, %v2214
        %v2220 = vadd.f32 %v2203, %v2215
        %v2221 = vadd.f32 %v2204, %v2216
        %v2222 = vadd.f32 %v2205, %v2217
        %s2223 = scalar_lea.vmem [#allocation2], 191
        %v2224 = vld [vmem:[%s2223] ss:$4 sm:$0xff]
        %v2225 = vld [vmem:[%s2 + $0x3e] sm:$0x1]
        %v2226 = vlaneseq
        %v2227 = vshrl.u32 %v2226, 7
        %v2228 = vsub.s32 0, %v2227
        %v2229 = vrot.slane %v2225, %v2228
        %v2230 = vmul.f32 %v1666, %v2229
        %v2231 = vmul.f32 %v1668, %v2229
        %v2232 = vmul.f32 %v1670, %v2229
        %v2233 = vmul.f32 %v1672, %v2229
        %v2234 = vmul.f32 %v2224, %v2229
        %v2235 = vadd.f32 %v2218, %v2230
        %v2236 = vadd.f32 %v2219, %v2231
        %v2237 = vadd.f32 %v2220, %v2232
        %v2238 = vadd.f32 %v2221, %v2233
        %v2239 = vadd.f32 %v2222, %v2234
        %s2240 = scalar_lea.vmem [#allocation2], 64
        %v2241 = vld [vmem:[%s2240] ss:$4 sm:$0xff]
        %s2242 = scalar_lea.vmem [#allocation2], 96
        %v2243 = vld [vmem:[%s2242] ss:$4 sm:$0xff]
        %s2244 = scalar_lea.vmem [#allocation2], 128
        %v2245 = vld [vmem:[%s2244] ss:$4 sm:$0xff]
        %s2246 = scalar_lea.vmem [#allocation2], 160
        %v2247 = vld [vmem:[%s2246] ss:$4 sm:$0xff]
        %s2248 = scalar_lea.vmem [#allocation2], 192
        %v2249 = vld [vmem:[%s2248] ss:$4 sm:$0xff]
        %v2250 = vld [vmem:[%s2 + $0x3f] sm:$0x1]
        %v2251 = vlaneseq
        %v2252 = vshrl.u32 %v2251, 7
        %v2253 = vsub.s32 0, %v2252
        %v2254 = vrot.slane %v2250, %v2253
        %v2255 = vmul.f32 %v2241, %v2254
        %v2256 = vmul.f32 %v2243, %v2254
        %v2257 = vmul.f32 %v2245, %v2254
        %v2258 = vmul.f32 %v2247, %v2254
        %v2259 = vmul.f32 %v2249, %v2254
        %v2260 = vadd.f32 %v2235, %v2255
        %v2261 = vadd.f32 %v2236, %v2256
        %v2262 = vadd.f32 %v2237, %v2257
        %v2263 = vadd.f32 %v2238, %v2258
        %v2264 = vadd.f32 %v2239, %v2259
        %v2265 = vld [vmem:[%s3] sm:$0x1]
        %v2267 = vlaneseq
        %v2268 = vshrl.u32 %v2267, 7
        %v2269 = vsub.s32 0, %v2268
        %v2270 = vrot.slane %v2265, %v2269
        %v2272 = vadd.f32 %v2260, %v2270
        %v2273 = vadd.f32 %v2261, %v2270
        %v2274 = vadd.f32 %v2262, %v2270
        %v2275 = vadd.f32 %v2263, %v2270
        %v2276 = vadd.f32 %v2264, %v2270
        %vm2277 = vcmp.gt.f32.partialorder %v2272, 0.0
        %vm2278 = vcmp.gt.f32.partialorder %v2273, 0.0
        %vm2279 = vcmp.gt.f32.partialorder %v2274, 0.0
        %vm2280 = vcmp.gt.f32.partialorder %v2275, 0.0
        %vm2281 = vcmp.gt.f32.partialorder %v2276, 0.0
        %v2282 = vmin.f32 %v2272, 0.0
        %v2283 = vmin.f32 %v2273, 0.0
        %v2284 = vmin.f32 %v2274, 0.0
        %v2285 = vmin.f32 %v2275, 0.0
        %v2286 = vmin.f32 %v2276, 0.0
        %v2287 = vmul.f32 %v2282, 1.442695
        %v2288 = vpow.pop %v2287
        %v2289 = vmul.f32 %v2283, 1.442695
        %v2290 = vpow.pop %v2289
        %v2291 = vmul.f32 %v2284, 1.442695
        %v2292 = vpow.pop %v2291
        %v2293 = vmul.f32 %v2285, 1.442695
        %v2294 = vpow.pop %v2293
        %v2295 = vmul.f32 %v2286, 1.442695
        %v2296 = vpow.pop %v2295
        %v2297 = vsub.f32 %v2288, 1.0
        %v2298 = vsub.f32 %v2290, 1.0
        %v2299 = vsub.f32 %v2292, 1.0
        %v2300 = vsub.f32 %v2294, 1.0
        %v2301 = vsub.f32 %v2296, 1.0
        %v2302 = vsel %vm2277, %v2272, %v2297
        %v2303 = vsel %vm2278, %v2273, %v2298
        %v2304 = vsel %vm2279, %v2274, %v2299
        %v2305 = vsel %vm2280, %v2275, %v2300
        %v2306 = vsel %vm2281, %v2276, %v2301
        %2307 = vst [vmem:[#allocation3 + $0x8] sm:$0xff] %v2302
        %2308 = vst [vmem:[#allocation3 + $0x10] sm:$0xff] %v2303
        %2309 = vst [vmem:[#allocation3 + $0x18] sm:$0xff] %v2304
        %2310 = vst [vmem:[#allocation3 + $0x20] sm:$0xff] %v2305
        %2311 = vst [vmem:[#allocation3 + $0x28] sm:$0xff] %v2306
        %s2312 = scalar_lea.vmem [#allocation3], 1
        %v2313 = vld [vmem:[%s2312] ss:$8 sm:$0xf]
        %v2314 = vld [vmem:[%s2312] ss:$8 sm:$0x10]
        %v2315 = vor.u32 %v2313, %v2314
        %v2316 = vld [vmem:[%s4] sm:$0x1]
        %v2317 = vlaneseq
        %v2318 = vshrl.u32 %v2317, 7
        %v2319 = vsub.s32 0, %v2318
        %v2320 = vrot.slane %v2316, %v2319
        %v2321 = vmul.f32 %v2315, %v2320
        %v2322 = vadd.f32 %v2321, 0.0
        %s2323 = scalar_lea.vmem [#allocation3], 2
        %v2324 = vld [vmem:[%s2323] ss:$8 sm:$0xf]
        %v2325 = vld [vmem:[%s2323] ss:$8 sm:$0x10]
        %v2326 = vor.u32 %v2324, %v2325
        %v2327 = vld [vmem:[%s4 + $0x1] sm:$0x1]
        %v2328 = vlaneseq
        %v2329 = vshrl.u32 %v2328, 7
        %v2330 = vsub.s32 0, %v2329
        %v2331 = vrot.slane %v2327, %v2330
        %v2332 = vmul.f32 %v2326, %v2331
        %v2333 = vadd.f32 %v2322, %v2332
        %s2334 = scalar_lea.vmem [#allocation3], 3
        %v2335 = vld [vmem:[%s2334] ss:$8 sm:$0xf]
        %v2336 = vld [vmem:[%s2334] ss:$8 sm:$0x10]
        %v2337 = vor.u32 %v2335, %v2336
        %v2338 = vld [vmem:[%s4 + $0x2] sm:$0x1]
        %v2339 = vlaneseq
        %v2340 = vshrl.u32 %v2339, 7
        %v2341 = vsub.s32 0, %v2340
        %v2342 = vrot.slane %v2338, %v2341
        %v2343 = vmul.f32 %v2337, %v2342
        %v2344 = vadd.f32 %v2333, %v2343
        %s2345 = scalar_lea.vmem [#allocation3], 4
        %v2346 = vld [vmem:[%s2345] ss:$8 sm:$0xf]
        %v2347 = vld [vmem:[%s2345] ss:$8 sm:$0x10]
        %v2348 = vor.u32 %v2346, %v2347
        %v2349 = vld [vmem:[%s4 + $0x3] sm:$0x1]
        %v2350 = vlaneseq
        %v2351 = vshrl.u32 %v2350, 7
        %v2352 = vsub.s32 0, %v2351
        %v2353 = vrot.slane %v2349, %v2352
        %v2354 = vmul.f32 %v2348, %v2353
        %v2355 = vadd.f32 %v2344, %v2354
        %s2356 = scalar_lea.vmem [#allocation3], 5
        %v2357 = vld [vmem:[%s2356] ss:$8 sm:$0xf]
        %v2358 = vld [vmem:[%s2356] ss:$8 sm:$0x10]
        %v2359 = vor.u32 %v2357, %v2358
        %v2360 = vld [vmem:[%s4 + $0x4] sm:$0x1]
        %v2361 = vlaneseq
        %v2362 = vshrl.u32 %v2361, 7
        %v2363 = vsub.s32 0, %v2362
        %v2364 = vrot.slane %v2360, %v2363
        %v2365 = vmul.f32 %v2359, %v2364
        %v2366 = vadd.f32 %v2355, %v2365
        %s2367 = scalar_lea.vmem [#allocation3], 6
        %v2368 = vld [vmem:[%s2367] ss:$8 sm:$0xf]
        %v2369 = vld [vmem:[%s2367] ss:$8 sm:$0x10]
        %v2370 = vor.u32 %v2368, %v2369
        %v2371 = vld [vmem:[%s4 + $0x5] sm:$0x1]
        %v2372 = vlaneseq
        %v2373 = vshrl.u32 %v2372, 7
        %v2374 = vsub.s32 0, %v2373
        %v2375 = vrot.slane %v2371, %v2374
        %v2376 = vmul.f32 %v2370, %v2375
        %v2377 = vadd.f32 %v2366, %v2376
        %s2378 = scalar_lea.vmem [#allocation3], 7
        %v2379 = vld [vmem:[%s2378] ss:$8 sm:$0xf]
        %v2380 = vld [vmem:[%s2378] ss:$8 sm:$0x10]
        %v2381 = vor.u32 %v2379, %v2380
        %v2382 = vld [vmem:[%s4 + $0x6] sm:$0x1]
        %v2383 = vlaneseq
        %v2384 = vshrl.u32 %v2383, 7
        %v2385 = vsub.s32 0, %v2384
        %v2386 = vrot.slane %v2382, %v2385
        %v2387 = vmul.f32 %v2381, %v2386
        %v2388 = vadd.f32 %v2377, %v2387
        %s2389 = scalar_lea.vmem [#allocation3], 8
        %v2390 = vld [vmem:[%s2389] ss:$8 sm:$0xf]
        %v2391 = vld [vmem:[%s2389] ss:$8 sm:$0x10]
        %v2392 = vor.u32 %v2390, %v2391
        %v2393 = vld [vmem:[%s4 + $0x7] sm:$0x1]
        %v2394 = vlaneseq
        %v2395 = vshrl.u32 %v2394, 7
        %v2396 = vsub.s32 0, %v2395
        %v2397 = vrot.slane %v2393, %v2396
        %v2398 = vmul.f32 %v2392, %v2397
        %v2399 = vadd.f32 %v2388, %v2398
        %s2400 = scalar_lea.vmem [#allocation3], 9
        %v2401 = vld [vmem:[%s2400] ss:$8 sm:$0xf]
        %v2402 = vld [vmem:[%s2400] ss:$8 sm:$0x10]
        %v2403 = vor.u32 %v2401, %v2402
        %v2404 = vld [vmem:[%s4 + $0x8] sm:$0x1]
        %v2405 = vlaneseq
        %v2406 = vshrl.u32 %v2405, 7
        %v2407 = vsub.s32 0, %v2406
        %v2408 = vrot.slane %v2404, %v2407
        %v2409 = vmul.f32 %v2403, %v2408
        %v2410 = vadd.f32 %v2399, %v2409
        %s2411 = scalar_lea.vmem [#allocation3], 10
        %v2412 = vld [vmem:[%s2411] ss:$8 sm:$0xf]
        %v2413 = vld [vmem:[%s2411] ss:$8 sm:$0x10]
        %v2414 = vor.u32 %v2412, %v2413
        %v2415 = vld [vmem:[%s4 + $0x9] sm:$0x1]
        %v2416 = vlaneseq
        %v2417 = vshrl.u32 %v2416, 7
        %v2418 = vsub.s32 0, %v2417
        %v2419 = vrot.slane %v2415, %v2418
        %v2420 = vmul.f32 %v2414, %v2419
        %v2421 = vadd.f32 %v2410, %v2420
        %s2422 = scalar_lea.vmem [#allocation3], 11
        %v2423 = vld [vmem:[%s2422] ss:$8 sm:$0xf]
        %v2424 = vld [vmem:[%s2422] ss:$8 sm:$0x10]
        %v2425 = vor.u32 %v2423, %v2424
        %v2426 = vld [vmem:[%s4 + $0xa] sm:$0x1]
        %v2427 = vlaneseq
        %v2428 = vshrl.u32 %v2427, 7
        %v2429 = vsub.s32 0, %v2428
        %v2430 = vrot.slane %v2426, %v2429
        %v2431 = vmul.f32 %v2425, %v2430
        %v2432 = vadd.f32 %v2421, %v2431
        %s2433 = scalar_lea.vmem [#allocation3], 12
        %v2434 = vld [vmem:[%s2433] ss:$8 sm:$0xf]
        %v2435 = vld [vmem:[%s2433] ss:$8 sm:$0x10]
        %v2436 = vor.u32 %v2434, %v2435
        %v2437 = vld [vmem:[%s4 + $0xb] sm:$0x1]
        %v2438 = vlaneseq
        %v2439 = vshrl.u32 %v2438, 7
        %v2440 = vsub.s32 0, %v2439
        %v2441 = vrot.slane %v2437, %v2440
        %v2442 = vmul.f32 %v2436, %v2441
        %v2443 = vadd.f32 %v2432, %v2442
        %s2444 = scalar_lea.vmem [#allocation3], 13
        %v2445 = vld [vmem:[%s2444] ss:$8 sm:$0xf]
        %v2446 = vld [vmem:[%s2444] ss:$8 sm:$0x10]
        %v2447 = vor.u32 %v2445, %v2446
        %v2448 = vld [vmem:[%s4 + $0xc] sm:$0x1]
        %v2449 = vlaneseq
        %v2450 = vshrl.u32 %v2449, 7
        %v2451 = vsub.s32 0, %v2450
        %v2452 = vrot.slane %v2448, %v2451
        %v2453 = vmul.f32 %v2447, %v2452
        %v2454 = vadd.f32 %v2443, %v2453
        %s2455 = scalar_lea.vmem [#allocation3], 14
        %v2456 = vld [vmem:[%s2455] ss:$8 sm:$0xf]
        %v2457 = vld [vmem:[%s2455] ss:$8 sm:$0x10]
        %v2458 = vor.u32 %v2456, %v2457
        %v2459 = vld [vmem:[%s4 + $0xd] sm:$0x1]
        %v2460 = vlaneseq
        %v2461 = vshrl.u32 %v2460, 7
        %v2462 = vsub.s32 0, %v2461
        %v2463 = vrot.slane %v2459, %v2462
        %v2464 = vmul.f32 %v2458, %v2463
        %v2465 = vadd.f32 %v2454, %v2464
        %s2466 = scalar_lea.vmem [#allocation3], 15
        %v2467 = vld [vmem:[%s2466] ss:$8 sm:$0xf]
        %v2468 = vld [vmem:[%s2466] ss:$8 sm:$0x10]
        %v2469 = vor.u32 %v2467, %v2468
        %v2470 = vld [vmem:[%s4 + $0xe] sm:$0x1]
        %v2471 = vlaneseq
        %v2472 = vshrl.u32 %v2471, 7
        %v2473 = vsub.s32 0, %v2472
        %v2474 = vrot.slane %v2470, %v2473
        %v2475 = vmul.f32 %v2469, %v2474
        %v2476 = vadd.f32 %v2465, %v2475
        %s2477 = scalar_lea.vmem [#allocation3], 16
        %v2478 = vld [vmem:[%s2477] ss:$8 sm:$0xf]
        %v2479 = vld [vmem:[%s2477] ss:$8 sm:$0x10]
        %v2480 = vor.u32 %v2478, %v2479
        %v2481 = vld [vmem:[%s4 + $0xf] sm:$0x1]
        %v2482 = vlaneseq
        %v2483 = vshrl.u32 %v2482, 7
        %v2484 = vsub.s32 0, %v2483
        %v2485 = vrot.slane %v2481, %v2484
        %v2486 = vmul.f32 %v2480, %v2485
        %v2487 = vadd.f32 %v2476, %v2486
        %v2488 = vld [vmem:[%s5] sm:$0x1]
        %v2490 = vlaneseq
        %v2491 = vshrl.u32 %v2490, 7
        %v2492 = vsub.s32 0, %v2491
        %v2493 = vrot.slane %v2488, %v2492
        %v2495 = vadd.f32 %v2487, %v2493
        %s2496 = smul.u32 %s371, 8
        %s2497 = scalar_lea.vmem [#allocation4], %s2496
        %2498 = vst [vmem:[%s2497] sm:$0x1f] %v2495
      $region65: #{eegnet_forward.1} parent=59 // loop_footer
        %s375 = sadd.s32 1, %s371
      $region66: #{eegnet_forward.1} parent=59 // loop_footer_branch
        %370 = sbr.rel target = $region62
      $region67: #{eegnet_forward.1} parent=59 // loop_exit
        _
      %v2499 = vld [vmem:[#allocation4] sm:$0xff]
      %v2500 = vld [vmem:[#allocation4 + $0x8] sm:$0xff]
      %v2501 = vld [vmem:[%s6] sm:$0xff]
      %v2502 = vld [vmem:[%s6 + $0x8] sm:$0xff]
      %v2503 = vld [vmem:[%s6 + $0x10] sm:$0xff]
      %v2504 = vld [vmem:[%s6 + $0x18] sm:$0xff]
      %v2505 = vld [vmem:[%s6 + $0x20] sm:$0xff]
      %v2506 = vld [vmem:[%s6 + $0x28] sm:$0xff]
      %v2507 = vld [vmem:[%s6 + $0x30] sm:$0xff]
      %v2508 = vld [vmem:[%s6 + $0x38] sm:$0xff]
      %v2509 = vld [vmem:[%s6 + $0x40] sm:$0xff]
      %v2510 = vld [vmem:[%s6 + $0x48] sm:$0xff]
      %v2511 = vld [vmem:[%s6 + $0x50] sm:$0xff]
      %v2512 = vld [vmem:[%s6 + $0x58] sm:$0xff]
      %v2513 = vld [vmem:[%s6 + $0x60] sm:$0xff]
      %v2514 = vld [vmem:[%s6 + $0x68] sm:$0xff]
      %v2515 = vld [vmem:[%s6 + $0x70] sm:$0xff]
      %v2516 = vld [vmem:[%s6 + $0x78] sm:$0xff]
      %v2517 = vld [vmem:[%s7] sm:$0x1]
      %v2519 = vlaneseq
      %v2520 = vshrl.u32 %v2519, 7
      %v2521 = vsub.s32 0, %v2520
      %v2522 = vrot.slane %v2517, %v2521
      %2524 = vmatprep.subr.mxu0 0.0
      %2525 = vmatpush1.msra.mxu0 %v2516
      %2526 = vmatprep.subr.mxu0 0.0
      %2527 = vmatpush1.msra.mxu0 %v2515
      %2528 = vmatprep.subr.mxu0 0.0
      %2529 = vmatpush1.msra.mxu0 %v2514
      %2530 = vmatprep.subr.mxu0 0.0
      %2531 = vmatpush1.msra.mxu0 %v2513
      %2532 = vmatprep.subr.mxu0 0.0
      %2533 = vmatpush1.msra.mxu0 %v2512
      %2534 = vmatprep.subr.mxu0 0.0
      %2535 = vmatpush1.msra.mxu0 %v2511
      %2536 = vmatprep.subr.mxu0 0.0
      %2537 = vmatpush1.msra.mxu0 %v2510
      %2538 = vmatprep.subr.mxu0 0.0
      %2539 = vmatpush1.msra.mxu0 %v2509
      %2540 = vmatprep.subr.mxu0 0.0
      %2541 = vmatpush1.msra.mxu0 %v2508
      %2542 = vmatprep.subr.mxu0 0.0
      %2543 = vmatpush1.msra.mxu0 %v2507
      %2544 = vmatprep.subr.mxu0 0.0
      %2545 = vmatpush1.msra.mxu0 %v2506
      %2546 = vmatprep.subr.mxu0 0.0
      %2547 = vmatpush1.msra.mxu0 %v2505
      %2548 = vmatprep.subr.mxu0 0.0
      %2549 = vmatpush1.msra.mxu0 %v2504
      %2550 = vmatprep.subr.mxu0 0.0
      %2551 = vmatpush1.msra.mxu0 %v2503
      %2552 = vmatprep.subr.mxu0 0.0
      %2553 = vmatpush1.msra.mxu0 %v2502
      %2554 = vmatprep.subr.mxu0 0.0
      %2555 = vmatpush1.msra.mxu0 %v2501
      %2556 = vmatprep.subr.mxu0 0.0
      %2557 = vmatpush2.msra.mxu0 0.0
      %2558 = vmatprep.subr.mxu0 0.0
      %2559 = vmatpush2.msra.mxu0 0.0
      %2560 = vmatprep.subr.mxu0 0.0
      %2561 = vmatpush2.msra.mxu0 0.0
      %2562 = vmatprep.subr.mxu0 0.0
      %2563 = vmatpush2.msra.mxu0 0.0
      %2564 = vmatprep.subr.mxu0 0.0
      %2565 = vmatpush2.msra.mxu0 0.0
      %2566 = vmatprep.subr.mxu0 0.0
      %2567 = vmatpush2.msra.mxu0 0.0
      %2568 = vmatprep.subr.mxu0 0.0
      %2569 = vmatpush2.msra.mxu0 0.0
      %2570 = vmatprep.subr.mxu0 0.0
      %2571 = vmatpush2.msra.mxu0 0.0
      %2572 = vmatprep.subr.mxu0 0.0
      %2573 = vmatpush2.msra.mxu0 0.0
      %2574 = vmatprep.subr.mxu0 0.0
      %2575 = vmatpush2.msra.mxu0 0.0
      %2576 = vmatprep.subr.mxu0 0.0
      %2577 = vmatpush2.msra.mxu0 0.0
      %2578 = vmatprep.subr.mxu0 0.0
      %2579 = vmatpush2.msra.mxu0 0.0
      %2580 = vmatprep.subr.mxu0 0.0
      %2581 = vmatpush2.msra.mxu0 0.0
      %2582 = vmatprep.subr.mxu0 0.0
      %2583 = vmatpush2.msra.mxu0 0.0
      %2584 = vmatprep.subr.mxu0 0.0
      %2585 = vmatpush2.msra.mxu0 0.0
      %2586 = vmatprep.subr.mxu0 0.0
      %2587 = vmatpush2.msra.mxu0 0.0
      %2588 = vmatprep.mubr.f32.mxu0 0.0
      %2589 = vmatmul.mubr.f32.gmra.mxu0 %v2499
      %v2590 = vpop.f32.mrf.mxu0
      %v2591 = vadd.f32 %v2522, %v2590
      %v2592 = vpop.f32.mrf.mxu0
      %2593 = vmatprep.mubr.f32.mxu0 0.0
      %2594 = vmatmul.mubr.f32.gmra.mxu0 %v2500
      %v2595 = vpop.f32.mrf.mxu0
      %v2596 = vadd.f32 %v2522, %v2595
      %v2597 = vpop.f32.mrf.mxu0
      %2598 = vdwg.mxu0
      %vm2599 = vcmp.gt.f32.partialorder %v2591, 0.0
      %vm2600 = vcmp.gt.f32.partialorder %v2596, 0.0
      %v2601 = vmin.f32 %v2591, 0.0
      %v2602 = vmin.f32 %v2596, 0.0
      %v2603 = vmul.f32 %v2601, 1.442695
      %v2604 = vpow.pop %v2603
      %v2605 = vmul.f32 %v2602, 1.442695
      %v2606 = vpow.pop %v2605
      %v2607 = vsub.f32 %v2604, 1.0
      %v2608 = vsub.f32 %v2606, 1.0
      %v2609 = vsel %vm2599, %v2591, %v2607
      %v2610 = vsel %vm2600, %v2596, %v2608
      %2611 = vst [vmem:[#allocation5] sm:$0xff] %v2609
      %2612 = vst [vmem:[#allocation5 + $0x8] sm:$0xff] %v2610
      %v2613 = vld [vmem:[#allocation5] ss:$8 sm:$0x3]
      %v2614 = vld [vmem:[%s8] sm:$0xff]
      %v2615 = vld [vmem:[%s8 + $0x8] sm:$0xff]
      %v2616 = vld [vmem:[%s8 + $0x10] sm:$0xff]
      %v2617 = vld [vmem:[%s8 + $0x18] sm:$0xff]
      %v2618 = vld [vmem:[%s8 + $0x20] sm:$0xff]
      %v2619 = vld [vmem:[%s8 + $0x28] sm:$0xff]
      %v2620 = vld [vmem:[%s8 + $0x30] sm:$0xff]
      %v2621 = vld [vmem:[%s8 + $0x38] sm:$0xff]
      %v2622 = vld [vmem:[%s8 + $0x40] sm:$0xff]
      %v2623 = vld [vmem:[%s8 + $0x48] sm:$0xff]
      %v2624 = vld [vmem:[%s8 + $0x50] sm:$0xff]
      %v2625 = vld [vmem:[%s8 + $0x58] sm:$0xff]
      %v2626 = vld [vmem:[%s8 + $0x60] sm:$0xff]
      %v2627 = vld [vmem:[%s8 + $0x68] sm:$0xff]
      %v2628 = vld [vmem:[%s8 + $0x70] sm:$0xff]
      %v2629 = vld [vmem:[%s8 + $0x78] sm:$0xff]
      %s2630 = scalar_lea.vmem [#allocation5], 1
      %v2631 = vld [vmem:[%s2630] ss:$8 sm:$0x3]
      %s2632 = scalar_lea.vmem %s8, 128
      %v2633 = vld [vmem:[%s2632] sm:$0xff]
      %v2634 = vld [vmem:[%s2632 + $0x8] sm:$0xff]
      %v2635 = vld [vmem:[%s2632 + $0x10] sm:$0xff]
      %v2636 = vld [vmem:[%s2632 + $0x18] sm:$0xff]
      %v2637 = vld [vmem:[%s2632 + $0x20] sm:$0xff]
      %v2638 = vld [vmem:[%s2632 + $0x28] sm:$0xff]
      %v2639 = vld [vmem:[%s2632 + $0x30] sm:$0xff]
      %v2640 = vld [vmem:[%s2632 + $0x38] sm:$0xff]
      %v2641 = vld [vmem:[%s2632 + $0x40] sm:$0xff]
      %v2642 = vld [vmem:[%s2632 + $0x48] sm:$0xff]
      %v2643 = vld [vmem:[%s2632 + $0x50] sm:$0xff]
      %v2644 = vld [vmem:[%s2632 + $0x58] sm:$0xff]
      %v2645 = vld [vmem:[%s2632 + $0x60] sm:$0xff]
      %v2646 = vld [vmem:[%s2632 + $0x68] sm:$0xff]
      %v2647 = vld [vmem:[%s2632 + $0x70] sm:$0xff]
      %v2648 = vld [vmem:[%s2632 + $0x78] sm:$0xff]
      %2649 = vmatprep.subr.mxu0 0.0
      %2650 = vmatpush1.msra.mxu0 %v2648
      %2651 = vmatprep.subr.mxu0 0.0
      %2652 = vmatpush1.msra.mxu0 %v2647
      %2653 = vmatprep.subr.mxu0 0.0
      %2654 = vmatpush1.msra.mxu0 %v2646
      %2655 = vmatprep.subr.mxu0 0.0
      %2656 = vmatpush1.msra.mxu0 %v2645
      %2657 = vmatprep.subr.mxu0 0.0
      %2658 = vmatpush1.msra.mxu0 %v2644
      %2659 = vmatprep.subr.mxu0 0.0
      %2660 = vmatpush1.msra.mxu0 %v2643
      %2661 = vmatprep.subr.mxu0 0.0
      %2662 = vmatpush1.msra.mxu0 %v2642
      %2663 = vmatprep.subr.mxu0 0.0
      %2664 = vmatpush1.msra.mxu0 %v2641
      %2665 = vmatprep.subr.mxu0 0.0
      %2666 = vmatpush1.msra.mxu0 %v2640
      %2667 = vmatprep.subr.mxu0 0.0
      %2668 = vmatpush1.msra.mxu0 %v2639
      %2669 = vmatprep.subr.mxu0 0.0
      %2670 = vmatpush1.msra.mxu0 %v2638
      %2671 = vmatprep.subr.mxu0 0.0
      %2672 = vmatpush1.msra.mxu0 %v2637
      %2673 = vmatprep.subr.mxu0 0.0
      %2674 = vmatpush1.msra.mxu0 %v2636
      %2675 = vmatprep.subr.mxu0 0.0
      %2676 = vmatpush1.msra.mxu0 %v2635
      %2677 = vmatprep.subr.mxu0 0.0
      %2678 = vmatpush1.msra.mxu0 %v2634
      %2679 = vmatprep.subr.mxu0 0.0
      %2680 = vmatpush1.msra.mxu0 %v2633
      %2681 = vmatprep.subr.mxu0 0.0
      %2682 = vmatpush2.msra.mxu0 0.0
      %2683 = vmatprep.subr.mxu0 0.0
      %2684 = vmatpush2.msra.mxu0 0.0
      %2685 = vmatprep.subr.mxu0 0.0
      %2686 = vmatpush2.msra.mxu0 0.0
      %2687 = vmatprep.subr.mxu0 0.0
      %2688 = vmatpush2.msra.mxu0 0.0
      %2689 = vmatprep.subr.mxu0 0.0
      %2690 = vmatpush2.msra.mxu0 0.0
      %2691 = vmatprep.subr.mxu0 0.0
      %2692 = vmatpush2.msra.mxu0 0.0
      %2693 = vmatprep.subr.mxu0 0.0
      %2694 = vmatpush2.msra.mxu0 0.0
      %2695 = vmatprep.subr.mxu0 0.0
      %2696 = vmatpush2.msra.mxu0 0.0
      %2697 = vmatprep.subr.mxu0 0.0
      %2698 = vmatpush2.msra.mxu0 0.0
      %2699 = vmatprep.subr.mxu0 0.0
      %2700 = vmatpush2.msra.mxu0 0.0
      %2701 = vmatprep.subr.mxu0 0.0
      %2702 = vmatpush2.msra.mxu0 0.0
      %2703 = vmatprep.subr.mxu0 0.0
      %2704 = vmatpush2.msra.mxu0 0.0
      %2705 = vmatprep.subr.mxu0 0.0
      %2706 = vmatpush2.msra.mxu0 0.0
      %2707 = vmatprep.subr.mxu0 0.0
      %2708 = vmatpush2.msra.mxu0 0.0
      %2709 = vmatprep.subr.mxu0 0.0
      %2710 = vmatpush2.msra.mxu0 0.0
      %2711 = vmatprep.subr.mxu0 0.0
      %2712 = vmatpush2.msra.mxu0 0.0
      %2713 = vmatprep.mubr.f32.mxu0 0.0
      %2714 = vmatmul.mubr.f32.gmra.mxu0 %v2631
      %v2715 = vpop.f32.mrf.mxu0
      %v2716 = vadd.f32 0.0, %v2715
      %v2717 = vpop.f32.mrf.mxu0
      %2718 = vdwg.mxu0
      %2719 = vmatprep.subr.mxu0 0.0
      %2720 = vmatpush1.msra.mxu0 %v2629
      %2721 = vmatprep.subr.mxu0 0.0
      %2722 = vmatpush1.msra.mxu0 %v2628
      %2723 = vmatprep.subr.mxu0 0.0
      %2724 = vmatpush1.msra.mxu0 %v2627
      %2725 = vmatprep.subr.mxu0 0.0
      %2726 = vmatpush1.msra.mxu0 %v2626
      %2727 = vmatprep.subr.mxu0 0.0
      %2728 = vmatpush1.msra.mxu0 %v2625
      %2729 = vmatprep.subr.mxu0 0.0
      %2730 = vmatpush1.msra.mxu0 %v2624
      %2731 = vmatprep.subr.mxu0 0.0
      %2732 = vmatpush1.msra.mxu0 %v2623
      %2733 = vmatprep.subr.mxu0 0.0
      %2734 = vmatpush1.msra.mxu0 %v2622
      %2735 = vmatprep.subr.mxu0 0.0
      %2736 = vmatpush1.msra.mxu0 %v2621
      %2737 = vmatprep.subr.mxu0 0.0
      %2738 = vmatpush1.msra.mxu0 %v2620
      %2739 = vmatprep.subr.mxu0 0.0
      %2740 = vmatpush1.msra.mxu0 %v2619
      %2741 = vmatprep.subr.mxu0 0.0
      %2742 = vmatpush1.msra.mxu0 %v2618
      %2743 = vmatprep.subr.mxu0 0.0
      %2744 = vmatpush1.msra.mxu0 %v2617
      %2745 = vmatprep.subr.mxu0 0.0
      %2746 = vmatpush1.msra.mxu0 %v2616
      %2747 = vmatprep.subr.mxu0 0.0
      %2748 = vmatpush1.msra.mxu0 %v2615
      %2749 = vmatprep.subr.mxu0 0.0
      %2750 = vmatpush1.msra.mxu0 %v2614
      %2751 = vmatprep.subr.mxu0 0.0
      %2752 = vmatpush2.msra.mxu0 0.0
      %2753 = vmatprep.subr.mxu0 0.0
      %2754 = vmatpush2.msra.mxu0 0.0
      %2755 = vmatprep.subr.mxu0 0.0
      %2756 = vmatpush2.msra.mxu0 0.0
      %2757 = vmatprep.subr.mxu0 0.0
      %2758 = vmatpush2.msra.mxu0 0.0
      %2759 = vmatprep.subr.mxu0 0.0
      %2760 = vmatpush2.msra.mxu0 0.0
      %2761 = vmatprep.subr.mxu0 0.0
      %2762 = vmatpush2.msra.mxu0 0.0
      %2763 = vmatprep.subr.mxu0 0.0
      %2764 = vmatpush2.msra.mxu0 0.0
      %2765 = vmatprep.subr.mxu0 0.0
      %2766 = vmatpush2.msra.mxu0 0.0
      %2767 = vmatprep.subr.mxu0 0.0
      %2768 = vmatpush2.msra.mxu0 0.0
      %2769 = vmatprep.subr.mxu0 0.0
      %2770 = vmatpush2.msra.mxu0 0.0
      %2771 = vmatprep.subr.mxu0 0.0
      %2772 = vmatpush2.msra.mxu0 0.0
      %2773 = vmatprep.subr.mxu0 0.0
      %2774 = vmatpush2.msra.mxu0 0.0
      %2775 = vmatprep.subr.mxu0 0.0
      %2776 = vmatpush2.msra.mxu0 0.0
      %2777 = vmatprep.subr.mxu0 0.0
      %2778 = vmatpush2.msra.mxu0 0.0
      %2779 = vmatprep.subr.mxu0 0.0
      %2780 = vmatpush2.msra.mxu0 0.0
      %2781 = vmatprep.subr.mxu0 0.0
      %2782 = vmatpush2.msra.mxu0 0.0
      %2783 = vmatprep.mubr.f32.mxu0 0.0
      %2784 = vmatmul.mubr.f32.gmra.mxu0 %v2613
      %v2785 = vpop.f32.mrf.mxu0
      %v2786 = vadd.f32 %v2716, %v2785
      %v2787 = vpop.f32.mrf.mxu0
      %2788 = vdwg.mxu0
      %s2789 = scalar_lea.vmem [#allocation5], 2
      %v2790 = vld [vmem:[%s2789] ss:$8 sm:$0x3]
      %s2791 = scalar_lea.vmem %s8, 256
      %v2792 = vld [vmem:[%s2791] sm:$0xff]
      %v2793 = vld [vmem:[%s2791 + $0x8] sm:$0xff]
      %v2794 = vld [vmem:[%s2791 + $0x10] sm:$0xff]
      %v2795 = vld [vmem:[%s2791 + $0x18] sm:$0xff]
      %v2796 = vld [vmem:[%s2791 + $0x20] sm:$0xff]
      %v2797 = vld [vmem:[%s2791 + $0x28] sm:$0xff]
      %v2798 = vld [vmem:[%s2791 + $0x30] sm:$0xff]
      %v2799 = vld [vmem:[%s2791 + $0x38] sm:$0xff]
      %v2800 = vld [vmem:[%s2791 + $0x40] sm:$0xff]
      %v2801 = vld [vmem:[%s2791 + $0x48] sm:$0xff]
      %v2802 = vld [vmem:[%s2791 + $0x50] sm:$0xff]
      %v2803 = vld [vmem:[%s2791 + $0x58] sm:$0xff]
      %v2804 = vld [vmem:[%s2791 + $0x60] sm:$0xff]
      %v2805 = vld [vmem:[%s2791 + $0x68] sm:$0xff]
      %v2806 = vld [vmem:[%s2791 + $0x70] sm:$0xff]
      %v2807 = vld [vmem:[%s2791 + $0x78] sm:$0xff]
      %2808 = vmatprep.subr.mxu0 0.0
      %2809 = vmatpush1.msra.mxu0 %v2807
      %2810 = vmatprep.subr.mxu0 0.0
      %2811 = vmatpush1.msra.mxu0 %v2806
      %2812 = vmatprep.subr.mxu0 0.0
      %2813 = vmatpush1.msra.mxu0 %v2805
      %2814 = vmatprep.subr.mxu0 0.0
      %2815 = vmatpush1.msra.mxu0 %v2804
      %2816 = vmatprep.subr.mxu0 0.0
      %2817 = vmatpush1.msra.mxu0 %v2803
      %2818 = vmatprep.subr.mxu0 0.0
      %2819 = vmatpush1.msra.mxu0 %v2802
      %2820 = vmatprep.subr.mxu0 0.0
      %2821 = vmatpush1.msra.mxu0 %v2801
      %2822 = vmatprep.subr.mxu0 0.0
      %2823 = vmatpush1.msra.mxu0 %v2800
      %2824 = vmatprep.subr.mxu0 0.0
      %2825 = vmatpush1.msra.mxu0 %v2799
      %2826 = vmatprep.subr.mxu0 0.0
      %2827 = vmatpush1.msra.mxu0 %v2798
      %2828 = vmatprep.subr.mxu0 0.0
      %2829 = vmatpush1.msra.mxu0 %v2797
      %2830 = vmatprep.subr.mxu0 0.0
      %2831 = vmatpush1.msra.mxu0 %v2796
      %2832 = vmatprep.subr.mxu0 0.0
      %2833 = vmatpush1.msra.mxu0 %v2795
      %2834 = vmatprep.subr.mxu0 0.0
      %2835 = vmatpush1.msra.mxu0 %v2794
      %2836 = vmatprep.subr.mxu0 0.0
      %2837 = vmatpush1.msra.mxu0 %v2793
      %2838 = vmatprep.subr.mxu0 0.0
      %2839 = vmatpush1.msra.mxu0 %v2792
      %2840 = vmatprep.subr.mxu0 0.0
      %2841 = vmatpush2.msra.mxu0 0.0
      %2842 = vmatprep.subr.mxu0 0.0
      %2843 = vmatpush2.msra.mxu0 0.0
      %2844 = vmatprep.subr.mxu0 0.0
      %2845 = vmatpush2.msra.mxu0 0.0
      %2846 = vmatprep.subr.mxu0 0.0
      %2847 = vmatpush2.msra.mxu0 0.0
      %2848 = vmatprep.subr.mxu0 0.0
      %2849 = vmatpush2.msra.mxu0 0.0
      %2850 = vmatprep.subr.mxu0 0.0
      %2851 = vmatpush2.msra.mxu0 0.0
      %2852 = vmatprep.subr.mxu0 0.0
      %2853 = vmatpush2.msra.mxu0 0.0
      %2854 = vmatprep.subr.mxu0 0.0
      %2855 = vmatpush2.msra.mxu0 0.0
      %2856 = vmatprep.subr.mxu0 0.0
      %2857 = vmatpush2.msra.mxu0 0.0
      %2858 = vmatprep.subr.mxu0 0.0
      %2859 = vmatpush2.msra.mxu0 0.0
      %2860 = vmatprep.subr.mxu0 0.0
      %2861 = vmatpush2.msra.mxu0 0.0
      %2862 = vmatprep.subr.mxu0 0.0
      %2863 = vmatpush2.msra.mxu0 0.0
      %2864 = vmatprep.subr.mxu0 0.0
      %2865 = vmatpush2.msra.mxu0 0.0
      %2866 = vmatprep.subr.mxu0 0.0
      %2867 = vmatpush2.msra.mxu0 0.0
      %2868 = vmatprep.subr.mxu0 0.0
      %2869 = vmatpush2.msra.mxu0 0.0
      %2870 = vmatprep.subr.mxu0 0.0
      %2871 = vmatpush2.msra.mxu0 0.0
      %2872 = vmatprep.mubr.f32.mxu0 0.0
      %2873 = vmatmul.mubr.f32.gmra.mxu0 %v2790
      %v2874 = vpop.f32.mrf.mxu0
      %v2875 = vadd.f32 0.0, %v2874
      %v2876 = vpop.f32.mrf.mxu0
      %2877 = vdwg.mxu0
      %v2878 = vadd.f32 %v2786, %v2875
      %s2879 = scalar_lea.vmem [#allocation5], 3
      %v2880 = vld [vmem:[%s2879] ss:$8 sm:$0x3]
      %s2881 = scalar_lea.vmem %s8, 384
      %v2882 = vld [vmem:[%s2881] sm:$0xff]
      %v2883 = vld [vmem:[%s2881 + $0x8] sm:$0xff]
      %v2884 = vld [vmem:[%s2881 + $0x10] sm:$0xff]
      %v2885 = vld [vmem:[%s2881 + $0x18] sm:$0xff]
      %v2886 = vld [vmem:[%s2881 + $0x20] sm:$0xff]
      %v2887 = vld [vmem:[%s2881 + $0x28] sm:$0xff]
      %v2888 = vld [vmem:[%s2881 + $0x30] sm:$0xff]
      %v2889 = vld [vmem:[%s2881 + $0x38] sm:$0xff]
      %v2890 = vld [vmem:[%s2881 + $0x40] sm:$0xff]
      %v2891 = vld [vmem:[%s2881 + $0x48] sm:$0xff]
      %v2892 = vld [vmem:[%s2881 + $0x50] sm:$0xff]
      %v2893 = vld [vmem:[%s2881 + $0x58] sm:$0xff]
      %v2894 = vld [vmem:[%s2881 + $0x60] sm:$0xff]
      %v2895 = vld [vmem:[%s2881 + $0x68] sm:$0xff]
      %v2896 = vld [vmem:[%s2881 + $0x70] sm:$0xff]
      %v2897 = vld [vmem:[%s2881 + $0x78] sm:$0xff]
      %2898 = vmatprep.subr.mxu0 0.0
      %2899 = vmatpush1.msra.mxu0 %v2897
      %2900 = vmatprep.subr.mxu0 0.0
      %2901 = vmatpush1.msra.mxu0 %v2896
      %2902 = vmatprep.subr.mxu0 0.0
      %2903 = vmatpush1.msra.mxu0 %v2895
      %2904 = vmatprep.subr.mxu0 0.0
      %2905 = vmatpush1.msra.mxu0 %v2894
      %2906 = vmatprep.subr.mxu0 0.0
      %2907 = vmatpush1.msra.mxu0 %v2893
      %2908 = vmatprep.subr.mxu0 0.0
      %2909 = vmatpush1.msra.mxu0 %v2892
      %2910 = vmatprep.subr.mxu0 0.0
      %2911 = vmatpush1.msra.mxu0 %v2891
      %2912 = vmatprep.subr.mxu0 0.0
      %2913 = vmatpush1.msra.mxu0 %v2890
      %2914 = vmatprep.subr.mxu0 0.0
      %2915 = vmatpush1.msra.mxu0 %v2889
      %2916 = vmatprep.subr.mxu0 0.0
      %2917 = vmatpush1.msra.mxu0 %v2888
      %2918 = vmatprep.subr.mxu0 0.0
      %2919 = vmatpush1.msra.mxu0 %v2887
      %2920 = vmatprep.subr.mxu0 0.0
      %2921 = vmatpush1.msra.mxu0 %v2886
      %2922 = vmatprep.subr.mxu0 0.0
      %2923 = vmatpush1.msra.mxu0 %v2885
      %2924 = vmatprep.subr.mxu0 0.0
      %2925 = vmatpush1.msra.mxu0 %v2884
      %2926 = vmatprep.subr.mxu0 0.0
      %2927 = vmatpush1.msra.mxu0 %v2883
      %2928 = vmatprep.subr.mxu0 0.0
      %2929 = vmatpush1.msra.mxu0 %v2882
      %2930 = vmatprep.subr.mxu0 0.0
      %2931 = vmatpush2.msra.mxu0 0.0
      %2932 = vmatprep.subr.mxu0 0.0
      %2933 = vmatpush2.msra.mxu0 0.0
      %2934 = vmatprep.subr.mxu0 0.0
      %2935 = vmatpush2.msra.mxu0 0.0
      %2936 = vmatprep.subr.mxu0 0.0
      %2937 = vmatpush2.msra.mxu0 0.0
      %2938 = vmatprep.subr.mxu0 0.0
      %2939 = vmatpush2.msra.mxu0 0.0
      %2940 = vmatprep.subr.mxu0 0.0
      %2941 = vmatpush2.msra.mxu0 0.0
      %2942 = vmatprep.subr.mxu0 0.0
      %2943 = vmatpush2.msra.mxu0 0.0
      %2944 = vmatprep.subr.mxu0 0.0
      %2945 = vmatpush2.msra.mxu0 0.0
      %2946 = vmatprep.subr.mxu0 0.0
      %2947 = vmatpush2.msra.mxu0 0.0
      %2948 = vmatprep.subr.mxu0 0.0
      %2949 = vmatpush2.msra.mxu0 0.0
      %2950 = vmatprep.subr.mxu0 0.0
      %2951 = vmatpush2.msra.mxu0 0.0
      %2952 = vmatprep.subr.mxu0 0.0
      %2953 = vmatpush2.msra.mxu0 0.0
      %2954 = vmatprep.subr.mxu0 0.0
      %2955 = vmatpush2.msra.mxu0 0.0
      %2956 = vmatprep.subr.mxu0 0.0
      %2957 = vmatpush2.msra.mxu0 0.0
      %2958 = vmatprep.subr.mxu0 0.0
      %2959 = vmatpush2.msra.mxu0 0.0
      %2960 = vmatprep.subr.mxu0 0.0
      %2961 = vmatpush2.msra.mxu0 0.0
      %2962 = vmatprep.mubr.f32.mxu0 0.0
      %2963 = vmatmul.mubr.f32.gmra.mxu0 %v2880
      %v2964 = vpop.f32.mrf.mxu0
      %v2965 = vadd.f32 0.0, %v2964
      %v2966 = vpop.f32.mrf.mxu0
      %2967 = vdwg.mxu0
      %v2968 = vadd.f32 %v2878, %v2965
      %s2969 = scalar_lea.vmem [#allocation5], 4
      %v2970 = vld [vmem:[%s2969] ss:$8 sm:$0x3]
      %s2971 = scalar_lea.vmem %s8, 512
      %v2972 = vld [vmem:[%s2971] sm:$0xff]
      %v2973 = vld [vmem:[%s2971 + $0x8] sm:$0xff]
      %v2974 = vld [vmem:[%s2971 + $0x10] sm:$0xff]
      %v2975 = vld [vmem:[%s2971 + $0x18] sm:$0xff]
      %v2976 = vld [vmem:[%s2971 + $0x20] sm:$0xff]
      %v2977 = vld [vmem:[%s2971 + $0x28] sm:$0xff]
      %v2978 = vld [vmem:[%s2971 + $0x30] sm:$0xff]
      %v2979 = vld [vmem:[%s2971 + $0x38] sm:$0xff]
      %v2980 = vld [vmem:[%s2971 + $0x40] sm:$0xff]
      %v2981 = vld [vmem:[%s2971 + $0x48] sm:$0xff]
      %v2982 = vld [vmem:[%s2971 + $0x50] sm:$0xff]
      %v2983 = vld [vmem:[%s2971 + $0x58] sm:$0xff]
      %v2984 = vld [vmem:[%s2971 + $0x60] sm:$0xff]
      %v2985 = vld [vmem:[%s2971 + $0x68] sm:$0xff]
      %v2986 = vld [vmem:[%s2971 + $0x70] sm:$0xff]
      %v2987 = vld [vmem:[%s2971 + $0x78] sm:$0xff]
      %2988 = vmatprep.subr.mxu0 0.0
      %2989 = vmatpush1.msra.mxu0 %v2987
      %2990 = vmatprep.subr.mxu0 0.0
      %2991 = vmatpush1.msra.mxu0 %v2986
      %2992 = vmatprep.subr.mxu0 0.0
      %2993 = vmatpush1.msra.mxu0 %v2985
      %2994 = vmatprep.subr.mxu0 0.0
      %2995 = vmatpush1.msra.mxu0 %v2984
      %2996 = vmatprep.subr.mxu0 0.0
      %2997 = vmatpush1.msra.mxu0 %v2983
      %2998 = vmatprep.subr.mxu0 0.0
      %2999 = vmatpush1.msra.mxu0 %v2982
      %3000 = vmatprep.subr.mxu0 0.0
      %3001 = vmatpush1.msra.mxu0 %v2981
      %3002 = vmatprep.subr.mxu0 0.0
      %3003 = vmatpush1.msra.mxu0 %v2980
      %3004 = vmatprep.subr.mxu0 0.0
      %3005 = vmatpush1.msra.mxu0 %v2979
      %3006 = vmatprep.subr.mxu0 0.0
      %3007 = vmatpush1.msra.mxu0 %v2978
      %3008 = vmatprep.subr.mxu0 0.0
      %3009 = vmatpush1.msra.mxu0 %v2977
      %3010 = vmatprep.subr.mxu0 0.0
      %3011 = vmatpush1.msra.mxu0 %v2976
      %3012 = vmatprep.subr.mxu0 0.0
      %3013 = vmatpush1.msra.mxu0 %v2975
      %3014 = vmatprep.subr.mxu0 0.0
      %3015 = vmatpush1.msra.mxu0 %v2974
      %3016 = vmatprep.subr.mxu0 0.0
      %3017 = vmatpush1.msra.mxu0 %v2973
      %3018 = vmatprep.subr.mxu0 0.0
      %3019 = vmatpush1.msra.mxu0 %v2972
      %3020 = vmatprep.subr.mxu0 0.0
      %3021 = vmatpush2.msra.mxu0 0.0
      %3022 = vmatprep.subr.mxu0 0.0
      %3023 = vmatpush2.msra.mxu0 0.0
      %3024 = vmatprep.subr.mxu0 0.0
      %3025 = vmatpush2.msra.mxu0 0.0
      %3026 = vmatprep.subr.mxu0 0.0
      %3027 = vmatpush2.msra.mxu0 0.0
      %3028 = vmatprep.subr.mxu0 0.0
      %3029 = vmatpush2.msra.mxu0 0.0
      %3030 = vmatprep.subr.mxu0 0.0
      %3031 = vmatpush2.msra.mxu0 0.0
      %3032 = vmatprep.subr.mxu0 0.0
      %3033 = vmatpush2.msra.mxu0 0.0
      %3034 = vmatprep.subr.mxu0 0.0
      %3035 = vmatpush2.msra.mxu0 0.0
      %3036 = vmatprep.subr.mxu0 0.0
      %3037 = vmatpush2.msra.mxu0 0.0
      %3038 = vmatprep.subr.mxu0 0.0
      %3039 = vmatpush2.msra.mxu0 0.0
      %3040 = vmatprep.subr.mxu0 0.0
      %3041 = vmatpush2.msra.mxu0 0.0
      %3042 = vmatprep.subr.mxu0 0.0
      %3043 = vmatpush2.msra.mxu0 0.0
      %3044 = vmatprep.subr.mxu0 0.0
      %3045 = vmatpush2.msra.mxu0 0.0
      %3046 = vmatprep.subr.mxu0 0.0
      %3047 = vmatpush2.msra.mxu0 0.0
      %3048 = vmatprep.subr.mxu0 0.0
      %3049 = vmatpush2.msra.mxu0 0.0
      %3050 = vmatprep.subr.mxu0 0.0
      %3051 = vmatpush2.msra.mxu0 0.0
      %3052 = vmatprep.mubr.f32.mxu0 0.0
      %3053 = vmatmul.mubr.f32.gmra.mxu0 %v2970
      %v3054 = vpop.f32.mrf.mxu0
      %v3055 = vadd.f32 0.0, %v3054
      %v3056 = vpop.f32.mrf.mxu0
      %3057 = vdwg.mxu0
      %v3058 = vadd.f32 %v2968, %v3055
      %v3059 = vld [vmem:[%s9] sm:$0x1]
      %v3061 = vlaneseq
      %v3062 = vshrl.u32 %v3061, 7
      %v3063 = vsub.s32 0, %v3062
      %v3064 = vrot.slane %v3059, %v3063
      %v3066 = vadd.f32 %v3058, %v3064
      %3067 = vst [vmem:[%s357] sm:$0x3] %v3066
      %p3068 = scmp.lt.s32.totalorder %s21, 1
      %s3069 = scalar_select %p3068, %s21, 1
      %s3070 = smul.addr %s3069, 2
      %s3071 = scalar_lea.vmem %s10, %s3070
      // Predicated region
      $region68: #{eegnet_forward.1} parent=59 // pred_check
        %p3072 = pneg %p254
      $region69: #{eegnet_forward.1} parent=59 // pred_check_branch
        %3074 = sbr.rel (%p3072) target = $region71
      $region70: #{eegnet_forward.1} parent=59 // pred_region
        _
      $region71: #{eegnet_forward.1} parent=59 // pred_fallthru
        _
    $region60: #{eegnet_forward.1} parent=5 // pred_fallthru
      _
    %p3075 = scmp.le.s32.totalorder 2, %s16
    // Predicated region
    $region72: #{eegnet_forward.1} parent=5 // pred_check
      %p3076 = pneg %p3075
    $region73: #{eegnet_forward.1} parent=5 // pred_check_branch
      %3078 = sbr.rel (%p3076) target = $region75
    $region74: #{eegnet_forward.1} parent=5 // pred_region
      %s3079 = ssub.s32 %s16, 2
      // Predicated region
      $region76: #{eegnet_forward.1} parent=74 // pred_check
        %p3080 = pneg %p260
      $region77: #{eegnet_forward.1} parent=74 // pred_check_branch
        %3082 = sbr.rel (%p3080) target = $region79
      $region78: #{eegnet_forward.1} parent=74 // pred_region
        %p3083 = scmp.lt.s32.totalorder %s22, 1
        %s3084 = scalar_select %p3083, %s22, 1
        %s3085 = smul.addr %s3084, 2
        %s3086 = scalar_lea.vmem %s10, %s3085
      $region79: #{eegnet_forward.1} parent=74 // pred_fallthru
        _
    $region75: #{eegnet_forward.1} parent=5 // pred_fallthru
      _
  $region6: #{eegnet_forward.1} parent=0 // loop_footer
    %s20 = sadd.s32 1, %s16
  $region7: #{eegnet_forward.1} parent=0 // loop_footer_branch
    %15 = sbr.rel target = $region3
  $region8: #{eegnet_forward.1} parent=0 // loop_exit
    _

</llo_original>
